<compile_context>
chip_gen: v6e
topology: v6e:2x2x1
jax: 0.10.0
libtpu: 0.0.40
codegen_flags: <defaults>
</compile_context>

<pallas_src>
import numpy as np
import jax
import jax.numpy as jnp
from jax.experimental import pallas as pl
from jax.experimental.pallas import tpu as pltpu

EPS_BN = 1e-5
EPS_LN = 1e-5


# ----------------------------------------------------------------------------
# Pallas kernels
# ----------------------------------------------------------------------------
def _mm_bias_relu_kernel(x_ref, w_ref, b_ref, o_ref):
    # y = relu(x @ w + b); BN already folded into (w, b); bf16 in, f32 acc.
    y = jnp.dot(x_ref[...], w_ref[...], preferred_element_type=jnp.float32)
    o_ref[...] = jnp.maximum(y + b_ref[...], 0.0)


def mm_bias_relu(x_bf16, w_bf16, b_f32, tm=512):
    """Tiled over M rows so v7x can shard the two TensorCores."""
    M, K = x_bf16.shape
    N = w_bf16.shape[1]
    if M % tm != 0:
        tm = M
    return pl.pallas_call(
        _mm_bias_relu_kernel,
        out_shape=jax.ShapeDtypeStruct((M, N), jnp.float32),
        grid=(M // tm,),
        in_specs=[
            pl.BlockSpec((tm, K), lambda i: (i, 0)),
            pl.BlockSpec((K, N), lambda i: (0, 0)),
            pl.BlockSpec((1, N), lambda i: (0, 0)),
        ],
        out_specs=pl.BlockSpec((tm, N), lambda i: (i, 0)),
        compiler_params=pltpu.CompilerParams(
            dimension_semantics=("parallel",)),
    )(x_bf16, w_bf16, b_f32)


def _heads_kernel(xcnn_ref, w1c_ref, feat_ref, fcw_ref, fcb_ref,
                  lng_ref, lnb_ref, w1f_ref, b1_ref, w2_ref, b2_ref,
                  o_ref, acc_ref):
    """Fused: feature Linear+LN+ReLU, concat-free head layer 1 (K-tiled),
    ReLU, combined (block-diagonal) head layer 2, dueling combine."""
    k = pl.program_id(0)

    @pl.when(k == 0)
    def _init():
        # feature branch: relu(LayerNorm(feat @ fc_w + fc_b))
        hf = jnp.dot(feat_ref[...], fcw_ref[...],
                     preferred_element_type=jnp.float32) + fcb_ref[...]
        mu = jnp.mean(hf, axis=-1, keepdims=True)
        var = jnp.mean(jnp.square(hf - mu), axis=-1, keepdims=True)
        xf = jnp.maximum(
            (hf - mu) * jax.lax.rsqrt(var + EPS_LN) * lng_ref[...] + lnb_ref[...],
            0.0)
        # initialize accumulator with the feature contribution + bias
        acc_ref[...] = jnp.dot(xf.astype(jnp.bfloat16), w1f_ref[...],
                               preferred_element_type=jnp.float32) + b1_ref[...]

    # K-tiled cnn contribution:  x_cnn[:, k*tk:(k+1)*tk] @ W1_cnn[k*tk:(k+1)*tk, :]
    acc_ref[...] += jnp.dot(xcnn_ref[...], w1c_ref[...],
                            preferred_element_type=jnp.float32)

    @pl.when(k == pl.num_programs(0) - 1)
    def _finalize():
        h1 = jnp.maximum(acc_ref[...], 0.0)                 # (B, 512) = [hv | ha]
        out2 = jnp.dot(h1, w2_ref[...],
                       preferred_element_type=jnp.float32) + b2_ref[...]  # (B, 1+A)
        value = out2[:, 0:1]
        adv = out2[:, 1:]
        o_ref[...] = value + adv - jnp.mean(adv, axis=1, keepdims=True)


def dueling_heads_fused(x_cnn_bf16, feat_f32, Q):
    B, Kc = x_cnn_bf16.shape
    H2 = Q["w1_cnn"].shape[1]            # 512 = 256 (value) | 256 (advantage)
    A = Q["w2"].shape[1] - 1             # number of actions
    tk = 1152 if Kc % 1152 == 0 else Kc  # 1152 = 9*128; 4 K-tiles for Kc=4608
    nk = Kc // tk

    return pl.pallas_call(
        _heads_kernel,
        out_shape=jax.ShapeDtypeStruct((B, A), jnp.float32),
        grid_spec=pltpu.PrefetchScalarGridSpec(
            num_scalar_prefetch=0,
            grid=(nk,),
            in_specs=[
                pl.BlockSpec((B, tk), lambda k: (0, k)),          # x_cnn tile
                pl.BlockSpec((tk, H2), lambda k: (k, 0)),         # W1_cnn tile
                pl.BlockSpec(feat_f32.shape, lambda k: (0, 0)),
                pl.BlockSpec(Q["fc_w"].shape, lambda k: (0, 0)),
                pl.BlockSpec(Q["fc_b"].shape, lambda k: (0, 0)),
                pl.BlockSpec(Q["ln_g"].shape, lambda k: (0, 0)),
                pl.BlockSpec(Q["ln_b"].shape, lambda k: (0, 0)),
                pl.BlockSpec(Q["w1_feat"].shape, lambda k: (0, 0)),
                pl.BlockSpec(Q["b1"].shape, lambda k: (0, 0)),
                pl.BlockSpec(Q["w2"].shape, lambda k: (0, 0)),
                pl.BlockSpec(Q["b2"].shape, lambda k: (0, 0)),
            ],
            out_specs=pl.BlockSpec((B, A), lambda k: (0, 0)),
            scratch_shapes=[pltpu.VMEM((B, H2), jnp.float32)],
        ),
        compiler_params=pltpu.CompilerParams(
            dimension_semantics=("arbitrary",)),
    )(x_cnn_bf16, Q["w1_cnn"], feat_f32, Q["fc_w"], Q["fc_b"],
      Q["ln_g"], Q["ln_b"], Q["w1_feat"], Q["b1"], Q["w2"], Q["b2"])


# ----------------------------------------------------------------------------
# Plain-JAX glue
# ----------------------------------------------------------------------------
def im2col(x_nhwc, k=3, pad=0):
    """(B,H,W,C) -> (B*Ho*Wo, k*k*C), columns ordered (kh, kw, cin)."""
    B, H, W, C = x_nhwc.shape
    xp = jnp.pad(x_nhwc, ((0, 0), (pad, pad), (pad, pad), (0, 0)))
    Ho = H + 2 * pad - k + 1
    Wo = W + 2 * pad - k + 1
    cols = []
    for kh in range(k):
        for kw in range(k):
            cols.append(xp[:, kh:kh + Ho, kw:kw + Wo, :])
    patches = jnp.concatenate(cols, axis=-1)
    return patches.reshape(B * Ho * Wo, k * k * C), (B, Ho, Wo)


def maxpool2(x_nhwc):
    B, H, W, C = x_nhwc.shape
    return x_nhwc.reshape(B, H // 2, 2, W // 2, 2, C).max(axis=(2, 4))


# ----------------------------------------------------------------------------
# One-time parameter preparation (fold BN, permute layouts, cast to bf16)
# ----------------------------------------------------------------------------
def prepare_params(P):
    Q = {}

    def fold_conv(name):
        w = P[f"{name}_w"]                       # torch OIHW: (cout, cin, 3, 3)
        cout, cin = w.shape[0], w.shape[1]
        scale = P[f"{name}_g"] / jnp.sqrt(P[f"{name}_rv"] + EPS_BN)
        shift = P[f"{name}_beta"] - P[f"{name}_rm"] * scale
        # -> (kh, kw, cin, cout) flattened, matching im2col column order
        wm = jnp.transpose(w, (2, 3, 1, 0)).reshape(9 * cin, cout)
        Q[f"{name}_w"] = (wm * scale[None, :]).astype(jnp.bfloat16)
        Q[f"{name}_b"] = ((P[f"{name}_b"] * scale + shift)[None, :]).astype(jnp.float32)

    fold_conv("conv1")
    fold_conv("conv2")
    fold_conv("conv3")

    Q["fc_w"] = P["fc_w"].astype(jnp.float32)
    Q["fc_b"] = P["fc_b"].astype(jnp.float32)
    Q["ln_g"] = P["ln_g"].astype(jnp.float32)
    Q["ln_b"] = P["ln_b"].astype(jnp.float32)

    # Head layer 1: concat value|advantage, permute cnn rows from torch
    # (C,H,W)-flatten order to NHWC-flatten order (so no runtime transpose).
    fc_in = P["v1_w"].shape[0] - 32              # 4608
    Ccnn = P["conv3_w"].shape[0]                 # 128
    HW = fc_in // Ccnn                           # 36
    n_idx = np.arange(fc_in)
    perm = (n_idx % Ccnn) * HW + (n_idx // Ccnn)  # torch index for each nhwc index
    w1 = jnp.concatenate([P["v1_w"], P["a1_w"]], axis=1)        # (4640, 512)
    Q["w1_cnn"] = w1[:fc_in][perm].astype(jnp.bfloat16)          # (4608, 512)
    Q["w1_feat"] = w1[fc_in:].astype(jnp.bfloat16)               # (32, 512)
    Q["b1"] = jnp.concatenate([P["v1_b"], P["a1_b"]], axis=1).astype(jnp.float32)

    # Head layer 2: block-diagonal combine -> single (512, 1+A) matmul.
    H = P["v2_w"].shape[0]                       # 256
    A = P["a2_w"].shape[1]
    w2 = jnp.zeros((2 * H, 1 + A), jnp.float32)
    w2 = w2.at[:H, 0:1].set(P["v2_w"]).at[H:, 1:].set(P["a2_w"])
    Q["w2"] = w2
    Q["b2"] = jnp.concatenate([P["v2_b"], P["a2_b"]], axis=1).astype(jnp.float32)
    return Q


# ----------------------------------------------------------------------------
# Forward passes
# ----------------------------------------------------------------------------
def dueling_qnet_forward_pallas(grid_state_nchw, feature_state, Q):
    x = jnp.transpose(grid_state_nchw, (0, 2, 3, 1)).astype(jnp.float32)  # NCHW->NHWC

    def conv_block(x_in, name, pad):
        patches, (B, Ho, Wo) = im2col(x_in, k=3, pad=pad)
        h = mm_bias_relu(patches.astype(jnp.bfloat16), Q[f"{name}_w"], Q[f"{name}_b"])
        return h.reshape(B, Ho, Wo, Q[f"{name}_w"].shape[1])

    h = conv_block(x, "conv1", pad=1)      # (B,32,32,32)
    h = maxpool2(h)                        # (B,16,16,32)
    h = conv_block(h, "conv2", pad=1)      # (B,16,16,64)
    h = maxpool2(h)                        # (B, 8, 8,64)
    h = conv_block(h, "conv3", pad=0)      # (B, 6, 6,128)

    B = h.shape[0]
    x_cnn = h.reshape(B, -1).astype(jnp.bfloat16)   # NHWC flatten; W1 rows pre-permuted
    return dueling_heads_fused(x_cnn, feature_state.astype(jnp.float32), Q)


def reference_forward(grid_state_nchw, feature_state, P):
    """Pure-JAX f32 reference with exact torch semantics (eval-mode BN)."""
    x = jnp.transpose(grid_state_nchw, (0, 2, 3, 1)).astype(jnp.float32)

    def conv_bn_relu(x_in, name, pad):
        w = P[f"{name}_w"]
        cout, cin = w.shape[0], w.shape[1]
        patches, (B, Ho, Wo) = im2col(x_in, k=3, pad=pad)
        wm = jnp.transpose(w, (2, 3, 1, 0)).reshape(9 * cin, cout)
        y = patches @ wm + P[f"{name}_b"][None, :]
        scale = P[f"{name}_g"] / jnp.sqrt(P[f"{name}_rv"] + EPS_BN)
        shift = P[f"{name}_beta"] - P[f"{name}_rm"] * scale
        y = jnp.maximum(y * scale[None, :] + shift[None, :], 0.0)
        return y.reshape(B, Ho, Wo, cout)

    h = conv_bn_relu(x, "conv1", 1)
    h = maxpool2(h)
    h = conv_bn_relu(h, "conv2", 1)
    h = maxpool2(h)
    h = conv_bn_relu(h, "conv3", 0)
    B = h.shape[0]
    x_cnn = jnp.transpose(h, (0, 3, 1, 2)).reshape(B, -1)   # torch (C,H,W) flatten

    hf = feature_state.astype(jnp.float32) @ P["fc_w"] + P["fc_b"]
    mu = jnp.mean(hf, -1, keepdims=True)
    var = jnp.mean((hf - mu) ** 2, -1, keepdims=True)
    x_feat = jnp.maximum((hf - mu) / jnp.sqrt(var + EPS_LN) * P["ln_g"] + P["ln_b"], 0.0)

    combined = jnp.concatenate([x_cnn, x_feat], axis=1)
    hv = jnp.maximum(combined @ P["v1_w"] + P["v1_b"], 0.0)
    value = hv @ P["v2_w"] + P["v2_b"]
    ha = jnp.maximum(combined @ P["a1_w"] + P["a1_b"], 0.0)
    adv = ha @ P["a2_w"] + P["a2_b"]
    return value + adv - jnp.mean(adv, axis=1, keepdims=True)


# ----------------------------------------------------------------------------
# Deterministic synthetic parameters (torch layouts)
# ----------------------------------------------------------------------------
def init_params(key, input_channels=3, feature_size=11, output_size=3):
    ks = iter(jax.random.split(key, 64))
    P = {}

    def unif(shape, fan_in):
        s = 1.0 / np.sqrt(fan_in)
        return jax.random.uniform(next(ks), shape, jnp.float32, -s, s)

    def conv(name, cin, cout):
        P[f"{name}_w"] = unif((cout, cin, 3, 3), 9 * cin)   # PyTorch OIHW layout
        P[f"{name}_b"] = unif((cout,), 9 * cin)
        P[f"{name}_g"] = 1.0 + 0.1 * jax.random.normal(next(ks), (cout,), jnp.float32)
        P[f"{name}_beta"] = 0.1 * jax.random.normal(next(ks), (cout,), jnp.float32)
        P[f"{name}_rm"] = 0.1 * jax.random.normal(next(ks), (cout,), jnp.float32)
        P[f"{name}_rv"] = 0.5 + jax.random.uniform(next(ks), (cout,), jnp.float32)

    conv("conv1", input_channels, 32)
    conv("conv2", 32, 64)
    conv("conv3", 64, 128)

    fc_input_size = 128 * 6 * 6  # _calculate_conv_output_size with 32x32 input

    def lin(name, fin, fout):
        # stored as (in, out); a real torch Linear.weight (out,in) needs a .T
        P[f"{name}_w"] = unif((fin, fout), fin)
        P[f"{name}_b"] = unif((1, fout), fin)

    lin("fc", feature_size, 32)
    P["ln_g"] = (1.0 + 0.1 * jax.random.normal(next(ks), (32,), jnp.float32))[None, :]
    P["ln_b"] = (0.1 * jax.random.normal(next(ks), (32,), jnp.float32))[None, :]
    lin("v1", fc_input_size + 32, 256)
    lin("v2", 256, 1)
    lin("a1", fc_input_size + 32, 256)
    lin("a2", 256, output_size)
    return P


# ----------------------------------------------------------------------------
# Main
# ----------------------------------------------------------------------------
if __name__ == "__main__":
    B, C, S, F = 2, 3, 32, 11  # 32x32 spatial is required by fc_input_size=4608
    key = jax.random.PRNGKey(0)
    k_grid, k_feat = jax.random.split(key)
    grid_state = jax.random.normal(k_grid, (B, C, S, S), jnp.float32)     # NCHW
    feature_state = jax.random.normal(k_feat, (B, F), jnp.float32)

    P = init_params(jax.random.PRNGKey(1))
    Q = prepare_params(P)   # one-time offline prep: fold BN, permute, bf16

    fwd = jax.jit(dueling_qnet_forward_pallas)
    out = jax.block_until_ready(fwd(grid_state, feature_state, Q))

    ref = jax.block_until_ready(reference_forward(grid_state, feature_state, P))

    assert out.shape == (B, 3), out.shape
    np.testing.assert_allclose(np.asarray(out), np.asarray(ref), rtol=2e-2, atol=2e-2)
    print("KERNEL_OK")
</pallas_src>

<mosaic_0001>
module attributes {stable_mosaic.version = 11 : i64} {
  func.func @_mm_bias_relu_kernel(%arg0: i32, %arg1: memref<512x27xbf16, #tpu.memory_space<vmem>>, %arg2: memref<27x32xbf16, #tpu.memory_space<vmem>>, %arg3: memref<1x32xf32, #tpu.memory_space<vmem>>, %arg4: memref<512x32xf32, #tpu.memory_space<vmem>>) attributes {dimension_semantics = [#tpu.dimension_semantics<parallel>], iteration_bounds = array<i64: 4>, scalar_prefetch = 0 : i64, scratch_operands = 0 : i64, tpu.core_type = #tpu.core_type<tc>, window_params = [{transform_indices = @transform_0, window_bounds = array<i64: 512, 27>}, {pipeline_mode = #tpu.pipeline_mode<synchronous>, transform_indices = @transform_1, window_bounds = array<i64: 27, 32>}, {pipeline_mode = #tpu.pipeline_mode<synchronous>, transform_indices = @transform_2, window_bounds = array<i64: 1, 32>}, {transform_indices = @transform_3, window_bounds = array<i64: 512, 32>}]} {
    %c0 = arith.constant 0 : index
    %c0_0 = arith.constant 0 : index
    %0 = vector.load %arg1[%c0, %c0_0] : memref<512x27xbf16, #tpu.memory_space<vmem>>, vector<512x27xbf16>
    %c0_1 = arith.constant 0 : index
    %c0_2 = arith.constant 0 : index
    %1 = vector.load %arg2[%c0_1, %c0_2] : memref<27x32xbf16, #tpu.memory_space<vmem>>, vector<27x32xbf16>
    %cst = arith.constant dense<0.000000e+00> : vector<512x32xf32>
    %2 = tpu.matmul %0, %1, %cst {dimension_numbers = #tpu.dot_dimension_numbers<[1], [0], [0], [1], [0, 0, 1, 1], [], []>} : vector<512x27xbf16>, vector<27x32xbf16>, vector<512x32xf32> -> vector<512x32xf32>
    %c0_3 = arith.constant 0 : index
    %c0_4 = arith.constant 0 : index
    %3 = vector.load %arg3[%c0_3, %c0_4] : memref<1x32xf32, #tpu.memory_space<vmem>>, vector<1x32xf32>
    %4 = vector.broadcast %3 : vector<1x32xf32> to vector<512x32xf32>
    %5 = arith.addf %2, %4 : vector<512x32xf32>
    %cst_5 = arith.constant 0.000000e+00 : f32
    %6 = vector.broadcast %cst_5 : f32 to vector<512x32xf32>
    %7 = arith.maximumf %5, %6 : vector<512x32xf32>
    %c0_6 = arith.constant 0 : index
    %c0_7 = arith.constant 0 : index
    %8 = vector.load %arg4[%c0_6, %c0_7] : memref<512x32xf32, #tpu.memory_space<vmem>>, vector<512x32xf32>
    tpu.vector_store %arg4[%c0_6, %c0_7], %7 {strides = array<i32>} : memref<512x32xf32, #tpu.memory_space<vmem>>, vector<512x32xf32>,
    return
  }
  func.func @transform_0(%arg0: i32) -> (i32, i32) {
    %c0_i32 = arith.constant 0 : i32
    %c0_i32_0 = arith.constant 0 : i32
    return %arg0, %c0_i32 : i32, i32
  }
  func.func @transform_1(%arg0: i32) -> (i32, i32) {
    %c0_i32 = arith.constant 0 : i32
    %c0_i32_0 = arith.constant 0 : i32
    %c0_i32_1 = arith.constant 0 : i32
    return %c0_i32, %c0_i32_0 : i32, i32
  }
  func.func @transform_2(%arg0: i32) -> (i32, i32) {
    %c0_i32 = arith.constant 0 : i32
    %c0_i32_0 = arith.constant 0 : i32
    %c0_i32_1 = arith.constant 0 : i32
    return %c0_i32, %c0_i32_0 : i32, i32
  }
  func.func @transform_3(%arg0: i32) -> (i32, i32) {
    %c0_i32 = arith.constant 0 : i32
    %c0_i32_0 = arith.constant 0 : i32
    return %arg0, %c0_i32 : i32, i32
  }
}

module attributes {stable_mosaic.version = 11 : i64} {
  func.func @_mm_bias_relu_kernel(%arg0: i32, %arg1: memref<512x288xbf16, #tpu.memory_space<vmem>>, %arg2: memref<288x64xbf16, #tpu.memory_space<vmem>>, %arg3: memref<1x64xf32, #tpu.memory_space<vmem>>, %arg4: memref<512x64xf32, #tpu.memory_space<vmem>>) attributes {dimension_semantics = [#tpu.dimension_semantics<parallel>], iteration_bounds = array<i64: 1>, scalar_prefetch = 0 : i64, scratch_operands = 0 : i64, tpu.core_type = #tpu.core_type<tc>, window_params = [{transform_indices = @transform_0, window_bounds = array<i64: 512, 288>}, {pipeline_mode = #tpu.pipeline_mode<synchronous>, transform_indices = @transform_1, window_bounds = array<i64: 288, 64>}, {pipeline_mode = #tpu.pipeline_mode<synchronous>, transform_indices = @transform_2, window_bounds = array<i64: 1, 64>}, {transform_indices = @transform_3, window_bounds = array<i64: 512, 64>}]} {
    %c0 = arith.constant 0 : index
    %c0_0 = arith.constant 0 : index
    %0 = vector.load %arg1[%c0, %c0_0] : memref<512x288xbf16, #tpu.memory_space<vmem>>, vector<512x288xbf16>
    %c0_1 = arith.constant 0 : index
    %c0_2 = arith.constant 0 : index
    %1 = vector.load %arg2[%c0_1, %c0_2] : memref<288x64xbf16, #tpu.memory_space<vmem>>, vector<288x64xbf16>
    %cst = arith.constant dense<0.000000e+00> : vector<512x64xf32>
    %2 = tpu.matmul %0, %1, %cst {dimension_numbers = #tpu.dot_dimension_numbers<[1], [0], [0], [1], [0, 0, 1, 1], [], []>} : vector<512x288xbf16>, vector<288x64xbf16>, vector<512x64xf32> -> vector<512x64xf32>
    %c0_3 = arith.constant 0 : index
    %c0_4 = arith.constant 0 : index
    %3 = vector.load %arg3[%c0_3, %c0_4] : memref<1x64xf32, #tpu.memory_space<vmem>>, vector<1x64xf32>
    %4 = vector.broadcast %3 : vector<1x64xf32> to vector<512x64xf32>
    %5 = arith.addf %2, %4 : vector<512x64xf32>
    %cst_5 = arith.constant 0.000000e+00 : f32
    %6 = vector.broadcast %cst_5 : f32 to vector<512x64xf32>
    %7 = arith.maximumf %5, %6 : vector<512x64xf32>
    %c0_6 = arith.constant 0 : index
    %c0_7 = arith.constant 0 : index
    %8 = vector.load %arg4[%c0_6, %c0_7] : memref<512x64xf32, #tpu.memory_space<vmem>>, vector<512x64xf32>
    tpu.vector_store %arg4[%c0_6, %c0_7], %7 {strides = array<i32>} : memref<512x64xf32, #tpu.memory_space<vmem>>, vector<512x64xf32>,
    return
  }
  func.func @transform_0(%arg0: i32) -> (i32, i32) {
    %c0_i32 = arith.constant 0 : i32
    %c0_i32_0 = arith.constant 0 : i32
    return %arg0, %c0_i32 : i32, i32
  }
  func.func @transform_1(%arg0: i32) -> (i32, i32) {
    %c0_i32 = arith.constant 0 : i32
    %c0_i32_0 = arith.constant 0 : i32
    %c0_i32_1 = arith.constant 0 : i32
    return %c0_i32, %c0_i32_0 : i32, i32
  }
  func.func @transform_2(%arg0: i32) -> (i32, i32) {
    %c0_i32 = arith.constant 0 : i32
    %c0_i32_0 = arith.constant 0 : i32
    %c0_i32_1 = arith.constant 0 : i32
    return %c0_i32, %c0_i32_0 : i32, i32
  }
  func.func @transform_3(%arg0: i32) -> (i32, i32) {
    %c0_i32 = arith.constant 0 : i32
    %c0_i32_0 = arith.constant 0 : i32
    return %arg0, %c0_i32 : i32, i32
  }
}

module attributes {stable_mosaic.version = 11 : i64} {
  func.func @_mm_bias_relu_kernel(%arg0: i32, %arg1: memref<72x576xbf16, #tpu.memory_space<vmem>>, %arg2: memref<576x128xbf16, #tpu.memory_space<vmem>>, %arg3: memref<1x128xf32, #tpu.memory_space<vmem>>, %arg4: memref<72x128xf32, #tpu.memory_space<vmem>>) attributes {dimension_semantics = [#tpu.dimension_semantics<parallel>], iteration_bounds = array<i64: 1>, scalar_prefetch = 0 : i64, scratch_operands = 0 : i64, tpu.core_type = #tpu.core_type<tc>, window_params = [{transform_indices = @transform_0, window_bounds = array<i64: 72, 576>}, {pipeline_mode = #tpu.pipeline_mode<synchronous>, transform_indices = @transform_1, window_bounds = array<i64: 576, 128>}, {pipeline_mode = #tpu.pipeline_mode<synchronous>, transform_indices = @transform_2, window_bounds = array<i64: 1, 128>}, {transform_indices = @transform_3, window_bounds = array<i64: 72, 128>}]} {
    %c0 = arith.constant 0 : index
    %c0_0 = arith.constant 0 : index
    %0 = vector.load %arg1[%c0, %c0_0] : memref<72x576xbf16, #tpu.memory_space<vmem>>, vector<72x576xbf16>
    %c0_1 = arith.constant 0 : index
    %c0_2 = arith.constant 0 : index
    %1 = vector.load %arg2[%c0_1, %c0_2] : memref<576x128xbf16, #tpu.memory_space<vmem>>, vector<576x128xbf16>
    %cst = arith.constant dense<0.000000e+00> : vector<72x128xf32>
    %2 = tpu.matmul %0, %1, %cst {dimension_numbers = #tpu.dot_dimension_numbers<[1], [0], [0], [1], [0, 0, 1, 1], [], []>} : vector<72x576xbf16>, vector<576x128xbf16>, vector<72x128xf32> -> vector<72x128xf32>
    %c0_3 = arith.constant 0 : index
    %c0_4 = arith.constant 0 : index
    %3 = vector.load %arg3[%c0_3, %c0_4] : memref<1x128xf32, #tpu.memory_space<vmem>>, vector<1x128xf32>
    %4 = vector.broadcast %3 : vector<1x128xf32> to vector<72x128xf32>
    %5 = arith.addf %2, %4 : vector<72x128xf32>
    %cst_5 = arith.constant 0.000000e+00 : f32
    %6 = vector.broadcast %cst_5 : f32 to vector<72x128xf32>
    %7 = arith.maximumf %5, %6 : vector<72x128xf32>
    %c0_6 = arith.constant 0 : index
    %c0_7 = arith.constant 0 : index
    %8 = vector.load %arg4[%c0_6, %c0_7] : memref<72x128xf32, #tpu.memory_space<vmem>>, vector<72x128xf32>
    tpu.vector_store %arg4[%c0_6, %c0_7], %7 {strides = array<i32>} : memref<72x128xf32, #tpu.memory_space<vmem>>, vector<72x128xf32>,
    return
  }
  func.func @transform_0(%arg0: i32) -> (i32, i32) {
    %c0_i32 = arith.constant 0 : i32
    %c0_i32_0 = arith.constant 0 : i32
    return %arg0, %c0_i32 : i32, i32
  }
  func.func @transform_1(%arg0: i32) -> (i32, i32) {
    %c0_i32 = arith.constant 0 : i32
    %c0_i32_0 = arith.constant 0 : i32
    %c0_i32_1 = arith.constant 0 : i32
    return %c0_i32, %c0_i32_0 : i32, i32
  }
  func.func @transform_2(%arg0: i32) -> (i32, i32) {
    %c0_i32 = arith.constant 0 : i32
    %c0_i32_0 = arith.constant 0 : i32
    %c0_i32_1 = arith.constant 0 : i32
    return %c0_i32, %c0_i32_0 : i32, i32
  }
  func.func @transform_3(%arg0: i32) -> (i32, i32) {
    %c0_i32 = arith.constant 0 : i32
    %c0_i32_0 = arith.constant 0 : i32
    return %arg0, %c0_i32 : i32, i32
  }
}

module attributes {stable_mosaic.version = 11 : i64} {
  func.func @_heads_kernel(%arg0: i32, %arg1: memref<2x1152xbf16, #tpu.memory_space<vmem>>, %arg2: memref<1152x512xbf16, #tpu.memory_space<vmem>>, %arg3: memref<2x11xf32, #tpu.memory_space<vmem>>, %arg4: memref<11x32xf32, #tpu.memory_space<vmem>>, %arg5: memref<1x32xf32, #tpu.memory_space<vmem>>, %arg6: memref<1x32xf32, #tpu.memory_space<vmem>>, %arg7: memref<1x32xf32, #tpu.memory_space<vmem>>, %arg8: memref<32x512xbf16, #tpu.memory_space<vmem>>, %arg9: memref<1x512xf32, #tpu.memory_space<vmem>>, %arg10: memref<512x4xf32, #tpu.memory_space<vmem>>, %arg11: memref<1x4xf32, #tpu.memory_space<vmem>>, %arg12: memref<2x3xf32, #tpu.memory_space<vmem>>, %arg13: memref<2x512xf32, #tpu.memory_space<vmem>>) attributes {dimension_semantics = [#tpu.dimension_semantics<arbitrary>], iteration_bounds = array<i64: 4>, scalar_prefetch = 0 : i64, scratch_operands = 1 : i64, tpu.core_type = #tpu.core_type<tc>, window_params = [{transform_indices = @transform_0, window_bounds = array<i64: 2, 1152>}, {transform_indices = @transform_1, window_bounds = array<i64: 1152, 512>}, {pipeline_mode = #tpu.pipeline_mode<synchronous>, transform_indices = @transform_2, window_bounds = array<i64: 2, 11>}, {pipeline_mode = #tpu.pipeline_mode<synchronous>, transform_indices = @transform_3, window_bounds = array<i64: 11, 32>}, {pipeline_mode = #tpu.pipeline_mode<synchronous>, transform_indices = @transform_4, window_bounds = array<i64: 1, 32>}, {pipeline_mode = #tpu.pipeline_mode<synchronous>, transform_indices = @transform_5, window_bounds = array<i64: 1, 32>}, {pipeline_mode = #tpu.pipeline_mode<synchronous>, transform_indices = @transform_6, window_bounds = array<i64: 1, 32>}, {pipeline_mode = #tpu.pipeline_mode<synchronous>, transform_indices = @transform_7, window_bounds = array<i64: 32, 512>}, {pipeline_mode = #tpu.pipeline_mode<synchronous>, transform_indices = @transform_8, window_bounds = array<i64: 1, 512>}, {pipeline_mode = #tpu.pipeline_mode<synchronous>, transform_indices = @transform_9, window_bounds = array<i64: 512, 4>}, {pipeline_mode = #tpu.pipeline_mode<synchronous>, transform_indices = @transform_10, window_bounds = array<i64: 1, 4>}, {pipeline_mode = #tpu.pipeline_mode<synchronous>, transform_indices = @transform_11, window_bounds = array<i64: 2, 3>}]} {
    %c0_i32 = arith.constant 0 : i32
    %0 = arith.cmpi eq, %arg0, %c0_i32 : i32
    %1 = arith.extui %0 : i1 to i32
    %c0_i32_0 = arith.constant 0 : i32
    %2 = arith.cmpi ne, %1, %c0_i32_0 : i32
    scf.if %2 {
      %c0_9 = arith.constant 0 : index
      %c0_10 = arith.constant 0 : index
      %12 = vector.load %arg3[%c0_9, %c0_10] : memref<2x11xf32, #tpu.memory_space<vmem>>, vector<2x11xf32>
      %c0_11 = arith.constant 0 : index
      %c0_12 = arith.constant 0 : index
      %13 = vector.load %arg4[%c0_11, %c0_12] : memref<11x32xf32, #tpu.memory_space<vmem>>, vector<11x32xf32>
      %cst_13 = arith.constant dense<0.000000e+00> : vector<2x32xf32>
      %14 = tpu.matmul %12, %13, %cst_13 {dimension_numbers = #tpu.dot_dimension_numbers<[1], [0], [0], [1], [0, 0, 1, 1], [], []>} : vector<2x11xf32>, vector<11x32xf32>, vector<2x32xf32> -> vector<2x32xf32>
      %c0_14 = arith.constant 0 : index
      %c0_15 = arith.constant 0 : index
      %15 = vector.load %arg5[%c0_14, %c0_15] : memref<1x32xf32, #tpu.memory_space<vmem>>, vector<1x32xf32>
      %16 = vector.broadcast %15 : vector<1x32xf32> to vector<2x32xf32>
      %17 = arith.addf %14, %16 : vector<2x32xf32>
      %cst_16 = arith.constant dense<0.000000e+00> : vector<2xf32>
      %18 = vector.multi_reduction <add>, %17, %cst_16 [1] : vector<2x32xf32> to vector<2xf32>
      %19 = vector.shape_cast %18 : vector<2xf32> to vector<2x1xf32>
      %cst_17 = arith.constant 3.200000e+01 : f32
      %20 = vector.broadcast %cst_17 : f32 to vector<2x1xf32>
      %21 = arith.divf %19, %20 : vector<2x1xf32>
      %22 = vector.broadcast %21 : vector<2x1xf32> to vector<2x32xf32>
      %23 = arith.subf %17, %22 : vector<2x32xf32>
      %24 = arith.mulf %23, %23 : vector<2x32xf32>
      %cst_18 = arith.constant dense<0.000000e+00> : vector<2xf32>
      %25 = vector.multi_reduction <add>, %24, %cst_18 [1] : vector<2x32xf32> to vector<2xf32>
      %26 = vector.shape_cast %25 : vector<2xf32> to vector<2x1xf32>
      %cst_19 = arith.constant 3.200000e+01 : f32
      %27 = vector.broadcast %cst_19 : f32 to vector<2x1xf32>
      %28 = arith.divf %26, %27 : vector<2x1xf32>
      %29 = vector.broadcast %21 : vector<2x1xf32> to vector<2x32xf32>
      %30 = arith.subf %17, %29 : vector<2x32xf32>
      %cst_20 = arith.constant 9.99999974E-6 : f32
      %31 = vector.broadcast %cst_20 : f32 to vector<2x1xf32>
      %32 = arith.addf %28, %31 : vector<2x1xf32>
      %33 = math.rsqrt %32 : vector<2x1xf32>
      %34 = vector.broadcast %33 : vector<2x1xf32> to vector<2x32xf32>
      %35 = arith.mulf %30, %34 : vector<2x32xf32>
      %c0_21 = arith.constant 0 : index
      %c0_22 = arith.constant 0 : index
      %36 = vector.load %arg6[%c0_21, %c0_22] : memref<1x32xf32, #tpu.memory_space<vmem>>, vector<1x32xf32>
      %37 = vector.broadcast %36 : vector<1x32xf32> to vector<2x32xf32>
      %38 = arith.mulf %35, %37 : vector<2x32xf32>
      %c0_23 = arith.constant 0 : index
      %c0_24 = arith.constant 0 : index
      %39 = vector.load %arg7[%c0_23, %c0_24] : memref<1x32xf32, #tpu.memory_space<vmem>>, vector<1x32xf32>
      %40 = vector.broadcast %39 : vector<1x32xf32> to vector<2x32xf32>
      %41 = arith.addf %38, %40 : vector<2x32xf32>
      %cst_25 = arith.constant 0.000000e+00 : f32
      %42 = vector.broadcast %cst_25 : f32 to vector<2x32xf32>
      %43 = arith.maximumf %41, %42 : vector<2x32xf32>
      %44 = arith.truncf %43 : vector<2x32xf32> to vector<2x32xbf16>
      %c0_26 = arith.constant 0 : index
      %c0_27 = arith.constant 0 : index
      %45 = vector.load %arg8[%c0_26, %c0_27] : memref<32x512xbf16, #tpu.memory_space<vmem>>, vector<32x512xbf16>
      %cst_28 = arith.constant dense<0.000000e+00> : vector<2x512xf32>
      %46 = tpu.matmul %44, %45, %cst_28 {dimension_numbers = #tpu.dot_dimension_numbers<[1], [0], [0], [1], [0, 0, 1, 1], [], []>} : vector<2x32xbf16>, vector<32x512xbf16>, vector<2x512xf32> -> vector<2x512xf32>
      %c0_29 = arith.constant 0 : index
      %c0_30 = arith.constant 0 : index
      %47 = vector.load %arg9[%c0_29, %c0_30] : memref<1x512xf32, #tpu.memory_space<vmem>>, vector<1x512xf32>
      %48 = vector.broadcast %47 : vector<1x512xf32> to vector<2x512xf32>
      %49 = arith.addf %46, %48 : vector<2x512xf32>
      %c0_31 = arith.constant 0 : index
      %c0_32 = arith.constant 0 : index
      %50 = vector.load %arg13[%c0_31, %c0_32] : memref<2x512xf32, #tpu.memory_space<vmem>>, vector<2x512xf32>
      tpu.vector_store %arg13[%c0_31, %c0_32], %49 {strides = array<i32>} : memref<2x512xf32, #tpu.memory_space<vmem>>, vector<2x512xf32>,
    } else {
    }
    %c0 = arith.constant 0 : index
    %c0_1 = arith.constant 0 : index
    %3 = vector.load %arg13[%c0, %c0_1] : memref<2x512xf32, #tpu.memory_space<vmem>>, vector<2x512xf32>
    %c0_2 = arith.constant 0 : index
    %c0_3 = arith.constant 0 : index
    %4 = vector.load %arg1[%c0_2, %c0_3] : memref<2x1152xbf16, #tpu.memory_space<vmem>>, vector<2x1152xbf16>
    %c0_4 = arith.constant 0 : index
    %c0_5 = arith.constant 0 : index
    %5 = vector.load %arg2[%c0_4, %c0_5] : memref<1152x512xbf16, #tpu.memory_space<vmem>>, vector<1152x512xbf16>
    %cst = arith.constant dense<0.000000e+00> : vector<2x512xf32>
    %6 = tpu.matmul %4, %5, %cst {dimension_numbers = #tpu.dot_dimension_numbers<[1], [0], [0], [1], [0, 0, 1, 1], [], []>} : vector<2x1152xbf16>, vector<1152x512xbf16>, vector<2x512xf32> -> vector<2x512xf32>
    %7 = arith.addf %3, %6 : vector<2x512xf32>
    %c0_6 = arith.constant 0 : index
    %c0_7 = arith.constant 0 : index
    %8 = vector.load %arg13[%c0_6, %c0_7] : memref<2x512xf32, #tpu.memory_space<vmem>>, vector<2x512xf32>
    tpu.vector_store %arg13[%c0_6, %c0_7], %7 {strides = array<i32>} : memref<2x512xf32, #tpu.memory_space<vmem>>, vector<2x512xf32>,
    %c3_i32 = arith.constant 3 : i32
    %9 = arith.cmpi eq, %arg0, %c3_i32 : i32
    %10 = arith.extui %9 : i1 to i32
    %c0_i32_8 = arith.constant 0 : i32
    %11 = arith.cmpi ne, %10, %c0_i32_8 : i32
    scf.if %11 {
      %c0_9 = arith.constant 0 : index
      %c0_10 = arith.constant 0 : index
      %12 = vector.load %arg13[%c0_9, %c0_10] : memref<2x512xf32, #tpu.memory_space<vmem>>, vector<2x512xf32>
      %cst_11 = arith.constant 0.000000e+00 : f32
      %13 = vector.broadcast %cst_11 : f32 to vector<2x512xf32>
      %14 = arith.maximumf %12, %13 : vector<2x512xf32>
      %c0_12 = arith.constant 0 : index
      %c0_13 = arith.constant 0 : index
      %15 = vector.load %arg10[%c0_12, %c0_13] : memref<512x4xf32, #tpu.memory_space<vmem>>, vector<512x4xf32>
      %cst_14 = arith.constant dense<0.000000e+00> : vector<2x4xf32>
      %16 = tpu.matmul %14, %15, %cst_14 {dimension_numbers = #tpu.dot_dimension_numbers<[1], [0], [0], [1], [0, 0, 1, 1], [], []>} : vector<2x512xf32>, vector<512x4xf32>, vector<2x4xf32> -> vector<2x4xf32>
      %c0_15 = arith.constant 0 : index
      %c0_16 = arith.constant 0 : index
      %17 = vector.load %arg11[%c0_15, %c0_16] : memref<1x4xf32, #tpu.memory_space<vmem>>, vector<1x4xf32>
      %18 = vector.broadcast %17 : vector<1x4xf32> to vector<2x4xf32>
      %19 = arith.addf %16, %18 : vector<2x4xf32>
      %20 = vector.extract_strided_slice %19 {offsets = [0, 0], sizes = [2, 1], strides = [1, 1]} : vector<2x4xf32> to vector<2x1xf32>
      %21 = vector.extract_strided_slice %19 {offsets = [0, 1], sizes = [2, 3], strides = [1, 1]} : vector<2x4xf32> to vector<2x3xf32>
      %22 = vector.broadcast %20 : vector<2x1xf32> to vector<2x3xf32>
      %23 = arith.addf %22, %21 : vector<2x3xf32>
      %cst_17 = arith.constant dense<0.000000e+00> : vector<2xf32>
      %24 = vector.multi_reduction <add>, %21, %cst_17 [1] : vector<2x3xf32> to vector<2xf32>
      %25 = vector.shape_cast %24 : vector<2xf32> to vector<2x1xf32>
      %cst_18 = arith.constant 3.000000e+00 : f32
      %26 = vector.broadcast %cst_18 : f32 to vector<2x1xf32>
      %27 = arith.divf %25, %26 : vector<2x1xf32>
      %28 = vector.broadcast %27 : vector<2x1xf32> to vector<2x3xf32>
      %29 = arith.subf %23, %28 : vector<2x3xf32>
      %c0_19 = arith.constant 0 : index
      %c0_20 = arith.constant 0 : index
      %30 = vector.load %arg12[%c0_19, %c0_20] : memref<2x3xf32, #tpu.memory_space<vmem>>, vector<2x3xf32>
      tpu.vector_store %arg12[%c0_19, %c0_20], %29 {strides = array<i32>} : memref<2x3xf32, #tpu.memory_space<vmem>>, vector<2x3xf32>,
    } else {
    }
    return
  }
  func.func @transform_0(%arg0: i32) -> (i32, i32) {
    %c0_i32 = arith.constant 0 : i32
    %c0_i32_0 = arith.constant 0 : i32
    return %c0_i32, %arg0 : i32, i32
  }
  func.func @transform_1(%arg0: i32) -> (i32, i32) {
    %c0_i32 = arith.constant 0 : i32
    %c0_i32_0 = arith.constant 0 : i32
    return %arg0, %c0_i32 : i32, i32
  }
  func.func @transform_2(%arg0: i32) -> (i32, i32) {
    %c0_i32 = arith.constant 0 : i32
    %c0_i32_0 = arith.constant 0 : i32
    %c0_i32_1 = arith.constant 0 : i32
    return %c0_i32, %c0_i32_0 : i32, i32
  }
  func.func @transform_3(%arg0: i32) -> (i32, i32) {
    %c0_i32 = arith.constant 0 : i32
    %c0_i32_0 = arith.constant 0 : i32
    %c0_i32_1 = arith.constant 0 : i32
    return %c0_i32, %c0_i32_0 : i32, i32
  }
  func.func @transform_4(%arg0: i32) -> (i32, i32) {
    %c0_i32 = arith.constant 0 : i32
    %c0_i32_0 = arith.constant 0 : i32
    %c0_i32_1 = arith.constant 0 : i32
    return %c0_i32, %c0_i32_0 : i32, i32
  }
  func.func @transform_5(%arg0: i32) -> (i32, i32) {
    %c0_i32 = arith.constant 0 : i32
    %c0_i32_0 = arith.constant 0 : i32
    %c0_i32_1 = arith.constant 0 : i32
    return %c0_i32, %c0_i32_0 : i32, i32
  }
  func.func @transform_6(%arg0: i32) -> (i32, i32) {
    %c0_i32 = arith.constant 0 : i32
    %c0_i32_0 = arith.constant 0 : i32
    %c0_i32_1 = arith.constant 0 : i32
    return %c0_i32, %c0_i32_0 : i32, i32
  }
  func.func @transform_7(%arg0: i32) -> (i32, i32) {
    %c0_i32 = arith.constant 0 : i32
    %c0_i32_0 = arith.constant 0 : i32
    %c0_i32_1 = arith.constant 0 : i32
    return %c0_i32, %c0_i32_0 : i32, i32
  }
  func.func @transform_8(%arg0: i32) -> (i32, i32) {
    %c0_i32 = arith.constant 0 : i32
    %c0_i32_0 = arith.constant 0 : i32
    %c0_i32_1 = arith.constant 0 : i32
    return %c0_i32, %c0_i32_0 : i32, i32
  }
  func.func @transform_9(%arg0: i32) -> (i32, i32) {
    %c0_i32 = arith.constant 0 : i32
    %c0_i32_0 = arith.constant 0 : i32
    %c0_i32_1 = arith.constant 0 : i32
    return %c0_i32, %c0_i32_0 : i32, i32
  }
  func.func @transform_10(%arg0: i32) -> (i32, i32) {
    %c0_i32 = arith.constant 0 : i32
    %c0_i32_0 = arith.constant 0 : i32
    %c0_i32_1 = arith.constant 0 : i32
    return %c0_i32, %c0_i32_0 : i32, i32
  }
  func.func @transform_11(%arg0: i32) -> (i32, i32) {
    %c0_i32 = arith.constant 0 : i32
    %c0_i32_0 = arith.constant 0 : i32
    %c0_i32_1 = arith.constant 0 : i32
    return %c0_i32, %c0_i32_0 : i32, i32
  }
}

</mosaic_0001>

<llo_original>
// kernel: dueling_qnet_forward_pallas.4
$region0: #{dueling_qnet_forward_pallas.4}
  #allocation0 [shape = 'u32[]', space=smem, size = 0x4, offset = 0x4, fixed_abs, tag = 'smem constant byte address 0x4 - core index']
  #allocation1 [shape = 'u32[144,128]{1,0:T(1,128)}', space=vmem, size = 0x12000, scoped, tag = 'internal scratch']
  %s0 = inlined_call_operand.vmem [shape: bf16[2048,27], index: 0, kind: input, shape index: {}]
  %s1 = inlined_call_operand.hbm [shape: bf16[27,32], index: 1, kind: input, shape index: {}]
  %s2 = inlined_call_operand.hbm [shape: f32[1,32], index: 2, kind: input, shape index: {}]
  %s3 = inlined_call_operand.vmem [shape: f32[2048,32], index: 3, kind: output, shape index: {}]
  %s4 = sld [smem:[#allocation0]]
  $region53: #{dueling_qnet_forward_pallas.4} parent=0
    _
  %s6 = ssub.s32 1, %s4
  %s7 = scalar_select 0, %s6, %s4
  $region1: #{dueling_qnet_forward_pallas.4} parent=0
    #allocation2 [shape = 'u8[8192]{0}', space=vmem, size = 0x2000, scoped, tag = 'input window, operand 1, single buffered']
    #allocation3 [shape = 's32[2]{0}', space=sflag, size = 0x8, scoped, tag = 'scoped memory for dueling_qnet_forward_pallas.4']
    #allocation4 [shape = 'u8[512]{0}', space=vmem, size = 0x400, scoped, tag = 'input window, operand 2, single buffered']
    #allocation5 [shape = 's32[1]{0}', space=sflag, size = 0x4, scoped, tag = 'scoped memory for dueling_qnet_forward_pallas.4']
    %8 = vsyncpa [#allocation3], 0
    %9 = vsyncpa [#allocation5], 0
    loop: start=0, step=1, limit=6
    $region2: #{dueling_qnet_forward_pallas.4} parent=1 // loop_pre_header
      _
    $region3: #{dueling_qnet_forward_pallas.4} parent=1 // loop_header
      %s11 = sphi 0, %s15
      %p12 = scmp.ge.s32.totalorder %s11, 6
      %s21 = sphi 0, %s23
      %s24 = sphi 0, %s21
      %s25 = sphi 0, %s24
      %s41 = sphi 0, %s25
      %s45 = sphi 0, %s45
      %s47 = sphi 0, %s45
      %s48 = sphi 0, %s47
      %s62 = sphi 0, %s48
      %s66 = sphi 0, %s66
      %s68 = sphi 0, %s66
      %s69 = sphi 0, %s68
      %s83 = sphi 0, %s69
      %s89 = sphi 0, %s91
      %s92 = sphi 0, %s89
      %s93 = sphi 0, %s92
      %s109 = sphi 0, %s93
    $region4: #{dueling_qnet_forward_pallas.4} parent=1 // loop_header_branch
      %14 = sbr.rel (%p12) target = $region8
    $region5: #{dueling_qnet_forward_pallas.4} parent=1 // loop_body
      %s16 = ssub.s32 %s11, 1
      %s17 = ssub.s32 %s11, 2
      %s18 = sadd.s32 %s11, 1
      %s19 = ssub.s32 %s11, %s18
      %p20 = scmp.eq.s32.totalorder %s19, 0
      %s22 = sadd.s32 %s21, 1
      %s23 = scalar_select %p20, %s21, %s22
      %p26 = pneg %p20
      %p27 = scmp.eq.s32.totalorder %s11, 3
      %p28 = por %p26, %p27
      %p29 = scmp.ne.s32.totalorder %s21, %s24
      %p30 = scmp.eq.s32.totalorder %s11, 0
      %p31 = por %p29, %p30
      %p32 = scmp.ne.s32.totalorder %s21, %s24
      %p33 = scmp.eq.s32.totalorder %s16, 3
      %p34 = por %p32, %p33
      %p35 = scmp.ne.s32.totalorder %s24, %s25
      %p36 = scmp.eq.s32.totalorder %s16, 0
      %p37 = por %p35, %p36
      %p38 = scmp.ne.s32.totalorder %s24, %s25
      %p39 = scmp.eq.s32.totalorder %s17, 3
      %p40 = por %p38, %p39
      %p42 = scmp.ne.s32.totalorder %s25, %s41
      %p43 = scmp.eq.s32.totalorder %s17, 0
      %p44 = por %p42, %p43
      %s46 = sadd.s32 %s45, 1
      %p49 = scmp.eq.s32.totalorder %s11, 3
      %p50 = scmp.ne.s32.totalorder %s45, %s47
      %p51 = scmp.eq.s32.totalorder %s11, 0
      %p52 = por %p50, %p51
      %p53 = scmp.ne.s32.totalorder %s45, %s47
      %p54 = scmp.eq.s32.totalorder %s16, 3
      %p55 = por %p53, %p54
      %p56 = scmp.ne.s32.totalorder %s47, %s48
      %p57 = scmp.eq.s32.totalorder %s16, 0
      %p58 = por %p56, %p57
      %p59 = scmp.ne.s32.totalorder %s47, %s48
      %p60 = scmp.eq.s32.totalorder %s17, 3
      %p61 = por %p59, %p60
      %p63 = scmp.ne.s32.totalorder %s48, %s62
      %p64 = scmp.eq.s32.totalorder %s17, 0
      %p65 = por %p63, %p64
      %s67 = sadd.s32 %s66, 1
      %p70 = scmp.eq.s32.totalorder %s11, 3
      %p71 = scmp.ne.s32.totalorder %s66, %s68
      %p72 = scmp.eq.s32.totalorder %s11, 0
      %p73 = por %p71, %p72
      %p74 = scmp.ne.s32.totalorder %s66, %s68
      %p75 = scmp.eq.s32.totalorder %s16, 3
      %p76 = por %p74, %p75
      %p77 = scmp.ne.s32.totalorder %s68, %s69
      %p78 = scmp.eq.s32.totalorder %s16, 0
      %p79 = por %p77, %p78
      %p80 = scmp.ne.s32.totalorder %s68, %s69
      %p81 = scmp.eq.s32.totalorder %s17, 3
      %p82 = por %p80, %p81
      %p84 = scmp.ne.s32.totalorder %s69, %s83
      %p85 = scmp.eq.s32.totalorder %s17, 0
      %p86 = por %p84, %p85
      %s87 = ssub.s32 %s11, %s18
      %p88 = scmp.eq.s32.totalorder %s87, 0
      %s90 = sadd.s32 %s89, 1
      %s91 = scalar_select %p88, %s89, %s90
      %p94 = pneg %p88
      %p95 = scmp.eq.s32.totalorder %s11, 3
      %p96 = por %p94, %p95
      %p97 = scmp.ne.s32.totalorder %s89, %s92
      %p98 = scmp.eq.s32.totalorder %s11, 0
      %p99 = por %p97, %p98
      %p100 = scmp.ne.s32.totalorder %s89, %s92
      %p101 = scmp.eq.s32.totalorder %s16, 3
      %p102 = por %p100, %p101
      %p103 = scmp.ne.s32.totalorder %s92, %s93
      %p104 = scmp.eq.s32.totalorder %s16, 0
      %p105 = por %p103, %p104
      %p106 = scmp.ne.s32.totalorder %s92, %s93
      %p107 = scmp.eq.s32.totalorder %s17, 3
      %p108 = por %p106, %p107
      %p110 = scmp.ne.s32.totalorder %s93, %s109
      %p111 = scmp.eq.s32.totalorder %s17, 0
      %p112 = por %p110, %p111
      %p113 = scmp.le.s32.totalorder 1, %s11
      %p114 = scmp.lt.s32.totalorder %s11, 5
      %p115 = pnand %p113, %p114
      %p116 = pneg %p115
      // Predicated region
      $region9: #{dueling_qnet_forward_pallas.4} parent=5 // pred_check
        _
      $region10: #{dueling_qnet_forward_pallas.4} parent=5 // pred_check_branch
        %118 = sbr.rel (%p115) target = $region12
      $region11: #{dueling_qnet_forward_pallas.4} parent=5 // pred_region
        %s119 = ssub.s32 %s11, 1
        // Predicated region
        $region13: #{dueling_qnet_forward_pallas.4} parent=11 // pred_check
          %p120 = pneg %p58
        $region14: #{dueling_qnet_forward_pallas.4} parent=11 // pred_check_branch
          %122 = sbr.rel (%p120) target = $region16
        $region15: #{dueling_qnet_forward_pallas.4} parent=11 // pred_region
          %s124 = ssub.s32 256, 256
          %125 = vsyncadd [#allocation3], %s124
          %s126 = sshll.u32 [#allocation2], 4
          %s127 = int_to_ptr.vmem [resolvable:$true] %s126
          %132 = dma.hbm_to_vmem [thread:$0]  %s1, 256, %s127, [#allocation3], 64, 64, 4
        $region16: #{dueling_qnet_forward_pallas.4} parent=11 // pred_fallthru
          _
        // Predicated region
        $region17: #{dueling_qnet_forward_pallas.4} parent=11 // pred_check
          %p133 = pneg %p79
        $region18: #{dueling_qnet_forward_pallas.4} parent=11 // pred_check_branch
          %135 = sbr.rel (%p133) target = $region20
        $region19: #{dueling_qnet_forward_pallas.4} parent=11 // pred_region
          %s137 = ssub.s32 16, 16
          %138 = vsyncadd [#allocation5], %s137
          %s140 = sshll.u32 [#allocation4], 4
          %s141 = int_to_ptr.vmem [resolvable:$true] %s140
          %143 = dma.hbm_to_vmem [thread:$0]  %s2, 16, %s141, [#allocation5]
        $region20: #{dueling_qnet_forward_pallas.4} parent=11 // pred_fallthru
          _
      $region12: #{dueling_qnet_forward_pallas.4} parent=5 // pred_fallthru
        _
      %p144 = scmp.lt.s32.totalorder %s11, 4
      // Predicated region
      $region21: #{dueling_qnet_forward_pallas.4} parent=5 // pred_check
        %p145 = pneg %p144
      $region22: #{dueling_qnet_forward_pallas.4} parent=5 // pred_check_branch
        %147 = sbr.rel (%p145) target = $region24
      $region23: #{dueling_qnet_forward_pallas.4} parent=5 // pred_region
        // Predicated region
        $region25: #{dueling_qnet_forward_pallas.4} parent=23 // pred_check
          %p148 = pneg %p31
        $region26: #{dueling_qnet_forward_pallas.4} parent=23 // pred_check_branch
          %150 = sbr.rel (%p148) target = $region28
        $region27: #{dueling_qnet_forward_pallas.4} parent=23 // pred_region
          %s151 = smul.u32 64, %s11
          %p152 = scmp.lt.s32.totalorder %s151, 255
          %s153 = scalar_select %p152, %s151, 255
          %s154 = smul.addr %s153, 4
          %s155 = scalar_lea.vmem %s0, %s154
          %s156 = smul.u32 64, %s11
        $region28: #{dueling_qnet_forward_pallas.4} parent=23 // pred_fallthru
          _
      $region24: #{dueling_qnet_forward_pallas.4} parent=5 // pred_fallthru
        _
      %p157 = scmp.le.s32.totalorder 1, %s11
      %p158 = scmp.lt.s32.totalorder %s11, 5
      %p159 = pnand %p157, %p158
      %p160 = pneg %p159
      // Predicated region
      $region29: #{dueling_qnet_forward_pallas.4} parent=5 // pred_check
        _
      $region30: #{dueling_qnet_forward_pallas.4} parent=5 // pred_check_branch
        %162 = sbr.rel (%p159) target = $region32
      $region31: #{dueling_qnet_forward_pallas.4} parent=5 // pred_region
        %s163 = ssub.s32 %s11, 1
        // Predicated region
        $region33: #{dueling_qnet_forward_pallas.4} parent=31 // pred_check
          %p164 = pneg %p58
        $region34: #{dueling_qnet_forward_pallas.4} parent=31 // pred_check_branch
          %166 = sbr.rel (%p164) target = $region36
        $region35: #{dueling_qnet_forward_pallas.4} parent=31 // pred_region
          %167 = dma.done [#allocation3], 256
        $region36: #{dueling_qnet_forward_pallas.4} parent=31 // pred_fallthru
          _
        // Predicated region
        $region37: #{dueling_qnet_forward_pallas.4} parent=31 // pred_check
          %p168 = pneg %p79
        $region38: #{dueling_qnet_forward_pallas.4} parent=31 // pred_check_branch
          %170 = sbr.rel (%p168) target = $region40
        $region39: #{dueling_qnet_forward_pallas.4} parent=31 // pred_region
          %171 = dma.done [#allocation5], 16
        $region40: #{dueling_qnet_forward_pallas.4} parent=31 // pred_fallthru
          _
        %s172 = smul.u32 64, %s16
        %p173 = scmp.lt.s32.totalorder %s172, 255
        %s174 = scalar_select %p173, %s172, 255
        %s175 = smul.addr %s174, 4
        %s176 = scalar_lea.vmem %s0, %s175
        %p177 = pneg %p37
        %p178 = pneg %p34
        %p179 = pneg %p58
        %p180 = pneg %p55
        %p181 = pneg %p79
        %p182 = pneg %p76
        %p183 = pneg %p105
        %p184 = pneg %p102
        %s185 = smul.u32 64, %s16
        %p186 = scmp.lt.s32.totalorder %s185, 255
        %s187 = scalar_select %p186, %s185, 255
        %s188 = smul.addr %s187, 8
        %s189 = scalar_lea.vmem %s3, %s188
        %s190 = smul.u32 64, %s16
        %p191 = scmp.lt.s32.totalorder %s190, 255
        %s192 = scalar_select %p191, %s190, 255
        %s193 = smul.addr %s192, 4
        %s194 = scalar_lea.vmem %s0, %s193
        %s195 = smul.u32 64, %s16
        %s196 = smul.u32 64, %s16
        %p197 = scmp.lt.s32.totalorder %s196, 255
        %s198 = scalar_select %p197, %s196, 255
        %s199 = smul.addr %s198, 8
        %s200 = scalar_lea.vmem %s3, %s199
        %s201 = smul.u32 64, %s16
        %v203 = vld [vmem:[%s194] sm:$0xf]
        %v204 = vld [vmem:[%s194 + $0x4] sm:$0xf]
        %v205 = vld [vmem:[%s194 + $0x8] sm:$0xf]
        %v206 = vld [vmem:[%s194 + $0xc] sm:$0xf]
        %v207 = vld [vmem:[%s194 + $0x10] sm:$0xf]
        %v208 = vld [vmem:[%s194 + $0x14] sm:$0xf]
        %v209 = vld [vmem:[%s194 + $0x18] sm:$0xf]
        %v210 = vld [vmem:[%s194 + $0x1c] sm:$0xf]
        %v211 = vld [vmem:[%s194 + $0x20] sm:$0xf]
        %v212 = vld [vmem:[%s194 + $0x24] sm:$0xf]
        %v213 = vld [vmem:[%s194 + $0x28] sm:$0xf]
        %v214 = vld [vmem:[%s194 + $0x2c] sm:$0xf]
        %v215 = vld [vmem:[%s194 + $0x30] sm:$0xf]
        %v216 = vld [vmem:[%s194 + $0x34] sm:$0xf]
        %v217 = vld [vmem:[%s194 + $0x38] sm:$0xf]
        %v218 = vld [vmem:[%s194 + $0x3c] sm:$0xf]
        %v219 = vld [vmem:[%s194 + $0x40] sm:$0xf]
        %v220 = vld [vmem:[%s194 + $0x44] sm:$0xf]
        %v221 = vld [vmem:[%s194 + $0x48] sm:$0xf]
        %v222 = vld [vmem:[%s194 + $0x4c] sm:$0xf]
        %v223 = vld [vmem:[%s194 + $0x50] sm:$0xf]
        %v224 = vld [vmem:[%s194 + $0x54] sm:$0xf]
        %v225 = vld [vmem:[%s194 + $0x58] sm:$0xf]
        %v226 = vld [vmem:[%s194 + $0x5c] sm:$0xf]
        %v227 = vld [vmem:[%s194 + $0x60] sm:$0xf]
        %v228 = vld [vmem:[%s194 + $0x64] sm:$0xf]
        %v229 = vld [vmem:[%s194 + $0x68] sm:$0xf]
        %v230 = vld [vmem:[%s194 + $0x6c] sm:$0xf]
        %v231 = vld [vmem:[%s194 + $0x70] sm:$0xf]
        %v232 = vld [vmem:[%s194 + $0x74] sm:$0xf]
        %v233 = vld [vmem:[%s194 + $0x78] sm:$0xf]
        %v234 = vld [vmem:[%s194 + $0x7c] sm:$0xf]
        %v235 = vld [vmem:[%s194 + $0x80] sm:$0xf]
        %v236 = vld [vmem:[%s194 + $0x84] sm:$0xf]
        %v237 = vld [vmem:[%s194 + $0x88] sm:$0xf]
        %v238 = vld [vmem:[%s194 + $0x8c] sm:$0xf]
        %v239 = vld [vmem:[%s194 + $0x90] sm:$0xf]
        %v240 = vld [vmem:[%s194 + $0x94] sm:$0xf]
        %v241 = vld [vmem:[%s194 + $0x98] sm:$0xf]
        %v242 = vld [vmem:[%s194 + $0x9c] sm:$0xf]
        %v243 = vld [vmem:[%s194 + $0xa0] sm:$0xf]
        %v244 = vld [vmem:[%s194 + $0xa4] sm:$0xf]
        %v245 = vld [vmem:[%s194 + $0xa8] sm:$0xf]
        %v246 = vld [vmem:[%s194 + $0xac] sm:$0xf]
        %v247 = vld [vmem:[%s194 + $0xb0] sm:$0xf]
        %v248 = vld [vmem:[%s194 + $0xb4] sm:$0xf]
        %v249 = vld [vmem:[%s194 + $0xb8] sm:$0xf]
        %v250 = vld [vmem:[%s194 + $0xbc] sm:$0xf]
        %v251 = vld [vmem:[%s194 + $0xc0] sm:$0xf]
        %v252 = vld [vmem:[%s194 + $0xc4] sm:$0xf]
        %v253 = vld [vmem:[%s194 + $0xc8] sm:$0xf]
        %v254 = vld [vmem:[%s194 + $0xcc] sm:$0xf]
        %v255 = vld [vmem:[%s194 + $0xd0] sm:$0xf]
        %v256 = vld [vmem:[%s194 + $0xd4] sm:$0xf]
        %v257 = vld [vmem:[%s194 + $0xd8] sm:$0xf]
        %v258 = vld [vmem:[%s194 + $0xdc] sm:$0xf]
        %v259 = vld [vmem:[%s194 + $0xe0] sm:$0xf]
        %v260 = vld [vmem:[%s194 + $0xe4] sm:$0xf]
        %v261 = vld [vmem:[%s194 + $0xe8] sm:$0xf]
        %v262 = vld [vmem:[%s194 + $0xec] sm:$0xf]
        %v263 = vld [vmem:[%s194 + $0xf0] sm:$0xf]
        %v264 = vld [vmem:[%s194 + $0xf4] sm:$0xf]
        %v265 = vld [vmem:[%s194 + $0xf8] sm:$0xf]
        %v266 = vld [vmem:[%s194 + $0xfc] sm:$0xf]
        %v267 = vld [vmem:[#allocation2] sm:$0xf]
        %v268 = vld [vmem:[#allocation2 + $0x4] sm:$0xf]
        %v269 = vld [vmem:[#allocation2 + $0x8] sm:$0xf]
        %v270 = vld [vmem:[#allocation2 + $0xc] sm:$0x3]
        %v271 = vld [vmem:[#allocation4] sm:$0x1]
        %v273 = vlaneseq
        %v274 = vshrl.u32 %v273, 7
        %v275 = vsub.s32 0, %v274
        %v276 = vrot.slane %v271, %v275
        %v342 = vunpack.c.l.b16 %v203
        %v343 = vunpack.c.l.b16 %v204
        %v344 = vunpack.c.l.b16 %v205
        %v345 = vunpack.c.l.b16 %v206
        %v346 = vunpack.c.l.b16 %v207
        %v347 = vunpack.c.l.b16 %v208
        %v348 = vunpack.c.l.b16 %v209
        %v349 = vunpack.c.l.b16 %v210
        %v350 = vunpack.c.l.b16 %v211
        %v351 = vunpack.c.l.b16 %v212
        %v352 = vunpack.c.l.b16 %v213
        %v353 = vunpack.c.l.b16 %v214
        %v354 = vunpack.c.l.b16 %v215
        %v355 = vunpack.c.l.b16 %v216
        %v356 = vunpack.c.l.b16 %v217
        %v357 = vunpack.c.l.b16 %v218
        %v358 = vunpack.c.l.b16 %v219
        %v359 = vunpack.c.l.b16 %v220
        %v360 = vunpack.c.l.b16 %v221
        %v361 = vunpack.c.l.b16 %v222
        %v362 = vunpack.c.l.b16 %v223
        %v363 = vunpack.c.l.b16 %v224
        %v364 = vunpack.c.l.b16 %v225
        %v365 = vunpack.c.l.b16 %v226
        %v366 = vunpack.c.l.b16 %v227
        %v367 = vunpack.c.l.b16 %v228
        %v368 = vunpack.c.l.b16 %v229
        %v369 = vunpack.c.l.b16 %v230
        %v370 = vunpack.c.l.b16 %v231
        %v371 = vunpack.c.l.b16 %v232
        %v372 = vunpack.c.l.b16 %v233
        %v373 = vunpack.c.l.b16 %v234
        %v374 = vunpack.c.l.b16 %v235
        %v375 = vunpack.c.l.b16 %v236
        %v376 = vunpack.c.l.b16 %v237
        %v377 = vunpack.c.l.b16 %v238
        %v378 = vunpack.c.l.b16 %v239
        %v379 = vunpack.c.l.b16 %v240
        %v380 = vunpack.c.l.b16 %v241
        %v381 = vunpack.c.l.b16 %v242
        %v382 = vunpack.c.l.b16 %v243
        %v383 = vunpack.c.l.b16 %v244
        %v384 = vunpack.c.l.b16 %v245
        %v385 = vunpack.c.l.b16 %v246
        %v386 = vunpack.c.l.b16 %v247
        %v387 = vunpack.c.l.b16 %v248
        %v388 = vunpack.c.l.b16 %v249
        %v389 = vunpack.c.l.b16 %v250
        %v390 = vunpack.c.l.b16 %v251
        %v391 = vunpack.c.l.b16 %v252
        %v392 = vunpack.c.l.b16 %v253
        %v393 = vunpack.c.l.b16 %v254
        %v394 = vunpack.c.l.b16 %v255
        %v395 = vunpack.c.l.b16 %v256
        %v396 = vunpack.c.l.b16 %v257
        %v397 = vunpack.c.l.b16 %v258
        %v398 = vunpack.c.l.b16 %v259
        %v399 = vunpack.c.l.b16 %v260
        %v400 = vunpack.c.l.b16 %v261
        %v401 = vunpack.c.l.b16 %v262
        %v402 = vunpack.c.l.b16 %v263
        %v403 = vunpack.c.l.b16 %v264
        %v404 = vunpack.c.l.b16 %v265
        %v405 = vunpack.c.l.b16 %v266
        %v406 = vpack.c.b16 %v343, %v342
        %v407 = vpack.c.b16 %v345, %v344
        %v408 = vpack.c.b16 %v347, %v346
        %v409 = vpack.c.b16 %v349, %v348
        %v410 = vpack.c.b16 %v351, %v350
        %v411 = vpack.c.b16 %v353, %v352
        %v412 = vpack.c.b16 %v355, %v354
        %v413 = vpack.c.b16 %v357, %v356
        %v414 = vpack.c.b16 %v359, %v358
        %v415 = vpack.c.b16 %v361, %v360
        %v416 = vpack.c.b16 %v363, %v362
        %v417 = vpack.c.b16 %v365, %v364
        %v418 = vpack.c.b16 %v367, %v366
        %v419 = vpack.c.b16 %v369, %v368
        %v420 = vpack.c.b16 %v371, %v370
        %v421 = vpack.c.b16 %v373, %v372
        %v422 = vpack.c.b16 %v375, %v374
        %v423 = vpack.c.b16 %v377, %v376
        %v424 = vpack.c.b16 %v379, %v378
        %v425 = vpack.c.b16 %v381, %v380
        %v426 = vpack.c.b16 %v383, %v382
        %v427 = vpack.c.b16 %v385, %v384
        %v428 = vpack.c.b16 %v387, %v386
        %v429 = vpack.c.b16 %v389, %v388
        %v430 = vpack.c.b16 %v391, %v390
        %v431 = vpack.c.b16 %v393, %v392
        %v432 = vpack.c.b16 %v395, %v394
        %v433 = vpack.c.b16 %v397, %v396
        %v434 = vpack.c.b16 %v399, %v398
        %v435 = vpack.c.b16 %v401, %v400
        %v436 = vpack.c.b16 %v403, %v402
        %v437 = vpack.c.b16 %v405, %v404
        %v442 = vunpack.c.l.b16 %v267
        %v443 = vunpack.c.l.b16 %v268
        %v444 = vunpack.c.l.b16 %v269
        %v445 = vunpack.c.l.b16 %v270
        %v446 = vpack.c.b16 %v443, %v442
        %v447 = vpack.c.b16 %v445, %v444
        %vm449 = vcmask 220160
        %v451 = vsel %vm449, %v406, 0
        %v454 = vsel %vm449, %v407, 0
        %v457 = vsel %vm449, %v408, 0
        %v460 = vsel %vm449, %v409, 0
        %v463 = vsel %vm449, %v410, 0
        %v466 = vsel %vm449, %v411, 0
        %v469 = vsel %vm449, %v412, 0
        %v472 = vsel %vm449, %v413, 0
        %v475 = vsel %vm449, %v414, 0
        %v478 = vsel %vm449, %v415, 0
        %v481 = vsel %vm449, %v416, 0
        %v484 = vsel %vm449, %v417, 0
        %v487 = vsel %vm449, %v418, 0
        %v490 = vsel %vm449, %v419, 0
        %v493 = vsel %vm449, %v420, 0
        %v496 = vsel %vm449, %v421, 0
        %v499 = vsel %vm449, %v422, 0
        %v502 = vsel %vm449, %v423, 0
        %v505 = vsel %vm449, %v424, 0
        %v508 = vsel %vm449, %v425, 0
        %v511 = vsel %vm449, %v426, 0
        %v514 = vsel %vm449, %v427, 0
        %v517 = vsel %vm449, %v428, 0
        %v520 = vsel %vm449, %v429, 0
        %v523 = vsel %vm449, %v430, 0
        %v526 = vsel %vm449, %v431, 0
        %v529 = vsel %vm449, %v432, 0
        %v532 = vsel %vm449, %v433, 0
        %v535 = vsel %vm449, %v434, 0
        %v538 = vsel %vm449, %v435, 0
        %v541 = vsel %vm449, %v436, 0
        %v544 = vsel %vm449, %v437, 0
        %vm546 = vcmask 1044480
        %vm547 = vcmask 1045504
        %v548 = vsel %vm546, 4294967295, 65535
        %v549 = vsel %vm547, %v548, 0
        %v551 = vand.u32 %v447, %v549
        %553 = vmatprep.subr.bf16.mxu0 0
        %554 = vmatpush1.bf16.msra.mxu0 0
        %555 = vmatprep.subr.bf16.mxu0 0
        %556 = vmatpush1.bf16.msra.mxu0 0
        %557 = vmatprep.subr.bf16.mxu0 0
        %558 = vmatpush1.bf16.msra.mxu0 0
        %559 = vmatprep.subr.bf16.mxu0 0
        %560 = vmatpush1.bf16.msra.mxu0 0
        %561 = vmatprep.subr.bf16.mxu0 0
        %562 = vmatpush1.bf16.msra.mxu0 0
        %563 = vmatprep.subr.bf16.mxu0 0
        %564 = vmatpush1.bf16.msra.mxu0 0
        %565 = vmatprep.subr.bf16.mxu0 0
        %566 = vmatpush1.bf16.msra.mxu0 %v551
        %567 = vmatprep.subr.bf16.mxu0 0
        %568 = vmatpush1.bf16.msra.mxu0 %v446
        %569 = vmatprep.subr.bf16.mxu0 0
        %570 = vmatpush2.bf16.msra.mxu0 0
        %571 = vmatprep.subr.bf16.mxu0 0
        %572 = vmatpush2.bf16.msra.mxu0 0
        %573 = vmatprep.subr.bf16.mxu0 0
        %574 = vmatpush2.bf16.msra.mxu0 0
        %575 = vmatprep.subr.bf16.mxu0 0
        %576 = vmatpush2.bf16.msra.mxu0 0
        %577 = vmatprep.subr.bf16.mxu0 0
        %578 = vmatpush2.bf16.msra.mxu0 0
        %579 = vmatprep.subr.bf16.mxu0 0
        %580 = vmatpush2.bf16.msra.mxu0 0
        %581 = vmatprep.subr.bf16.mxu0 0
        %582 = vmatpush2.bf16.msra.mxu0 0
        %583 = vmatprep.subr.bf16.mxu0 0
        %584 = vmatpush2.bf16.msra.mxu0 0
        %585 = vmatprep.mubr.bf16.mxu0 0
        %586 = vmatmul.mubr.bf16.gmra.mxu0 %v451
        %v587 = vpop.f32.mrf.mxu0
        %v588 = vadd.f32 %v276, %v587
        %v589 = vpop.f32.mrf.mxu0
        %v590 = vpop.f32.mrf.mxu0
        %v591 = vadd.f32 %v276, %v590
        %v592 = vpop.f32.mrf.mxu0
        %593 = vmatprep.mubr.bf16.mxu0 0
        %594 = vmatmul.mubr.bf16.gmra.mxu0 %v454
        %v595 = vpop.f32.mrf.mxu0
        %v596 = vadd.f32 %v276, %v595
        %v597 = vpop.f32.mrf.mxu0
        %v598 = vpop.f32.mrf.mxu0
        %v599 = vadd.f32 %v276, %v598
        %v600 = vpop.f32.mrf.mxu0
        %601 = vmatprep.mubr.bf16.mxu0 0
        %602 = vmatmul.mubr.bf16.gmra.mxu0 %v457
        %v603 = vpop.f32.mrf.mxu0
        %v604 = vadd.f32 %v276, %v603
        %v605 = vpop.f32.mrf.mxu0
        %v606 = vpop.f32.mrf.mxu0
        %v607 = vadd.f32 %v276, %v606
        %v608 = vpop.f32.mrf.mxu0
        %609 = vmatprep.mubr.bf16.mxu0 0
        %610 = vmatmul.mubr.bf16.gmra.mxu0 %v460
        %v611 = vpop.f32.mrf.mxu0
        %v612 = vadd.f32 %v276, %v611
        %v613 = vpop.f32.mrf.mxu0
        %v614 = vpop.f32.mrf.mxu0
        %v615 = vadd.f32 %v276, %v614
        %v616 = vpop.f32.mrf.mxu0
        %617 = vmatprep.mubr.bf16.mxu0 0
        %618 = vmatmul.mubr.bf16.gmra.mxu0 %v463
        %v619 = vpop.f32.mrf.mxu0
        %v620 = vadd.f32 %v276, %v619
        %v621 = vpop.f32.mrf.mxu0
        %v622 = vpop.f32.mrf.mxu0
        %v623 = vadd.f32 %v276, %v622
        %v624 = vpop.f32.mrf.mxu0
        %625 = vmatprep.mubr.bf16.mxu0 0
        %626 = vmatmul.mubr.bf16.gmra.mxu0 %v466
        %v627 = vpop.f32.mrf.mxu0
        %v628 = vadd.f32 %v276, %v627
        %v629 = vpop.f32.mrf.mxu0
        %v630 = vpop.f32.mrf.mxu0
        %v631 = vadd.f32 %v276, %v630
        %v632 = vpop.f32.mrf.mxu0
        %633 = vmatprep.mubr.bf16.mxu0 0
        %634 = vmatmul.mubr.bf16.gmra.mxu0 %v469
        %v635 = vpop.f32.mrf.mxu0
        %v636 = vadd.f32 %v276, %v635
        %v637 = vpop.f32.mrf.mxu0
        %v638 = vpop.f32.mrf.mxu0
        %v639 = vadd.f32 %v276, %v638
        %v640 = vpop.f32.mrf.mxu0
        %641 = vmatprep.mubr.bf16.mxu0 0
        %642 = vmatmul.mubr.bf16.gmra.mxu0 %v472
        %v643 = vpop.f32.mrf.mxu0
        %v644 = vadd.f32 %v276, %v643
        %v645 = vpop.f32.mrf.mxu0
        %v646 = vpop.f32.mrf.mxu0
        %v647 = vadd.f32 %v276, %v646
        %v648 = vpop.f32.mrf.mxu0
        %649 = vmatprep.mubr.bf16.mxu0 0
        %650 = vmatmul.mubr.bf16.gmra.mxu0 %v475
        %v651 = vpop.f32.mrf.mxu0
        %v652 = vadd.f32 %v276, %v651
        %v653 = vpop.f32.mrf.mxu0
        %v654 = vpop.f32.mrf.mxu0
        %v655 = vadd.f32 %v276, %v654
        %v656 = vpop.f32.mrf.mxu0
        %657 = vmatprep.mubr.bf16.mxu0 0
        %658 = vmatmul.mubr.bf16.gmra.mxu0 %v478
        %v659 = vpop.f32.mrf.mxu0
        %v660 = vadd.f32 %v276, %v659
        %v661 = vpop.f32.mrf.mxu0
        %v662 = vpop.f32.mrf.mxu0
        %v663 = vadd.f32 %v276, %v662
        %v664 = vpop.f32.mrf.mxu0
        %665 = vmatprep.mubr.bf16.mxu0 0
        %666 = vmatmul.mubr.bf16.gmra.mxu0 %v481
        %v667 = vpop.f32.mrf.mxu0
        %v668 = vadd.f32 %v276, %v667
        %v669 = vpop.f32.mrf.mxu0
        %v670 = vpop.f32.mrf.mxu0
        %v671 = vadd.f32 %v276, %v670
        %v672 = vpop.f32.mrf.mxu0
        %673 = vmatprep.mubr.bf16.mxu0 0
        %674 = vmatmul.mubr.bf16.gmra.mxu0 %v484
        %v675 = vpop.f32.mrf.mxu0
        %v676 = vadd.f32 %v276, %v675
        %v677 = vpop.f32.mrf.mxu0
        %v678 = vpop.f32.mrf.mxu0
        %v679 = vadd.f32 %v276, %v678
        %v680 = vpop.f32.mrf.mxu0
        %681 = vmatprep.mubr.bf16.mxu0 0
        %682 = vmatmul.mubr.bf16.gmra.mxu0 %v487
        %v683 = vpop.f32.mrf.mxu0
        %v684 = vadd.f32 %v276, %v683
        %v685 = vpop.f32.mrf.mxu0
        %v686 = vpop.f32.mrf.mxu0
        %v687 = vadd.f32 %v276, %v686
        %v688 = vpop.f32.mrf.mxu0
        %689 = vmatprep.mubr.bf16.mxu0 0
        %690 = vmatmul.mubr.bf16.gmra.mxu0 %v490
        %v691 = vpop.f32.mrf.mxu0
        %v692 = vadd.f32 %v276, %v691
        %v693 = vpop.f32.mrf.mxu0
        %v694 = vpop.f32.mrf.mxu0
        %v695 = vadd.f32 %v276, %v694
        %v696 = vpop.f32.mrf.mxu0
        %697 = vmatprep.mubr.bf16.mxu0 0
        %698 = vmatmul.mubr.bf16.gmra.mxu0 %v493
        %v699 = vpop.f32.mrf.mxu0
        %v700 = vadd.f32 %v276, %v699
        %v701 = vpop.f32.mrf.mxu0
        %v702 = vpop.f32.mrf.mxu0
        %v703 = vadd.f32 %v276, %v702
        %v704 = vpop.f32.mrf.mxu0
        %705 = vmatprep.mubr.bf16.mxu0 0
        %706 = vmatmul.mubr.bf16.gmra.mxu0 %v496
        %v707 = vpop.f32.mrf.mxu0
        %v708 = vadd.f32 %v276, %v707
        %v709 = vpop.f32.mrf.mxu0
        %v710 = vpop.f32.mrf.mxu0
        %v711 = vadd.f32 %v276, %v710
        %v712 = vpop.f32.mrf.mxu0
        %713 = vmatprep.mubr.bf16.mxu0 0
        %714 = vmatmul.mubr.bf16.gmra.mxu0 %v499
        %v715 = vpop.f32.mrf.mxu0
        %v716 = vadd.f32 %v276, %v715
        %v717 = vpop.f32.mrf.mxu0
        %v718 = vpop.f32.mrf.mxu0
        %v719 = vadd.f32 %v276, %v718
        %v720 = vpop.f32.mrf.mxu0
        %721 = vmatprep.mubr.bf16.mxu0 0
        %722 = vmatmul.mubr.bf16.gmra.mxu0 %v502
        %v723 = vpop.f32.mrf.mxu0
        %v724 = vadd.f32 %v276, %v723
        %v725 = vpop.f32.mrf.mxu0
        %v726 = vpop.f32.mrf.mxu0
        %v727 = vadd.f32 %v276, %v726
        %v728 = vpop.f32.mrf.mxu0
        %729 = vmatprep.mubr.bf16.mxu0 0
        %730 = vmatmul.mubr.bf16.gmra.mxu0 %v505
        %v731 = vpop.f32.mrf.mxu0
        %v732 = vadd.f32 %v276, %v731
        %v733 = vpop.f32.mrf.mxu0
        %v734 = vpop.f32.mrf.mxu0
        %v735 = vadd.f32 %v276, %v734
        %v736 = vpop.f32.mrf.mxu0
        %737 = vmatprep.mubr.bf16.mxu0 0
        %738 = vmatmul.mubr.bf16.gmra.mxu0 %v508
        %v739 = vpop.f32.mrf.mxu0
        %v740 = vadd.f32 %v276, %v739
        %v741 = vpop.f32.mrf.mxu0
        %v742 = vpop.f32.mrf.mxu0
        %v743 = vadd.f32 %v276, %v742
        %v744 = vpop.f32.mrf.mxu0
        %745 = vmatprep.mubr.bf16.mxu0 0
        %746 = vmatmul.mubr.bf16.gmra.mxu0 %v511
        %v747 = vpop.f32.mrf.mxu0
        %v748 = vadd.f32 %v276, %v747
        %v749 = vpop.f32.mrf.mxu0
        %v750 = vpop.f32.mrf.mxu0
        %v751 = vadd.f32 %v276, %v750
        %v752 = vpop.f32.mrf.mxu0
        %753 = vmatprep.mubr.bf16.mxu0 0
        %754 = vmatmul.mubr.bf16.gmra.mxu0 %v514
        %v755 = vpop.f32.mrf.mxu0
        %v756 = vadd.f32 %v276, %v755
        %v757 = vpop.f32.mrf.mxu0
        %v758 = vpop.f32.mrf.mxu0
        %v759 = vadd.f32 %v276, %v758
        %v760 = vpop.f32.mrf.mxu0
        %761 = vmatprep.mubr.bf16.mxu0 0
        %762 = vmatmul.mubr.bf16.gmra.mxu0 %v517
        %v763 = vpop.f32.mrf.mxu0
        %v764 = vadd.f32 %v276, %v763
        %v765 = vpop.f32.mrf.mxu0
        %v766 = vpop.f32.mrf.mxu0
        %v767 = vadd.f32 %v276, %v766
        %v768 = vpop.f32.mrf.mxu0
        %769 = vmatprep.mubr.bf16.mxu0 0
        %770 = vmatmul.mubr.bf16.gmra.mxu0 %v520
        %v771 = vpop.f32.mrf.mxu0
        %v772 = vadd.f32 %v276, %v771
        %v773 = vpop.f32.mrf.mxu0
        %v774 = vpop.f32.mrf.mxu0
        %v775 = vadd.f32 %v276, %v774
        %v776 = vpop.f32.mrf.mxu0
        %777 = vmatprep.mubr.bf16.mxu0 0
        %778 = vmatmul.mubr.bf16.gmra.mxu0 %v523
        %v779 = vpop.f32.mrf.mxu0
        %v780 = vadd.f32 %v276, %v779
        %v781 = vpop.f32.mrf.mxu0
        %v782 = vpop.f32.mrf.mxu0
        %v783 = vadd.f32 %v276, %v782
        %v784 = vpop.f32.mrf.mxu0
        %785 = vmatprep.mubr.bf16.mxu0 0
        %786 = vmatmul.mubr.bf16.gmra.mxu0 %v526
        %v787 = vpop.f32.mrf.mxu0
        %v788 = vadd.f32 %v276, %v787
        %v789 = vpop.f32.mrf.mxu0
        %v790 = vpop.f32.mrf.mxu0
        %v791 = vadd.f32 %v276, %v790
        %v792 = vpop.f32.mrf.mxu0
        %793 = vmatprep.mubr.bf16.mxu0 0
        %794 = vmatmul.mubr.bf16.gmra.mxu0 %v529
        %v795 = vpop.f32.mrf.mxu0
        %v796 = vadd.f32 %v276, %v795
        %v797 = vpop.f32.mrf.mxu0
        %v798 = vpop.f32.mrf.mxu0
        %v799 = vadd.f32 %v276, %v798
        %v800 = vpop.f32.mrf.mxu0
        %801 = vmatprep.mubr.bf16.mxu0 0
        %802 = vmatmul.mubr.bf16.gmra.mxu0 %v532
        %v803 = vpop.f32.mrf.mxu0
        %v804 = vadd.f32 %v276, %v803
        %v805 = vpop.f32.mrf.mxu0
        %v806 = vpop.f32.mrf.mxu0
        %v807 = vadd.f32 %v276, %v806
        %v808 = vpop.f32.mrf.mxu0
        %809 = vmatprep.mubr.bf16.mxu0 0
        %810 = vmatmul.mubr.bf16.gmra.mxu0 %v535
        %v811 = vpop.f32.mrf.mxu0
        %v812 = vadd.f32 %v276, %v811
        %v813 = vpop.f32.mrf.mxu0
        %v814 = vpop.f32.mrf.mxu0
        %v815 = vadd.f32 %v276, %v814
        %v816 = vpop.f32.mrf.mxu0
        %817 = vmatprep.mubr.bf16.mxu0 0
        %818 = vmatmul.mubr.bf16.gmra.mxu0 %v538
        %v819 = vpop.f32.mrf.mxu0
        %v820 = vadd.f32 %v276, %v819
        %v821 = vpop.f32.mrf.mxu0
        %v822 = vpop.f32.mrf.mxu0
        %v823 = vadd.f32 %v276, %v822
        %v824 = vpop.f32.mrf.mxu0
        %825 = vmatprep.mubr.bf16.mxu0 0
        %826 = vmatmul.mubr.bf16.gmra.mxu0 %v541
        %v827 = vpop.f32.mrf.mxu0
        %v828 = vadd.f32 %v276, %v827
        %v829 = vpop.f32.mrf.mxu0
        %v830 = vpop.f32.mrf.mxu0
        %v831 = vadd.f32 %v276, %v830
        %v832 = vpop.f32.mrf.mxu0
        %833 = vmatprep.mubr.bf16.mxu0 0
        %834 = vmatmul.mubr.bf16.gmra.mxu0 %v544
        %v835 = vpop.f32.mrf.mxu0
        %v836 = vadd.f32 %v276, %v835
        %v837 = vpop.f32.mrf.mxu0
        %v838 = vpop.f32.mrf.mxu0
        %v839 = vadd.f32 %v276, %v838
        %v840 = vpop.f32.mrf.mxu0
        %841 = vdwg.mxu0
        %v842 = vmax.f32 %v588, 0.0
        %v843 = vmax.f32 %v591, 0.0
        %v844 = vmax.f32 %v596, 0.0
        %v845 = vmax.f32 %v599, 0.0
        %v846 = vmax.f32 %v604, 0.0
        %v847 = vmax.f32 %v607, 0.0
        %v848 = vmax.f32 %v612, 0.0
        %v849 = vmax.f32 %v615, 0.0
        %v850 = vmax.f32 %v620, 0.0
        %v851 = vmax.f32 %v623, 0.0
        %v852 = vmax.f32 %v628, 0.0
        %v853 = vmax.f32 %v631, 0.0
        %v854 = vmax.f32 %v636, 0.0
        %v855 = vmax.f32 %v639, 0.0
        %v856 = vmax.f32 %v644, 0.0
        %v857 = vmax.f32 %v647, 0.0
        %v858 = vmax.f32 %v652, 0.0
        %v859 = vmax.f32 %v655, 0.0
        %v860 = vmax.f32 %v660, 0.0
        %v861 = vmax.f32 %v663, 0.0
        %v862 = vmax.f32 %v668, 0.0
        %v863 = vmax.f32 %v671, 0.0
        %v864 = vmax.f32 %v676, 0.0
        %v865 = vmax.f32 %v679, 0.0
        %v866 = vmax.f32 %v684, 0.0
        %v867 = vmax.f32 %v687, 0.0
        %v868 = vmax.f32 %v692, 0.0
        %v869 = vmax.f32 %v695, 0.0
        %v870 = vmax.f32 %v700, 0.0
        %v871 = vmax.f32 %v703, 0.0
        %v872 = vmax.f32 %v708, 0.0
        %v873 = vmax.f32 %v711, 0.0
        %v874 = vmax.f32 %v716, 0.0
        %v875 = vmax.f32 %v719, 0.0
        %v876 = vmax.f32 %v724, 0.0
        %v877 = vmax.f32 %v727, 0.0
        %v878 = vmax.f32 %v732, 0.0
        %v879 = vmax.f32 %v735, 0.0
        %v880 = vmax.f32 %v740, 0.0
        %v881 = vmax.f32 %v743, 0.0
        %v882 = vmax.f32 %v748, 0.0
        %v883 = vmax.f32 %v751, 0.0
        %v884 = vmax.f32 %v756, 0.0
        %v885 = vmax.f32 %v759, 0.0
        %v886 = vmax.f32 %v764, 0.0
        %v887 = vmax.f32 %v767, 0.0
        %v888 = vmax.f32 %v772, 0.0
        %v889 = vmax.f32 %v775, 0.0
        %v890 = vmax.f32 %v780, 0.0
        %v891 = vmax.f32 %v783, 0.0
        %v892 = vmax.f32 %v788, 0.0
        %v893 = vmax.f32 %v791, 0.0
        %v894 = vmax.f32 %v796, 0.0
        %v895 = vmax.f32 %v799, 0.0
        %v896 = vmax.f32 %v804, 0.0
        %v897 = vmax.f32 %v807, 0.0
        %v898 = vmax.f32 %v812, 0.0
        %v899 = vmax.f32 %v815, 0.0
        %v900 = vmax.f32 %v820, 0.0
        %v901 = vmax.f32 %v823, 0.0
        %v902 = vmax.f32 %v828, 0.0
        %v903 = vmax.f32 %v831, 0.0
        %v904 = vmax.f32 %v836, 0.0
        %v905 = vmax.f32 %v839, 0.0
        %vm906 = vcmask 261120
        %907 = vst.msk [vmem:[%s200] sm:$0xff] %vm906, %v842
        %908 = vst.msk [vmem:[%s200 + $0x8] sm:$0xff] %vm906, %v843
        %909 = vst.msk [vmem:[%s200 + $0x10] sm:$0xff] %vm906, %v844
        %910 = vst.msk [vmem:[%s200 + $0x18] sm:$0xff] %vm906, %v845
        %911 = vst.msk [vmem:[%s200 + $0x20] sm:$0xff] %vm906, %v846
        %912 = vst.msk [vmem:[%s200 + $0x28] sm:$0xff] %vm906, %v847
        %913 = vst.msk [vmem:[%s200 + $0x30] sm:$0xff] %vm906, %v848
        %914 = vst.msk [vmem:[%s200 + $0x38] sm:$0xff] %vm906, %v849
        %915 = vst.msk [vmem:[%s200 + $0x40] sm:$0xff] %vm906, %v850
        %916 = vst.msk [vmem:[%s200 + $0x48] sm:$0xff] %vm906, %v851
        %917 = vst.msk [vmem:[%s200 + $0x50] sm:$0xff] %vm906, %v852
        %918 = vst.msk [vmem:[%s200 + $0x58] sm:$0xff] %vm906, %v853
        %919 = vst.msk [vmem:[%s200 + $0x60] sm:$0xff] %vm906, %v854
        %920 = vst.msk [vmem:[%s200 + $0x68] sm:$0xff] %vm906, %v855
        %921 = vst.msk [vmem:[%s200 + $0x70] sm:$0xff] %vm906, %v856
        %922 = vst.msk [vmem:[%s200 + $0x78] sm:$0xff] %vm906, %v857
        %923 = vst.msk [vmem:[%s200 + $0x80] sm:$0xff] %vm906, %v858
        %924 = vst.msk [vmem:[%s200 + $0x88] sm:$0xff] %vm906, %v859
        %925 = vst.msk [vmem:[%s200 + $0x90] sm:$0xff] %vm906, %v860
        %926 = vst.msk [vmem:[%s200 + $0x98] sm:$0xff] %vm906, %v861
        %927 = vst.msk [vmem:[%s200 + $0xa0] sm:$0xff] %vm906, %v862
        %928 = vst.msk [vmem:[%s200 + $0xa8] sm:$0xff] %vm906, %v863
        %929 = vst.msk [vmem:[%s200 + $0xb0] sm:$0xff] %vm906, %v864
        %930 = vst.msk [vmem:[%s200 + $0xb8] sm:$0xff] %vm906, %v865
        %931 = vst.msk [vmem:[%s200 + $0xc0] sm:$0xff] %vm906, %v866
        %932 = vst.msk [vmem:[%s200 + $0xc8] sm:$0xff] %vm906, %v867
        %933 = vst.msk [vmem:[%s200 + $0xd0] sm:$0xff] %vm906, %v868
        %934 = vst.msk [vmem:[%s200 + $0xd8] sm:$0xff] %vm906, %v869
        %935 = vst.msk [vmem:[%s200 + $0xe0] sm:$0xff] %vm906, %v870
        %936 = vst.msk [vmem:[%s200 + $0xe8] sm:$0xff] %vm906, %v871
        %937 = vst.msk [vmem:[%s200 + $0xf0] sm:$0xff] %vm906, %v872
        %938 = vst.msk [vmem:[%s200 + $0xf8] sm:$0xff] %vm906, %v873
        %939 = vst.msk [vmem:[%s200 + $0x100] sm:$0xff] %vm906, %v874
        %940 = vst.msk [vmem:[%s200 + $0x108] sm:$0xff] %vm906, %v875
        %941 = vst.msk [vmem:[%s200 + $0x110] sm:$0xff] %vm906, %v876
        %942 = vst.msk [vmem:[%s200 + $0x118] sm:$0xff] %vm906, %v877
        %943 = vst.msk [vmem:[%s200 + $0x120] sm:$0xff] %vm906, %v878
        %944 = vst.msk [vmem:[%s200 + $0x128] sm:$0xff] %vm906, %v879
        %945 = vst.msk [vmem:[%s200 + $0x130] sm:$0xff] %vm906, %v880
        %946 = vst.msk [vmem:[%s200 + $0x138] sm:$0xff] %vm906, %v881
        %947 = vst.msk [vmem:[%s200 + $0x140] sm:$0xff] %vm906, %v882
        %948 = vst.msk [vmem:[%s200 + $0x148] sm:$0xff] %vm906, %v883
        %949 = vst.msk [vmem:[%s200 + $0x150] sm:$0xff] %vm906, %v884
        %950 = vst.msk [vmem:[%s200 + $0x158] sm:$0xff] %vm906, %v885
        %951 = vst.msk [vmem:[%s200 + $0x160] sm:$0xff] %vm906, %v886
        %952 = vst.msk [vmem:[%s200 + $0x168] sm:$0xff] %vm906, %v887
        %953 = vst.msk [vmem:[%s200 + $0x170] sm:$0xff] %vm906, %v888
        %954 = vst.msk [vmem:[%s200 + $0x178] sm:$0xff] %vm906, %v889
        %955 = vst.msk [vmem:[%s200 + $0x180] sm:$0xff] %vm906, %v890
        %956 = vst.msk [vmem:[%s200 + $0x188] sm:$0xff] %vm906, %v891
        %957 = vst.msk [vmem:[%s200 + $0x190] sm:$0xff] %vm906, %v892
        %958 = vst.msk [vmem:[%s200 + $0x198] sm:$0xff] %vm906, %v893
        %959 = vst.msk [vmem:[%s200 + $0x1a0] sm:$0xff] %vm906, %v894
        %960 = vst.msk [vmem:[%s200 + $0x1a8] sm:$0xff] %vm906, %v895
        %961 = vst.msk [vmem:[%s200 + $0x1b0] sm:$0xff] %vm906, %v896
        %962 = vst.msk [vmem:[%s200 + $0x1b8] sm:$0xff] %vm906, %v897
        %963 = vst.msk [vmem:[%s200 + $0x1c0] sm:$0xff] %vm906, %v898
        %964 = vst.msk [vmem:[%s200 + $0x1c8] sm:$0xff] %vm906, %v899
        %965 = vst.msk [vmem:[%s200 + $0x1d0] sm:$0xff] %vm906, %v900
        %966 = vst.msk [vmem:[%s200 + $0x1d8] sm:$0xff] %vm906, %v901
        %967 = vst.msk [vmem:[%s200 + $0x1e0] sm:$0xff] %vm906, %v902
        %968 = vst.msk [vmem:[%s200 + $0x1e8] sm:$0xff] %vm906, %v903
        %969 = vst.msk [vmem:[%s200 + $0x1f0] sm:$0xff] %vm906, %v904
        %970 = vst.msk [vmem:[%s200 + $0x1f8] sm:$0xff] %vm906, %v905
        %s971 = smul.u32 64, %s16
        %p972 = scmp.lt.s32.totalorder %s971, 255
        %s973 = scalar_select %p972, %s971, 255
        %s974 = smul.addr %s973, 8
        %s975 = scalar_lea.vmem %s3, %s974
        // Predicated region
        $region41: #{dueling_qnet_forward_pallas.4} parent=31 // pred_check
          %p976 = pneg %p102
        $region42: #{dueling_qnet_forward_pallas.4} parent=31 // pred_check_branch
          %978 = sbr.rel (%p976) target = $region44
        $region43: #{dueling_qnet_forward_pallas.4} parent=31 // pred_region
          %s979 = smul.u32 64, %s16
        $region44: #{dueling_qnet_forward_pallas.4} parent=31 // pred_fallthru
          _
      $region32: #{dueling_qnet_forward_pallas.4} parent=5 // pred_fallthru
        _
      %p980 = scmp.le.s32.totalorder 2, %s11
      // Predicated region
      $region45: #{dueling_qnet_forward_pallas.4} parent=5 // pred_check
        %p981 = pneg %p980
      $region46: #{dueling_qnet_forward_pallas.4} parent=5 // pred_check_branch
        %983 = sbr.rel (%p981) target = $region48
      $region47: #{dueling_qnet_forward_pallas.4} parent=5 // pred_region
        %s984 = ssub.s32 %s11, 2
        // Predicated region
        $region49: #{dueling_qnet_forward_pallas.4} parent=47 // pred_check
          %p985 = pneg %p108
        $region50: #{dueling_qnet_forward_pallas.4} parent=47 // pred_check_branch
          %987 = sbr.rel (%p985) target = $region52
        $region51: #{dueling_qnet_forward_pallas.4} parent=47 // pred_region
          %s988 = smul.u32 64, %s17
          %p989 = scmp.lt.s32.totalorder %s988, 255
          %s990 = scalar_select %p989, %s988, 255
          %s991 = smul.addr %s990, 8
          %s992 = scalar_lea.vmem %s3, %s991
        $region52: #{dueling_qnet_forward_pallas.4} parent=47 // pred_fallthru
          _
      $region48: #{dueling_qnet_forward_pallas.4} parent=5 // pred_fallthru
        _
    $region6: #{dueling_qnet_forward_pallas.4} parent=1 // loop_footer
      %s15 = sadd.s32 1, %s11
    $region7: #{dueling_qnet_forward_pallas.4} parent=1 // loop_footer_branch
      %10 = sbr.rel target = $region3
    $region8: #{dueling_qnet_forward_pallas.4} parent=1 // loop_exit
      _
    %993 = vsyncpa [#allocation3], 1
    %s994 = scalar_lea.sflag [#allocation3], 1
    %995 = vsyncpa %s994, 1
    %996 = vsyncpa [#allocation5], 1

// kernel: dueling_qnet_forward_pallas.5
$region0: #{dueling_qnet_forward_pallas.5}
  #allocation0 [shape = 'u32[]', space=smem, size = 0x4, offset = 0x4, fixed_abs, tag = 'smem constant byte address 0x4 - core index']
  #allocation1 [shape = 'u32[144,128]{1,0:T(1,128)}', space=vmem, size = 0x12000, scoped, tag = 'internal scratch']
  %s0 = inlined_call_operand.vmem [shape: bf16[512,288], index: 0, kind: input, shape index: {}]
  %s1 = inlined_call_operand.vmem [shape: bf16[288,64], index: 1, kind: input, shape index: {}]
  %s2 = inlined_call_operand.vmem [shape: f32[1,64], index: 2, kind: input, shape index: {}]
  %s3 = inlined_call_operand.vmem [shape: f32[512,64], index: 3, kind: output, shape index: {}]
  %s4 = sld [smem:[#allocation0]]
  $region22: #{dueling_qnet_forward_pallas.5} parent=0
    _
  %s6 = ssub.s32 1, %s4
  %s7 = scalar_select 0, %s6, %s4
  // Predicated region
  $region2: #{dueling_qnet_forward_pallas.5} parent=0 // pred_check
    _
  $region3: #{dueling_qnet_forward_pallas.5} parent=0 // pred_check_branch
    %9 = sbr.rel (0) target = $region5
  $region4: #{dueling_qnet_forward_pallas.5} parent=0 // pred_region
    _
  $region5: #{dueling_qnet_forward_pallas.5} parent=0 // pred_fallthru
    _
  // Predicated region
  $region6: #{dueling_qnet_forward_pallas.5} parent=0 // pred_check
    _
  $region7: #{dueling_qnet_forward_pallas.5} parent=0 // pred_check_branch
    %11 = sbr.rel (0) target = $region9
  $region8: #{dueling_qnet_forward_pallas.5} parent=0 // pred_region
    _
  $region9: #{dueling_qnet_forward_pallas.5} parent=0 // pred_fallthru
    _
  // Predicated region
  $region10: #{dueling_qnet_forward_pallas.5} parent=0 // pred_check
    _
  $region11: #{dueling_qnet_forward_pallas.5} parent=0 // pred_check_branch
    %13 = sbr.rel (0) target = $region13
  $region12: #{dueling_qnet_forward_pallas.5} parent=0 // pred_region
    _
  $region13: #{dueling_qnet_forward_pallas.5} parent=0 // pred_fallthru
    _
  %v15 = vld [vmem:[%s0] sm:$0xff]
  %v16 = vld [vmem:[%s0 + $0x8] sm:$0xf]
  %v17 = vld [vmem:[%s0 + $0xc] sm:$0xff]
  %v18 = vld [vmem:[%s0 + $0x14] sm:$0xf]
  %v19 = vld [vmem:[%s0 + $0x18] sm:$0xff]
  %v20 = vld [vmem:[%s0 + $0x20] sm:$0xf]
  %v21 = vld [vmem:[%s0 + $0x24] sm:$0xff]
  %v22 = vld [vmem:[%s0 + $0x2c] sm:$0xf]
  %v23 = vld [vmem:[%s0 + $0x30] sm:$0xff]
  %v24 = vld [vmem:[%s0 + $0x38] sm:$0xf]
  %v25 = vld [vmem:[%s0 + $0x3c] sm:$0xff]
  %v26 = vld [vmem:[%s0 + $0x44] sm:$0xf]
  %v27 = vld [vmem:[%s0 + $0x48] sm:$0xff]
  %v28 = vld [vmem:[%s0 + $0x50] sm:$0xf]
  %v29 = vld [vmem:[%s0 + $0x54] sm:$0xff]
  %v30 = vld [vmem:[%s0 + $0x5c] sm:$0xf]
  %v31 = vld [vmem:[%s0 + $0x60] sm:$0xff]
  %v32 = vld [vmem:[%s0 + $0x68] sm:$0xf]
  %v33 = vld [vmem:[%s0 + $0x6c] sm:$0xff]
  %v34 = vld [vmem:[%s0 + $0x74] sm:$0xf]
  %v35 = vld [vmem:[%s0 + $0x78] sm:$0xff]
  %v36 = vld [vmem:[%s0 + $0x80] sm:$0xf]
  %v37 = vld [vmem:[%s0 + $0x84] sm:$0xff]
  %v38 = vld [vmem:[%s0 + $0x8c] sm:$0xf]
  %v39 = vld [vmem:[%s0 + $0x90] sm:$0xff]
  %v40 = vld [vmem:[%s0 + $0x98] sm:$0xf]
  %v41 = vld [vmem:[%s0 + $0x9c] sm:$0xff]
  %v42 = vld [vmem:[%s0 + $0xa4] sm:$0xf]
  %v43 = vld [vmem:[%s0 + $0xa8] sm:$0xff]
  %v44 = vld [vmem:[%s0 + $0xb0] sm:$0xf]
  %v45 = vld [vmem:[%s0 + $0xb4] sm:$0xff]
  %v46 = vld [vmem:[%s0 + $0xbc] sm:$0xf]
  %v47 = vld [vmem:[%s0 + $0xc0] sm:$0xff]
  %v48 = vld [vmem:[%s0 + $0xc8] sm:$0xf]
  %v49 = vld [vmem:[%s0 + $0xcc] sm:$0xff]
  %v50 = vld [vmem:[%s0 + $0xd4] sm:$0xf]
  %v51 = vld [vmem:[%s0 + $0xd8] sm:$0xff]
  %v52 = vld [vmem:[%s0 + $0xe0] sm:$0xf]
  %v53 = vld [vmem:[%s0 + $0xe4] sm:$0xff]
  %v54 = vld [vmem:[%s0 + $0xec] sm:$0xf]
  %v55 = vld [vmem:[%s0 + $0xf0] sm:$0xff]
  %v56 = vld [vmem:[%s0 + $0xf8] sm:$0xf]
  %v57 = vld [vmem:[%s0 + $0xfc] sm:$0xff]
  %v58 = vld [vmem:[%s0 + $0x104] sm:$0xf]
  %v59 = vld [vmem:[%s0 + $0x108] sm:$0xff]
  %v60 = vld [vmem:[%s0 + $0x110] sm:$0xf]
  %v61 = vld [vmem:[%s0 + $0x114] sm:$0xff]
  %v62 = vld [vmem:[%s0 + $0x11c] sm:$0xf]
  %v63 = vld [vmem:[%s0 + $0x120] sm:$0xff]
  %v64 = vld [vmem:[%s0 + $0x128] sm:$0xf]
  %v65 = vld [vmem:[%s0 + $0x12c] sm:$0xff]
  %v66 = vld [vmem:[%s0 + $0x134] sm:$0xf]
  %v67 = vld [vmem:[%s0 + $0x138] sm:$0xff]
  %v68 = vld [vmem:[%s0 + $0x140] sm:$0xf]
  %v69 = vld [vmem:[%s0 + $0x144] sm:$0xff]
  %v70 = vld [vmem:[%s0 + $0x14c] sm:$0xf]
  %v71 = vld [vmem:[%s0 + $0x150] sm:$0xff]
  %v72 = vld [vmem:[%s0 + $0x158] sm:$0xf]
  %v73 = vld [vmem:[%s0 + $0x15c] sm:$0xff]
  %v74 = vld [vmem:[%s0 + $0x164] sm:$0xf]
  %v75 = vld [vmem:[%s0 + $0x168] sm:$0xff]
  %v76 = vld [vmem:[%s0 + $0x170] sm:$0xf]
  %v77 = vld [vmem:[%s0 + $0x174] sm:$0xff]
  %v78 = vld [vmem:[%s0 + $0x17c] sm:$0xf]
  %v79 = vld [vmem:[%s0 + $0x180] sm:$0xff]
  %v80 = vld [vmem:[%s0 + $0x188] sm:$0xf]
  %v81 = vld [vmem:[%s0 + $0x18c] sm:$0xff]
  %v82 = vld [vmem:[%s0 + $0x194] sm:$0xf]
  %v83 = vld [vmem:[%s0 + $0x198] sm:$0xff]
  %v84 = vld [vmem:[%s0 + $0x1a0] sm:$0xf]
  %v85 = vld [vmem:[%s0 + $0x1a4] sm:$0xff]
  %v86 = vld [vmem:[%s0 + $0x1ac] sm:$0xf]
  %v87 = vld [vmem:[%s0 + $0x1b0] sm:$0xff]
  %v88 = vld [vmem:[%s0 + $0x1b8] sm:$0xf]
  %v89 = vld [vmem:[%s0 + $0x1bc] sm:$0xff]
  %v90 = vld [vmem:[%s0 + $0x1c4] sm:$0xf]
  %v91 = vld [vmem:[%s0 + $0x1c8] sm:$0xff]
  %v92 = vld [vmem:[%s0 + $0x1d0] sm:$0xf]
  %v93 = vld [vmem:[%s0 + $0x1d4] sm:$0xff]
  %v94 = vld [vmem:[%s0 + $0x1dc] sm:$0xf]
  %v95 = vld [vmem:[%s0 + $0x1e0] sm:$0xff]
  %v96 = vld [vmem:[%s0 + $0x1e8] sm:$0xf]
  %v97 = vld [vmem:[%s0 + $0x1ec] sm:$0xff]
  %v98 = vld [vmem:[%s0 + $0x1f4] sm:$0xf]
  %v99 = vld [vmem:[%s0 + $0x1f8] sm:$0xff]
  %v100 = vld [vmem:[%s0 + $0x200] sm:$0xf]
  %v101 = vld [vmem:[%s0 + $0x204] sm:$0xff]
  %v102 = vld [vmem:[%s0 + $0x20c] sm:$0xf]
  %v103 = vld [vmem:[%s0 + $0x210] sm:$0xff]
  %v104 = vld [vmem:[%s0 + $0x218] sm:$0xf]
  %v105 = vld [vmem:[%s0 + $0x21c] sm:$0xff]
  %v106 = vld [vmem:[%s0 + $0x224] sm:$0xf]
  %v107 = vld [vmem:[%s0 + $0x228] sm:$0xff]
  %v108 = vld [vmem:[%s0 + $0x230] sm:$0xf]
  %v109 = vld [vmem:[%s0 + $0x234] sm:$0xff]
  %v110 = vld [vmem:[%s0 + $0x23c] sm:$0xf]
  %v111 = vld [vmem:[%s0 + $0x240] sm:$0xff]
  %v112 = vld [vmem:[%s0 + $0x248] sm:$0xf]
  %v113 = vld [vmem:[%s0 + $0x24c] sm:$0xff]
  %v114 = vld [vmem:[%s0 + $0x254] sm:$0xf]
  %v115 = vld [vmem:[%s0 + $0x258] sm:$0xff]
  %v116 = vld [vmem:[%s0 + $0x260] sm:$0xf]
  %v117 = vld [vmem:[%s0 + $0x264] sm:$0xff]
  %v118 = vld [vmem:[%s0 + $0x26c] sm:$0xf]
  %v119 = vld [vmem:[%s0 + $0x270] sm:$0xff]
  %v120 = vld [vmem:[%s0 + $0x278] sm:$0xf]
  %v121 = vld [vmem:[%s0 + $0x27c] sm:$0xff]
  %v122 = vld [vmem:[%s0 + $0x284] sm:$0xf]
  %v123 = vld [vmem:[%s0 + $0x288] sm:$0xff]
  %v124 = vld [vmem:[%s0 + $0x290] sm:$0xf]
  %v125 = vld [vmem:[%s0 + $0x294] sm:$0xff]
  %v126 = vld [vmem:[%s0 + $0x29c] sm:$0xf]
  %v127 = vld [vmem:[%s0 + $0x2a0] sm:$0xff]
  %v128 = vld [vmem:[%s0 + $0x2a8] sm:$0xf]
  %v129 = vld [vmem:[%s0 + $0x2ac] sm:$0xff]
  %v130 = vld [vmem:[%s0 + $0x2b4] sm:$0xf]
  %v131 = vld [vmem:[%s0 + $0x2b8] sm:$0xff]
  %v132 = vld [vmem:[%s0 + $0x2c0] sm:$0xf]
  %v133 = vld [vmem:[%s0 + $0x2c4] sm:$0xff]
  %v134 = vld [vmem:[%s0 + $0x2cc] sm:$0xf]
  %v135 = vld [vmem:[%s0 + $0x2d0] sm:$0xff]
  %v136 = vld [vmem:[%s0 + $0x2d8] sm:$0xf]
  %v137 = vld [vmem:[%s0 + $0x2dc] sm:$0xff]
  %v138 = vld [vmem:[%s0 + $0x2e4] sm:$0xf]
  %v139 = vld [vmem:[%s0 + $0x2e8] sm:$0xff]
  %v140 = vld [vmem:[%s0 + $0x2f0] sm:$0xf]
  %v141 = vld [vmem:[%s0 + $0x2f4] sm:$0xff]
  %v142 = vld [vmem:[%s0 + $0x2fc] sm:$0xf]
  %v143 = vld [vmem:[%s1] sm:$0xf]
  %v144 = vld [vmem:[%s1 + $0x4] sm:$0xf]
  %v145 = vld [vmem:[%s1 + $0x8] sm:$0xf]
  %v146 = vld [vmem:[%s1 + $0xc] sm:$0xf]
  %v147 = vld [vmem:[%s1 + $0x10] sm:$0xf]
  %v148 = vld [vmem:[%s1 + $0x14] sm:$0xf]
  %v149 = vld [vmem:[%s1 + $0x18] sm:$0xf]
  %v150 = vld [vmem:[%s1 + $0x1c] sm:$0xf]
  %v151 = vld [vmem:[%s1 + $0x20] sm:$0xf]
  %v152 = vld [vmem:[%s1 + $0x24] sm:$0xf]
  %v153 = vld [vmem:[%s1 + $0x28] sm:$0xf]
  %v154 = vld [vmem:[%s1 + $0x2c] sm:$0xf]
  %v155 = vld [vmem:[%s1 + $0x30] sm:$0xf]
  %v156 = vld [vmem:[%s1 + $0x34] sm:$0xf]
  %v157 = vld [vmem:[%s1 + $0x38] sm:$0xf]
  %v158 = vld [vmem:[%s1 + $0x3c] sm:$0xf]
  %v159 = vld [vmem:[%s1 + $0x40] sm:$0xf]
  %v160 = vld [vmem:[%s1 + $0x44] sm:$0xf]
  %v161 = vld [vmem:[%s1 + $0x48] sm:$0xf]
  %v162 = vld [vmem:[%s1 + $0x4c] sm:$0xf]
  %v163 = vld [vmem:[%s1 + $0x50] sm:$0xf]
  %v164 = vld [vmem:[%s1 + $0x54] sm:$0xf]
  %v165 = vld [vmem:[%s1 + $0x58] sm:$0xf]
  %v166 = vld [vmem:[%s1 + $0x5c] sm:$0xf]
  %v167 = vld [vmem:[%s1 + $0x60] sm:$0xf]
  %v168 = vld [vmem:[%s1 + $0x64] sm:$0xf]
  %v169 = vld [vmem:[%s1 + $0x68] sm:$0xf]
  %v170 = vld [vmem:[%s1 + $0x6c] sm:$0xf]
  %v171 = vld [vmem:[%s1 + $0x70] sm:$0xf]
  %v172 = vld [vmem:[%s1 + $0x74] sm:$0xf]
  %v173 = vld [vmem:[%s1 + $0x78] sm:$0xf]
  %v174 = vld [vmem:[%s1 + $0x7c] sm:$0xf]
  %v175 = vld [vmem:[%s1 + $0x80] sm:$0xf]
  %v176 = vld [vmem:[%s1 + $0x84] sm:$0xf]
  %v177 = vld [vmem:[%s1 + $0x88] sm:$0xf]
  %v178 = vld [vmem:[%s1 + $0x8c] sm:$0xf]
  %v179 = vld [vmem:[%s2] sm:$0x1]
  %v181 = vlaneseq
  %v182 = vshrl.u32 %v181, 7
  %v183 = vsub.s32 0, %v182
  %v184 = vrot.slane %v179, %v183
  %v314 = vunpack.c.l.b16 %v15
  %v315 = vunpack.c.h.b16 %v15
  %v316 = vunpack.c.l.b16 %v16
  %v317 = vunpack.c.l.b16 %v17
  %v318 = vunpack.c.h.b16 %v17
  %v319 = vunpack.c.l.b16 %v18
  %v320 = vunpack.c.l.b16 %v19
  %v321 = vunpack.c.h.b16 %v19
  %v322 = vunpack.c.l.b16 %v20
  %v323 = vunpack.c.l.b16 %v21
  %v324 = vunpack.c.h.b16 %v21
  %v325 = vunpack.c.l.b16 %v22
  %v326 = vunpack.c.l.b16 %v23
  %v327 = vunpack.c.h.b16 %v23
  %v328 = vunpack.c.l.b16 %v24
  %v329 = vunpack.c.l.b16 %v25
  %v330 = vunpack.c.h.b16 %v25
  %v331 = vunpack.c.l.b16 %v26
  %v332 = vunpack.c.l.b16 %v27
  %v333 = vunpack.c.h.b16 %v27
  %v334 = vunpack.c.l.b16 %v28
  %v335 = vunpack.c.l.b16 %v29
  %v336 = vunpack.c.h.b16 %v29
  %v337 = vunpack.c.l.b16 %v30
  %v338 = vunpack.c.l.b16 %v31
  %v339 = vunpack.c.h.b16 %v31
  %v340 = vunpack.c.l.b16 %v32
  %v341 = vunpack.c.l.b16 %v33
  %v342 = vunpack.c.h.b16 %v33
  %v343 = vunpack.c.l.b16 %v34
  %v344 = vunpack.c.l.b16 %v35
  %v345 = vunpack.c.h.b16 %v35
  %v346 = vunpack.c.l.b16 %v36
  %v347 = vunpack.c.l.b16 %v37
  %v348 = vunpack.c.h.b16 %v37
  %v349 = vunpack.c.l.b16 %v38
  %v350 = vunpack.c.l.b16 %v39
  %v351 = vunpack.c.h.b16 %v39
  %v352 = vunpack.c.l.b16 %v40
  %v353 = vunpack.c.l.b16 %v41
  %v354 = vunpack.c.h.b16 %v41
  %v355 = vunpack.c.l.b16 %v42
  %v356 = vunpack.c.l.b16 %v43
  %v357 = vunpack.c.h.b16 %v43
  %v358 = vunpack.c.l.b16 %v44
  %v359 = vunpack.c.l.b16 %v45
  %v360 = vunpack.c.h.b16 %v45
  %v361 = vunpack.c.l.b16 %v46
  %v362 = vunpack.c.l.b16 %v47
  %v363 = vunpack.c.h.b16 %v47
  %v364 = vunpack.c.l.b16 %v48
  %v365 = vunpack.c.l.b16 %v49
  %v366 = vunpack.c.h.b16 %v49
  %v367 = vunpack.c.l.b16 %v50
  %v368 = vunpack.c.l.b16 %v51
  %v369 = vunpack.c.h.b16 %v51
  %v370 = vunpack.c.l.b16 %v52
  %v371 = vunpack.c.l.b16 %v53
  %v372 = vunpack.c.h.b16 %v53
  %v373 = vunpack.c.l.b16 %v54
  %v374 = vunpack.c.l.b16 %v55
  %v375 = vunpack.c.h.b16 %v55
  %v376 = vunpack.c.l.b16 %v56
  %v377 = vunpack.c.l.b16 %v57
  %v378 = vunpack.c.h.b16 %v57
  %v379 = vunpack.c.l.b16 %v58
  %v380 = vunpack.c.l.b16 %v59
  %v381 = vunpack.c.h.b16 %v59
  %v382 = vunpack.c.l.b16 %v60
  %v383 = vunpack.c.l.b16 %v61
  %v384 = vunpack.c.h.b16 %v61
  %v385 = vunpack.c.l.b16 %v62
  %v386 = vunpack.c.l.b16 %v63
  %v387 = vunpack.c.h.b16 %v63
  %v388 = vunpack.c.l.b16 %v64
  %v389 = vunpack.c.l.b16 %v65
  %v390 = vunpack.c.h.b16 %v65
  %v391 = vunpack.c.l.b16 %v66
  %v392 = vunpack.c.l.b16 %v67
  %v393 = vunpack.c.h.b16 %v67
  %v394 = vunpack.c.l.b16 %v68
  %v395 = vunpack.c.l.b16 %v69
  %v396 = vunpack.c.h.b16 %v69
  %v397 = vunpack.c.l.b16 %v70
  %v398 = vunpack.c.l.b16 %v71
  %v399 = vunpack.c.h.b16 %v71
  %v400 = vunpack.c.l.b16 %v72
  %v401 = vunpack.c.l.b16 %v73
  %v402 = vunpack.c.h.b16 %v73
  %v403 = vunpack.c.l.b16 %v74
  %v404 = vunpack.c.l.b16 %v75
  %v405 = vunpack.c.h.b16 %v75
  %v406 = vunpack.c.l.b16 %v76
  %v407 = vunpack.c.l.b16 %v77
  %v408 = vunpack.c.h.b16 %v77
  %v409 = vunpack.c.l.b16 %v78
  %v410 = vunpack.c.l.b16 %v79
  %v411 = vunpack.c.h.b16 %v79
  %v412 = vunpack.c.l.b16 %v80
  %v413 = vunpack.c.l.b16 %v81
  %v414 = vunpack.c.h.b16 %v81
  %v415 = vunpack.c.l.b16 %v82
  %v416 = vunpack.c.l.b16 %v83
  %v417 = vunpack.c.h.b16 %v83
  %v418 = vunpack.c.l.b16 %v84
  %v419 = vunpack.c.l.b16 %v85
  %v420 = vunpack.c.h.b16 %v85
  %v421 = vunpack.c.l.b16 %v86
  %v422 = vunpack.c.l.b16 %v87
  %v423 = vunpack.c.h.b16 %v87
  %v424 = vunpack.c.l.b16 %v88
  %v425 = vunpack.c.l.b16 %v89
  %v426 = vunpack.c.h.b16 %v89
  %v427 = vunpack.c.l.b16 %v90
  %v428 = vunpack.c.l.b16 %v91
  %v429 = vunpack.c.h.b16 %v91
  %v430 = vunpack.c.l.b16 %v92
  %v431 = vunpack.c.l.b16 %v93
  %v432 = vunpack.c.h.b16 %v93
  %v433 = vunpack.c.l.b16 %v94
  %v434 = vunpack.c.l.b16 %v95
  %v435 = vunpack.c.h.b16 %v95
  %v436 = vunpack.c.l.b16 %v96
  %v437 = vunpack.c.l.b16 %v97
  %v438 = vunpack.c.h.b16 %v97
  %v439 = vunpack.c.l.b16 %v98
  %v440 = vunpack.c.l.b16 %v99
  %v441 = vunpack.c.h.b16 %v99
  %v442 = vunpack.c.l.b16 %v100
  %v443 = vunpack.c.l.b16 %v101
  %v444 = vunpack.c.h.b16 %v101
  %v445 = vunpack.c.l.b16 %v102
  %v446 = vunpack.c.l.b16 %v103
  %v447 = vunpack.c.h.b16 %v103
  %v448 = vunpack.c.l.b16 %v104
  %v449 = vunpack.c.l.b16 %v105
  %v450 = vunpack.c.h.b16 %v105
  %v451 = vunpack.c.l.b16 %v106
  %v452 = vunpack.c.l.b16 %v107
  %v453 = vunpack.c.h.b16 %v107
  %v454 = vunpack.c.l.b16 %v108
  %v455 = vunpack.c.l.b16 %v109
  %v456 = vunpack.c.h.b16 %v109
  %v457 = vunpack.c.l.b16 %v110
  %v458 = vunpack.c.l.b16 %v111
  %v459 = vunpack.c.h.b16 %v111
  %v460 = vunpack.c.l.b16 %v112
  %v461 = vunpack.c.l.b16 %v113
  %v462 = vunpack.c.h.b16 %v113
  %v463 = vunpack.c.l.b16 %v114
  %v464 = vunpack.c.l.b16 %v115
  %v465 = vunpack.c.h.b16 %v115
  %v466 = vunpack.c.l.b16 %v116
  %v467 = vunpack.c.l.b16 %v117
  %v468 = vunpack.c.h.b16 %v117
  %v469 = vunpack.c.l.b16 %v118
  %v470 = vunpack.c.l.b16 %v119
  %v471 = vunpack.c.h.b16 %v119
  %v472 = vunpack.c.l.b16 %v120
  %v473 = vunpack.c.l.b16 %v121
  %v474 = vunpack.c.h.b16 %v121
  %v475 = vunpack.c.l.b16 %v122
  %v476 = vunpack.c.l.b16 %v123
  %v477 = vunpack.c.h.b16 %v123
  %v478 = vunpack.c.l.b16 %v124
  %v479 = vunpack.c.l.b16 %v125
  %v480 = vunpack.c.h.b16 %v125
  %v481 = vunpack.c.l.b16 %v126
  %v482 = vunpack.c.l.b16 %v127
  %v483 = vunpack.c.h.b16 %v127
  %v484 = vunpack.c.l.b16 %v128
  %v485 = vunpack.c.l.b16 %v129
  %v486 = vunpack.c.h.b16 %v129
  %v487 = vunpack.c.l.b16 %v130
  %v488 = vunpack.c.l.b16 %v131
  %v489 = vunpack.c.h.b16 %v131
  %v490 = vunpack.c.l.b16 %v132
  %v491 = vunpack.c.l.b16 %v133
  %v492 = vunpack.c.h.b16 %v133
  %v493 = vunpack.c.l.b16 %v134
  %v494 = vunpack.c.l.b16 %v135
  %v495 = vunpack.c.h.b16 %v135
  %v496 = vunpack.c.l.b16 %v136
  %v497 = vunpack.c.l.b16 %v137
  %v498 = vunpack.c.h.b16 %v137
  %v499 = vunpack.c.l.b16 %v138
  %v500 = vunpack.c.l.b16 %v139
  %v501 = vunpack.c.h.b16 %v139
  %v502 = vunpack.c.l.b16 %v140
  %v503 = vunpack.c.l.b16 %v141
  %v504 = vunpack.c.h.b16 %v141
  %v505 = vunpack.c.l.b16 %v142
  %v506 = vpack.c.b16 %v317, %v314
  %v507 = vpack.c.b16 %v318, %v315
  %v508 = vpack.c.b16 %v319, %v316
  %v509 = vpack.c.b16 %v323, %v320
  %v510 = vpack.c.b16 %v324, %v321
  %v511 = vpack.c.b16 %v325, %v322
  %v512 = vpack.c.b16 %v329, %v326
  %v513 = vpack.c.b16 %v330, %v327
  %v514 = vpack.c.b16 %v331, %v328
  %v515 = vpack.c.b16 %v335, %v332
  %v516 = vpack.c.b16 %v336, %v333
  %v517 = vpack.c.b16 %v337, %v334
  %v518 = vpack.c.b16 %v341, %v338
  %v519 = vpack.c.b16 %v342, %v339
  %v520 = vpack.c.b16 %v343, %v340
  %v521 = vpack.c.b16 %v347, %v344
  %v522 = vpack.c.b16 %v348, %v345
  %v523 = vpack.c.b16 %v349, %v346
  %v524 = vpack.c.b16 %v353, %v350
  %v525 = vpack.c.b16 %v354, %v351
  %v526 = vpack.c.b16 %v355, %v352
  %v527 = vpack.c.b16 %v359, %v356
  %v528 = vpack.c.b16 %v360, %v357
  %v529 = vpack.c.b16 %v361, %v358
  %v530 = vpack.c.b16 %v365, %v362
  %v531 = vpack.c.b16 %v366, %v363
  %v532 = vpack.c.b16 %v367, %v364
  %v533 = vpack.c.b16 %v371, %v368
  %v534 = vpack.c.b16 %v372, %v369
  %v535 = vpack.c.b16 %v373, %v370
  %v536 = vpack.c.b16 %v377, %v374
  %v537 = vpack.c.b16 %v378, %v375
  %v538 = vpack.c.b16 %v379, %v376
  %v539 = vpack.c.b16 %v383, %v380
  %v540 = vpack.c.b16 %v384, %v381
  %v541 = vpack.c.b16 %v385, %v382
  %v542 = vpack.c.b16 %v389, %v386
  %v543 = vpack.c.b16 %v390, %v387
  %v544 = vpack.c.b16 %v391, %v388
  %v545 = vpack.c.b16 %v395, %v392
  %v546 = vpack.c.b16 %v396, %v393
  %v547 = vpack.c.b16 %v397, %v394
  %v548 = vpack.c.b16 %v401, %v398
  %v549 = vpack.c.b16 %v402, %v399
  %v550 = vpack.c.b16 %v403, %v400
  %v551 = vpack.c.b16 %v407, %v404
  %v552 = vpack.c.b16 %v408, %v405
  %v553 = vpack.c.b16 %v409, %v406
  %v554 = vpack.c.b16 %v413, %v410
  %v555 = vpack.c.b16 %v414, %v411
  %v556 = vpack.c.b16 %v415, %v412
  %v557 = vpack.c.b16 %v419, %v416
  %v558 = vpack.c.b16 %v420, %v417
  %v559 = vpack.c.b16 %v421, %v418
  %v560 = vpack.c.b16 %v425, %v422
  %v561 = vpack.c.b16 %v426, %v423
  %v562 = vpack.c.b16 %v427, %v424
  %v563 = vpack.c.b16 %v431, %v428
  %v564 = vpack.c.b16 %v432, %v429
  %v565 = vpack.c.b16 %v433, %v430
  %v566 = vpack.c.b16 %v437, %v434
  %v567 = vpack.c.b16 %v438, %v435
  %v568 = vpack.c.b16 %v439, %v436
  %v569 = vpack.c.b16 %v443, %v440
  %v570 = vpack.c.b16 %v444, %v441
  %v571 = vpack.c.b16 %v445, %v442
  %v572 = vpack.c.b16 %v449, %v446
  %v573 = vpack.c.b16 %v450, %v447
  %v574 = vpack.c.b16 %v451, %v448
  %v575 = vpack.c.b16 %v455, %v452
  %v576 = vpack.c.b16 %v456, %v453
  %v577 = vpack.c.b16 %v457, %v454
  %v578 = vpack.c.b16 %v461, %v458
  %v579 = vpack.c.b16 %v462, %v459
  %v580 = vpack.c.b16 %v463, %v460
  %v581 = vpack.c.b16 %v467, %v464
  %v582 = vpack.c.b16 %v468, %v465
  %v583 = vpack.c.b16 %v469, %v466
  %v584 = vpack.c.b16 %v473, %v470
  %v585 = vpack.c.b16 %v474, %v471
  %v586 = vpack.c.b16 %v475, %v472
  %v587 = vpack.c.b16 %v479, %v476
  %v588 = vpack.c.b16 %v480, %v477
  %v589 = vpack.c.b16 %v481, %v478
  %v590 = vpack.c.b16 %v485, %v482
  %v591 = vpack.c.b16 %v486, %v483
  %v592 = vpack.c.b16 %v487, %v484
  %v593 = vpack.c.b16 %v491, %v488
  %v594 = vpack.c.b16 %v492, %v489
  %v595 = vpack.c.b16 %v493, %v490
  %v596 = vpack.c.b16 %v497, %v494
  %v597 = vpack.c.b16 %v498, %v495
  %v598 = vpack.c.b16 %v499, %v496
  %v599 = vpack.c.b16 %v503, %v500
  %v600 = vpack.c.b16 %v504, %v501
  %v601 = vpack.c.b16 %v505, %v502
  %v702 = vunpack.c.l.b16 %v143
  %v703 = vunpack.c.l.b16 %v144
  %v704 = vunpack.c.l.b16 %v145
  %v705 = vunpack.c.l.b16 %v146
  %v706 = vunpack.c.l.b16 %v147
  %v707 = vunpack.c.l.b16 %v148
  %v708 = vunpack.c.l.b16 %v149
  %v709 = vunpack.c.l.b16 %v150
  %v710 = vunpack.c.l.b16 %v151
  %v711 = vunpack.c.l.b16 %v152
  %v712 = vunpack.c.l.b16 %v153
  %v713 = vunpack.c.l.b16 %v154
  %v714 = vunpack.c.l.b16 %v155
  %v715 = vunpack.c.l.b16 %v156
  %v716 = vunpack.c.l.b16 %v157
  %v717 = vunpack.c.l.b16 %v158
  %v718 = vunpack.c.l.b16 %v159
  %v719 = vunpack.c.l.b16 %v160
  %v720 = vunpack.c.l.b16 %v161
  %v721 = vunpack.c.l.b16 %v162
  %v722 = vunpack.c.l.b16 %v163
  %v723 = vunpack.c.l.b16 %v164
  %v724 = vunpack.c.l.b16 %v165
  %v725 = vunpack.c.l.b16 %v166
  %v726 = vunpack.c.l.b16 %v167
  %v727 = vunpack.c.l.b16 %v168
  %v728 = vunpack.c.l.b16 %v169
  %v729 = vunpack.c.l.b16 %v170
  %v730 = vunpack.c.l.b16 %v171
  %v731 = vunpack.c.l.b16 %v172
  %v732 = vunpack.c.l.b16 %v173
  %v733 = vunpack.c.l.b16 %v174
  %v734 = vunpack.c.l.b16 %v175
  %v735 = vunpack.c.l.b16 %v176
  %v736 = vunpack.c.l.b16 %v177
  %v737 = vunpack.c.l.b16 %v178
  %v738 = vpack.c.b16 %v703, %v702
  %v739 = vpack.c.b16 %v705, %v704
  %v740 = vpack.c.b16 %v707, %v706
  %v741 = vpack.c.b16 %v709, %v708
  %v742 = vpack.c.b16 %v711, %v710
  %v743 = vpack.c.b16 %v713, %v712
  %v744 = vpack.c.b16 %v715, %v714
  %v745 = vpack.c.b16 %v717, %v716
  %v746 = vpack.c.b16 %v719, %v718
  %v747 = vpack.c.b16 %v721, %v720
  %v748 = vpack.c.b16 %v723, %v722
  %v749 = vpack.c.b16 %v725, %v724
  %v750 = vpack.c.b16 %v727, %v726
  %v751 = vpack.c.b16 %v729, %v728
  %v752 = vpack.c.b16 %v731, %v730
  %v753 = vpack.c.b16 %v733, %v732
  %v754 = vpack.c.b16 %v735, %v734
  %v755 = vpack.c.b16 %v737, %v736
  %vm774 = vcmask 261120
  %v776 = vsel %vm774, %v508, 0
  %v779 = vsel %vm774, %v511, 0
  %v782 = vsel %vm774, %v514, 0
  %v785 = vsel %vm774, %v517, 0
  %v788 = vsel %vm774, %v520, 0
  %v791 = vsel %vm774, %v523, 0
  %v794 = vsel %vm774, %v526, 0
  %v797 = vsel %vm774, %v529, 0
  %v800 = vsel %vm774, %v532, 0
  %v803 = vsel %vm774, %v535, 0
  %v806 = vsel %vm774, %v538, 0
  %v809 = vsel %vm774, %v541, 0
  %v812 = vsel %vm774, %v544, 0
  %v815 = vsel %vm774, %v547, 0
  %v818 = vsel %vm774, %v550, 0
  %v821 = vsel %vm774, %v553, 0
  %v824 = vsel %vm774, %v556, 0
  %v827 = vsel %vm774, %v559, 0
  %v830 = vsel %vm774, %v562, 0
  %v833 = vsel %vm774, %v565, 0
  %v836 = vsel %vm774, %v568, 0
  %v839 = vsel %vm774, %v571, 0
  %v842 = vsel %vm774, %v574, 0
  %v845 = vsel %vm774, %v577, 0
  %v848 = vsel %vm774, %v580, 0
  %v851 = vsel %vm774, %v583, 0
  %v854 = vsel %vm774, %v586, 0
  %v857 = vsel %vm774, %v589, 0
  %v860 = vsel %vm774, %v592, 0
  %v863 = vsel %vm774, %v595, 0
  %v866 = vsel %vm774, %v598, 0
  %v869 = vsel %vm774, %v601, 0
  %871 = vmatprep.subr.bf16.mxu0 0
  %872 = vmatpush1.bf16.msra.mxu0 %v745
  %873 = vmatprep.subr.bf16.mxu0 0
  %874 = vmatpush1.bf16.msra.mxu0 %v744
  %875 = vmatprep.subr.bf16.mxu0 0
  %876 = vmatpush1.bf16.msra.mxu0 %v743
  %877 = vmatprep.subr.bf16.mxu0 0
  %878 = vmatpush1.bf16.msra.mxu0 %v742
  %879 = vmatprep.subr.bf16.mxu0 0
  %880 = vmatpush1.bf16.msra.mxu0 %v741
  %881 = vmatprep.subr.bf16.mxu0 0
  %882 = vmatpush1.bf16.msra.mxu0 %v740
  %883 = vmatprep.subr.bf16.mxu0 0
  %884 = vmatpush1.bf16.msra.mxu0 %v739
  %885 = vmatprep.subr.bf16.mxu0 0
  %886 = vmatpush1.bf16.msra.mxu0 %v738
  %887 = vmatprep.subr.bf16.mxu0 0
  %888 = vmatpush2.bf16.msra.mxu0 %v753
  %889 = vmatprep.subr.bf16.mxu0 0
  %890 = vmatpush2.bf16.msra.mxu0 %v752
  %891 = vmatprep.subr.bf16.mxu0 0
  %892 = vmatpush2.bf16.msra.mxu0 %v751
  %893 = vmatprep.subr.bf16.mxu0 0
  %894 = vmatpush2.bf16.msra.mxu0 %v750
  %895 = vmatprep.subr.bf16.mxu0 0
  %896 = vmatpush2.bf16.msra.mxu0 %v749
  %897 = vmatprep.subr.bf16.mxu0 0
  %898 = vmatpush2.bf16.msra.mxu0 %v748
  %899 = vmatprep.subr.bf16.mxu0 0
  %900 = vmatpush2.bf16.msra.mxu0 %v747
  %901 = vmatprep.subr.bf16.mxu0 0
  %902 = vmatpush2.bf16.msra.mxu0 %v746
  %903 = vmatprep.mubr.bf16.mxu0 %v507
  %904 = vmatmul.mubr.bf16.gmra.mxu0 %v506
  %v905 = vpop.f32.mrf.mxu0
  %v906 = vadd.f32 %v184, %v905
  %v907 = vpop.f32.mrf.mxu0
  %v908 = vpop.f32.mrf.mxu0
  %v909 = vadd.f32 %v184, %v908
  %v910 = vpop.f32.mrf.mxu0
  %911 = vmatprep.mubr.bf16.mxu0 %v510
  %912 = vmatmul.mubr.bf16.gmra.mxu0 %v509
  %v913 = vpop.f32.mrf.mxu0
  %v914 = vadd.f32 %v184, %v913
  %v915 = vpop.f32.mrf.mxu0
  %v916 = vpop.f32.mrf.mxu0
  %v917 = vadd.f32 %v184, %v916
  %v918 = vpop.f32.mrf.mxu0
  %919 = vmatprep.mubr.bf16.mxu0 %v513
  %920 = vmatmul.mubr.bf16.gmra.mxu0 %v512
  %v921 = vpop.f32.mrf.mxu0
  %v922 = vadd.f32 %v184, %v921
  %v923 = vpop.f32.mrf.mxu0
  %v924 = vpop.f32.mrf.mxu0
  %v925 = vadd.f32 %v184, %v924
  %v926 = vpop.f32.mrf.mxu0
  %927 = vmatprep.mubr.bf16.mxu0 %v516
  %928 = vmatmul.mubr.bf16.gmra.mxu0 %v515
  %v929 = vpop.f32.mrf.mxu0
  %v930 = vadd.f32 %v184, %v929
  %v931 = vpop.f32.mrf.mxu0
  %v932 = vpop.f32.mrf.mxu0
  %v933 = vadd.f32 %v184, %v932
  %v934 = vpop.f32.mrf.mxu0
  %935 = vmatprep.mubr.bf16.mxu0 %v519
  %936 = vmatmul.mubr.bf16.gmra.mxu0 %v518
  %v937 = vpop.f32.mrf.mxu0
  %v938 = vadd.f32 %v184, %v937
  %v939 = vpop.f32.mrf.mxu0
  %v940 = vpop.f32.mrf.mxu0
  %v941 = vadd.f32 %v184, %v940
  %v942 = vpop.f32.mrf.mxu0
  %943 = vmatprep.mubr.bf16.mxu0 %v522
  %944 = vmatmul.mubr.bf16.gmra.mxu0 %v521
  %v945 = vpop.f32.mrf.mxu0
  %v946 = vadd.f32 %v184, %v945
  %v947 = vpop.f32.mrf.mxu0
  %v948 = vpop.f32.mrf.mxu0
  %v949 = vadd.f32 %v184, %v948
  %v950 = vpop.f32.mrf.mxu0
  %951 = vmatprep.mubr.bf16.mxu0 %v525
  %952 = vmatmul.mubr.bf16.gmra.mxu0 %v524
  %v953 = vpop.f32.mrf.mxu0
  %v954 = vadd.f32 %v184, %v953
  %v955 = vpop.f32.mrf.mxu0
  %v956 = vpop.f32.mrf.mxu0
  %v957 = vadd.f32 %v184, %v956
  %v958 = vpop.f32.mrf.mxu0
  %959 = vmatprep.mubr.bf16.mxu0 %v528
  %960 = vmatmul.mubr.bf16.gmra.mxu0 %v527
  %v961 = vpop.f32.mrf.mxu0
  %v962 = vadd.f32 %v184, %v961
  %v963 = vpop.f32.mrf.mxu0
  %v964 = vpop.f32.mrf.mxu0
  %v965 = vadd.f32 %v184, %v964
  %v966 = vpop.f32.mrf.mxu0
  %967 = vmatprep.mubr.bf16.mxu0 %v531
  %968 = vmatmul.mubr.bf16.gmra.mxu0 %v530
  %v969 = vpop.f32.mrf.mxu0
  %v970 = vadd.f32 %v184, %v969
  %v971 = vpop.f32.mrf.mxu0
  %v972 = vpop.f32.mrf.mxu0
  %v973 = vadd.f32 %v184, %v972
  %v974 = vpop.f32.mrf.mxu0
  %975 = vmatprep.mubr.bf16.mxu0 %v534
  %976 = vmatmul.mubr.bf16.gmra.mxu0 %v533
  %v977 = vpop.f32.mrf.mxu0
  %v978 = vadd.f32 %v184, %v977
  %v979 = vpop.f32.mrf.mxu0
  %v980 = vpop.f32.mrf.mxu0
  %v981 = vadd.f32 %v184, %v980
  %v982 = vpop.f32.mrf.mxu0
  %983 = vmatprep.mubr.bf16.mxu0 %v537
  %984 = vmatmul.mubr.bf16.gmra.mxu0 %v536
  %v985 = vpop.f32.mrf.mxu0
  %v986 = vadd.f32 %v184, %v985
  %v987 = vpop.f32.mrf.mxu0
  %v988 = vpop.f32.mrf.mxu0
  %v989 = vadd.f32 %v184, %v988
  %v990 = vpop.f32.mrf.mxu0
  %991 = vmatprep.mubr.bf16.mxu0 %v540
  %992 = vmatmul.mubr.bf16.gmra.mxu0 %v539
  %v993 = vpop.f32.mrf.mxu0
  %v994 = vadd.f32 %v184, %v993
  %v995 = vpop.f32.mrf.mxu0
  %v996 = vpop.f32.mrf.mxu0
  %v997 = vadd.f32 %v184, %v996
  %v998 = vpop.f32.mrf.mxu0
  %999 = vmatprep.mubr.bf16.mxu0 %v543
  %1000 = vmatmul.mubr.bf16.gmra.mxu0 %v542
  %v1001 = vpop.f32.mrf.mxu0
  %v1002 = vadd.f32 %v184, %v1001
  %v1003 = vpop.f32.mrf.mxu0
  %v1004 = vpop.f32.mrf.mxu0
  %v1005 = vadd.f32 %v184, %v1004
  %v1006 = vpop.f32.mrf.mxu0
  %1007 = vmatprep.mubr.bf16.mxu0 %v546
  %1008 = vmatmul.mubr.bf16.gmra.mxu0 %v545
  %v1009 = vpop.f32.mrf.mxu0
  %v1010 = vadd.f32 %v184, %v1009
  %v1011 = vpop.f32.mrf.mxu0
  %v1012 = vpop.f32.mrf.mxu0
  %v1013 = vadd.f32 %v184, %v1012
  %v1014 = vpop.f32.mrf.mxu0
  %1015 = vmatprep.mubr.bf16.mxu0 %v549
  %1016 = vmatmul.mubr.bf16.gmra.mxu0 %v548
  %v1017 = vpop.f32.mrf.mxu0
  %v1018 = vadd.f32 %v184, %v1017
  %v1019 = vpop.f32.mrf.mxu0
  %v1020 = vpop.f32.mrf.mxu0
  %v1021 = vadd.f32 %v184, %v1020
  %v1022 = vpop.f32.mrf.mxu0
  %1023 = vmatprep.mubr.bf16.mxu0 %v552
  %1024 = vmatmul.mubr.bf16.gmra.mxu0 %v551
  %v1025 = vpop.f32.mrf.mxu0
  %v1026 = vadd.f32 %v184, %v1025
  %v1027 = vpop.f32.mrf.mxu0
  %v1028 = vpop.f32.mrf.mxu0
  %v1029 = vadd.f32 %v184, %v1028
  %v1030 = vpop.f32.mrf.mxu0
  %1031 = vmatprep.mubr.bf16.mxu0 %v555
  %1032 = vmatmul.mubr.bf16.gmra.mxu0 %v554
  %v1033 = vpop.f32.mrf.mxu0
  %v1034 = vadd.f32 %v184, %v1033
  %v1035 = vpop.f32.mrf.mxu0
  %v1036 = vpop.f32.mrf.mxu0
  %v1037 = vadd.f32 %v184, %v1036
  %v1038 = vpop.f32.mrf.mxu0
  %1039 = vmatprep.mubr.bf16.mxu0 %v558
  %1040 = vmatmul.mubr.bf16.gmra.mxu0 %v557
  %v1041 = vpop.f32.mrf.mxu0
  %v1042 = vadd.f32 %v184, %v1041
  %v1043 = vpop.f32.mrf.mxu0
  %v1044 = vpop.f32.mrf.mxu0
  %v1045 = vadd.f32 %v184, %v1044
  %v1046 = vpop.f32.mrf.mxu0
  %1047 = vmatprep.mubr.bf16.mxu0 %v561
  %1048 = vmatmul.mubr.bf16.gmra.mxu0 %v560
  %v1049 = vpop.f32.mrf.mxu0
  %v1050 = vadd.f32 %v184, %v1049
  %v1051 = vpop.f32.mrf.mxu0
  %v1052 = vpop.f32.mrf.mxu0
  %v1053 = vadd.f32 %v184, %v1052
  %v1054 = vpop.f32.mrf.mxu0
  %1055 = vmatprep.mubr.bf16.mxu0 %v564
  %1056 = vmatmul.mubr.bf16.gmra.mxu0 %v563
  %v1057 = vpop.f32.mrf.mxu0
  %v1058 = vadd.f32 %v184, %v1057
  %v1059 = vpop.f32.mrf.mxu0
  %v1060 = vpop.f32.mrf.mxu0
  %v1061 = vadd.f32 %v184, %v1060
  %v1062 = vpop.f32.mrf.mxu0
  %1063 = vmatprep.mubr.bf16.mxu0 %v567
  %1064 = vmatmul.mubr.bf16.gmra.mxu0 %v566
  %v1065 = vpop.f32.mrf.mxu0
  %v1066 = vadd.f32 %v184, %v1065
  %v1067 = vpop.f32.mrf.mxu0
  %v1068 = vpop.f32.mrf.mxu0
  %v1069 = vadd.f32 %v184, %v1068
  %v1070 = vpop.f32.mrf.mxu0
  %1071 = vmatprep.mubr.bf16.mxu0 %v570
  %1072 = vmatmul.mubr.bf16.gmra.mxu0 %v569
  %v1073 = vpop.f32.mrf.mxu0
  %v1074 = vadd.f32 %v184, %v1073
  %v1075 = vpop.f32.mrf.mxu0
  %v1076 = vpop.f32.mrf.mxu0
  %v1077 = vadd.f32 %v184, %v1076
  %v1078 = vpop.f32.mrf.mxu0
  %1079 = vmatprep.mubr.bf16.mxu0 %v573
  %1080 = vmatmul.mubr.bf16.gmra.mxu0 %v572
  %v1081 = vpop.f32.mrf.mxu0
  %v1082 = vadd.f32 %v184, %v1081
  %v1083 = vpop.f32.mrf.mxu0
  %v1084 = vpop.f32.mrf.mxu0
  %v1085 = vadd.f32 %v184, %v1084
  %v1086 = vpop.f32.mrf.mxu0
  %1087 = vmatprep.mubr.bf16.mxu0 %v576
  %1088 = vmatmul.mubr.bf16.gmra.mxu0 %v575
  %v1089 = vpop.f32.mrf.mxu0
  %v1090 = vadd.f32 %v184, %v1089
  %v1091 = vpop.f32.mrf.mxu0
  %v1092 = vpop.f32.mrf.mxu0
  %v1093 = vadd.f32 %v184, %v1092
  %v1094 = vpop.f32.mrf.mxu0
  %1095 = vmatprep.mubr.bf16.mxu0 %v579
  %1096 = vmatmul.mubr.bf16.gmra.mxu0 %v578
  %v1097 = vpop.f32.mrf.mxu0
  %v1098 = vadd.f32 %v184, %v1097
  %v1099 = vpop.f32.mrf.mxu0
  %v1100 = vpop.f32.mrf.mxu0
  %v1101 = vadd.f32 %v184, %v1100
  %v1102 = vpop.f32.mrf.mxu0
  %1103 = vmatprep.mubr.bf16.mxu0 %v582
  %1104 = vmatmul.mubr.bf16.gmra.mxu0 %v581
  %v1105 = vpop.f32.mrf.mxu0
  %v1106 = vadd.f32 %v184, %v1105
  %v1107 = vpop.f32.mrf.mxu0
  %v1108 = vpop.f32.mrf.mxu0
  %v1109 = vadd.f32 %v184, %v1108
  %v1110 = vpop.f32.mrf.mxu0
  %1111 = vmatprep.mubr.bf16.mxu0 %v585
  %1112 = vmatmul.mubr.bf16.gmra.mxu0 %v584
  %v1113 = vpop.f32.mrf.mxu0
  %v1114 = vadd.f32 %v184, %v1113
  %v1115 = vpop.f32.mrf.mxu0
  %v1116 = vpop.f32.mrf.mxu0
  %v1117 = vadd.f32 %v184, %v1116
  %v1118 = vpop.f32.mrf.mxu0
  %1119 = vmatprep.mubr.bf16.mxu0 %v588
  %1120 = vmatmul.mubr.bf16.gmra.mxu0 %v587
  %v1121 = vpop.f32.mrf.mxu0
  %v1122 = vadd.f32 %v184, %v1121
  %v1123 = vpop.f32.mrf.mxu0
  %v1124 = vpop.f32.mrf.mxu0
  %v1125 = vadd.f32 %v184, %v1124
  %v1126 = vpop.f32.mrf.mxu0
  %1127 = vmatprep.mubr.bf16.mxu0 %v591
  %1128 = vmatmul.mubr.bf16.gmra.mxu0 %v590
  %v1129 = vpop.f32.mrf.mxu0
  %v1130 = vadd.f32 %v184, %v1129
  %v1131 = vpop.f32.mrf.mxu0
  %v1132 = vpop.f32.mrf.mxu0
  %v1133 = vadd.f32 %v184, %v1132
  %v1134 = vpop.f32.mrf.mxu0
  %1135 = vmatprep.mubr.bf16.mxu0 %v594
  %1136 = vmatmul.mubr.bf16.gmra.mxu0 %v593
  %v1137 = vpop.f32.mrf.mxu0
  %v1138 = vadd.f32 %v184, %v1137
  %v1139 = vpop.f32.mrf.mxu0
  %v1140 = vpop.f32.mrf.mxu0
  %v1141 = vadd.f32 %v184, %v1140
  %v1142 = vpop.f32.mrf.mxu0
  %1143 = vmatprep.mubr.bf16.mxu0 %v597
  %1144 = vmatmul.mubr.bf16.gmra.mxu0 %v596
  %v1145 = vpop.f32.mrf.mxu0
  %v1146 = vadd.f32 %v184, %v1145
  %v1147 = vpop.f32.mrf.mxu0
  %v1148 = vpop.f32.mrf.mxu0
  %v1149 = vadd.f32 %v184, %v1148
  %v1150 = vpop.f32.mrf.mxu0
  %1151 = vmatprep.mubr.bf16.mxu0 %v600
  %1152 = vmatmul.mubr.bf16.gmra.mxu0 %v599
  %v1153 = vpop.f32.mrf.mxu0
  %v1154 = vadd.f32 %v184, %v1153
  %v1155 = vpop.f32.mrf.mxu0
  %v1156 = vpop.f32.mrf.mxu0
  %v1157 = vadd.f32 %v184, %v1156
  %v1158 = vpop.f32.mrf.mxu0
  %1159 = vdwg.mxu0
  %1160 = vmatprep.subr.bf16.mxu0 0
  %1161 = vmatpush1.bf16.msra.mxu0 0
  %1162 = vmatprep.subr.bf16.mxu0 0
  %1163 = vmatpush1.bf16.msra.mxu0 0
  %1164 = vmatprep.subr.bf16.mxu0 0
  %1165 = vmatpush1.bf16.msra.mxu0 0
  %1166 = vmatprep.subr.bf16.mxu0 0
  %1167 = vmatpush1.bf16.msra.mxu0 0
  %1168 = vmatprep.subr.bf16.mxu0 0
  %1169 = vmatpush1.bf16.msra.mxu0 0
  %1170 = vmatprep.subr.bf16.mxu0 0
  %1171 = vmatpush1.bf16.msra.mxu0 0
  %1172 = vmatprep.subr.bf16.mxu0 0
  %1173 = vmatpush1.bf16.msra.mxu0 %v755
  %1174 = vmatprep.subr.bf16.mxu0 0
  %1175 = vmatpush1.bf16.msra.mxu0 %v754
  %1176 = vmatprep.subr.bf16.mxu0 0
  %1177 = vmatpush2.bf16.msra.mxu0 0
  %1178 = vmatprep.subr.bf16.mxu0 0
  %1179 = vmatpush2.bf16.msra.mxu0 0
  %1180 = vmatprep.subr.bf16.mxu0 0
  %1181 = vmatpush2.bf16.msra.mxu0 0
  %1182 = vmatprep.subr.bf16.mxu0 0
  %1183 = vmatpush2.bf16.msra.mxu0 0
  %1184 = vmatprep.subr.bf16.mxu0 0
  %1185 = vmatpush2.bf16.msra.mxu0 0
  %1186 = vmatprep.subr.bf16.mxu0 0
  %1187 = vmatpush2.bf16.msra.mxu0 0
  %1188 = vmatprep.subr.bf16.mxu0 0
  %1189 = vmatpush2.bf16.msra.mxu0 0
  %1190 = vmatprep.subr.bf16.mxu0 0
  %1191 = vmatpush2.bf16.msra.mxu0 0
  %1192 = vmatprep.mubr.bf16.mxu0 0
  %1193 = vmatmul.mubr.bf16.gmra.mxu0 %v776
  %v1194 = vpop.f32.mrf.mxu0
  %v1195 = vadd.f32 %v906, %v1194
  %v1196 = vpop.f32.mrf.mxu0
  %v1197 = vpop.f32.mrf.mxu0
  %v1198 = vadd.f32 %v909, %v1197
  %v1199 = vpop.f32.mrf.mxu0
  %1200 = vmatprep.mubr.bf16.mxu0 0
  %1201 = vmatmul.mubr.bf16.gmra.mxu0 %v779
  %v1202 = vpop.f32.mrf.mxu0
  %v1203 = vadd.f32 %v914, %v1202
  %v1204 = vpop.f32.mrf.mxu0
  %v1205 = vpop.f32.mrf.mxu0
  %v1206 = vadd.f32 %v917, %v1205
  %v1207 = vpop.f32.mrf.mxu0
  %1208 = vmatprep.mubr.bf16.mxu0 0
  %1209 = vmatmul.mubr.bf16.gmra.mxu0 %v782
  %v1210 = vpop.f32.mrf.mxu0
  %v1211 = vadd.f32 %v922, %v1210
  %v1212 = vpop.f32.mrf.mxu0
  %v1213 = vpop.f32.mrf.mxu0
  %v1214 = vadd.f32 %v925, %v1213
  %v1215 = vpop.f32.mrf.mxu0
  %1216 = vmatprep.mubr.bf16.mxu0 0
  %1217 = vmatmul.mubr.bf16.gmra.mxu0 %v785
  %v1218 = vpop.f32.mrf.mxu0
  %v1219 = vadd.f32 %v930, %v1218
  %v1220 = vpop.f32.mrf.mxu0
  %v1221 = vpop.f32.mrf.mxu0
  %v1222 = vadd.f32 %v933, %v1221
  %v1223 = vpop.f32.mrf.mxu0
  %1224 = vmatprep.mubr.bf16.mxu0 0
  %1225 = vmatmul.mubr.bf16.gmra.mxu0 %v788
  %v1226 = vpop.f32.mrf.mxu0
  %v1227 = vadd.f32 %v938, %v1226
  %v1228 = vpop.f32.mrf.mxu0
  %v1229 = vpop.f32.mrf.mxu0
  %v1230 = vadd.f32 %v941, %v1229
  %v1231 = vpop.f32.mrf.mxu0
  %1232 = vmatprep.mubr.bf16.mxu0 0
  %1233 = vmatmul.mubr.bf16.gmra.mxu0 %v791
  %v1234 = vpop.f32.mrf.mxu0
  %v1235 = vadd.f32 %v946, %v1234
  %v1236 = vpop.f32.mrf.mxu0
  %v1237 = vpop.f32.mrf.mxu0
  %v1238 = vadd.f32 %v949, %v1237
  %v1239 = vpop.f32.mrf.mxu0
  %1240 = vmatprep.mubr.bf16.mxu0 0
  %1241 = vmatmul.mubr.bf16.gmra.mxu0 %v794
  %v1242 = vpop.f32.mrf.mxu0
  %v1243 = vadd.f32 %v954, %v1242
  %v1244 = vpop.f32.mrf.mxu0
  %v1245 = vpop.f32.mrf.mxu0
  %v1246 = vadd.f32 %v957, %v1245
  %v1247 = vpop.f32.mrf.mxu0
  %1248 = vmatprep.mubr.bf16.mxu0 0
  %1249 = vmatmul.mubr.bf16.gmra.mxu0 %v797
  %v1250 = vpop.f32.mrf.mxu0
  %v1251 = vadd.f32 %v962, %v1250
  %v1252 = vpop.f32.mrf.mxu0
  %v1253 = vpop.f32.mrf.mxu0
  %v1254 = vadd.f32 %v965, %v1253
  %v1255 = vpop.f32.mrf.mxu0
  %1256 = vmatprep.mubr.bf16.mxu0 0
  %1257 = vmatmul.mubr.bf16.gmra.mxu0 %v800
  %v1258 = vpop.f32.mrf.mxu0
  %v1259 = vadd.f32 %v970, %v1258
  %v1260 = vpop.f32.mrf.mxu0
  %v1261 = vpop.f32.mrf.mxu0
  %v1262 = vadd.f32 %v973, %v1261
  %v1263 = vpop.f32.mrf.mxu0
  %1264 = vmatprep.mubr.bf16.mxu0 0
  %1265 = vmatmul.mubr.bf16.gmra.mxu0 %v803
  %v1266 = vpop.f32.mrf.mxu0
  %v1267 = vadd.f32 %v978, %v1266
  %v1268 = vpop.f32.mrf.mxu0
  %v1269 = vpop.f32.mrf.mxu0
  %v1270 = vadd.f32 %v981, %v1269
  %v1271 = vpop.f32.mrf.mxu0
  %1272 = vmatprep.mubr.bf16.mxu0 0
  %1273 = vmatmul.mubr.bf16.gmra.mxu0 %v806
  %v1274 = vpop.f32.mrf.mxu0
  %v1275 = vadd.f32 %v986, %v1274
  %v1276 = vpop.f32.mrf.mxu0
  %v1277 = vpop.f32.mrf.mxu0
  %v1278 = vadd.f32 %v989, %v1277
  %v1279 = vpop.f32.mrf.mxu0
  %1280 = vmatprep.mubr.bf16.mxu0 0
  %1281 = vmatmul.mubr.bf16.gmra.mxu0 %v809
  %v1282 = vpop.f32.mrf.mxu0
  %v1283 = vadd.f32 %v994, %v1282
  %v1284 = vpop.f32.mrf.mxu0
  %v1285 = vpop.f32.mrf.mxu0
  %v1286 = vadd.f32 %v997, %v1285
  %v1287 = vpop.f32.mrf.mxu0
  %1288 = vmatprep.mubr.bf16.mxu0 0
  %1289 = vmatmul.mubr.bf16.gmra.mxu0 %v812
  %v1290 = vpop.f32.mrf.mxu0
  %v1291 = vadd.f32 %v1002, %v1290
  %v1292 = vpop.f32.mrf.mxu0
  %v1293 = vpop.f32.mrf.mxu0
  %v1294 = vadd.f32 %v1005, %v1293
  %v1295 = vpop.f32.mrf.mxu0
  %1296 = vmatprep.mubr.bf16.mxu0 0
  %1297 = vmatmul.mubr.bf16.gmra.mxu0 %v815
  %v1298 = vpop.f32.mrf.mxu0
  %v1299 = vadd.f32 %v1010, %v1298
  %v1300 = vpop.f32.mrf.mxu0
  %v1301 = vpop.f32.mrf.mxu0
  %v1302 = vadd.f32 %v1013, %v1301
  %v1303 = vpop.f32.mrf.mxu0
  %1304 = vmatprep.mubr.bf16.mxu0 0
  %1305 = vmatmul.mubr.bf16.gmra.mxu0 %v818
  %v1306 = vpop.f32.mrf.mxu0
  %v1307 = vadd.f32 %v1018, %v1306
  %v1308 = vpop.f32.mrf.mxu0
  %v1309 = vpop.f32.mrf.mxu0
  %v1310 = vadd.f32 %v1021, %v1309
  %v1311 = vpop.f32.mrf.mxu0
  %1312 = vmatprep.mubr.bf16.mxu0 0
  %1313 = vmatmul.mubr.bf16.gmra.mxu0 %v821
  %v1314 = vpop.f32.mrf.mxu0
  %v1315 = vadd.f32 %v1026, %v1314
  %v1316 = vpop.f32.mrf.mxu0
  %v1317 = vpop.f32.mrf.mxu0
  %v1318 = vadd.f32 %v1029, %v1317
  %v1319 = vpop.f32.mrf.mxu0
  %1320 = vmatprep.mubr.bf16.mxu0 0
  %1321 = vmatmul.mubr.bf16.gmra.mxu0 %v824
  %v1322 = vpop.f32.mrf.mxu0
  %v1323 = vadd.f32 %v1034, %v1322
  %v1324 = vpop.f32.mrf.mxu0
  %v1325 = vpop.f32.mrf.mxu0
  %v1326 = vadd.f32 %v1037, %v1325
  %v1327 = vpop.f32.mrf.mxu0
  %1328 = vmatprep.mubr.bf16.mxu0 0
  %1329 = vmatmul.mubr.bf16.gmra.mxu0 %v827
  %v1330 = vpop.f32.mrf.mxu0
  %v1331 = vadd.f32 %v1042, %v1330
  %v1332 = vpop.f32.mrf.mxu0
  %v1333 = vpop.f32.mrf.mxu0
  %v1334 = vadd.f32 %v1045, %v1333
  %v1335 = vpop.f32.mrf.mxu0
  %1336 = vmatprep.mubr.bf16.mxu0 0
  %1337 = vmatmul.mubr.bf16.gmra.mxu0 %v830
  %v1338 = vpop.f32.mrf.mxu0
  %v1339 = vadd.f32 %v1050, %v1338
  %v1340 = vpop.f32.mrf.mxu0
  %v1341 = vpop.f32.mrf.mxu0
  %v1342 = vadd.f32 %v1053, %v1341
  %v1343 = vpop.f32.mrf.mxu0
  %1344 = vmatprep.mubr.bf16.mxu0 0
  %1345 = vmatmul.mubr.bf16.gmra.mxu0 %v833
  %v1346 = vpop.f32.mrf.mxu0
  %v1347 = vadd.f32 %v1058, %v1346
  %v1348 = vpop.f32.mrf.mxu0
  %v1349 = vpop.f32.mrf.mxu0
  %v1350 = vadd.f32 %v1061, %v1349
  %v1351 = vpop.f32.mrf.mxu0
  %1352 = vmatprep.mubr.bf16.mxu0 0
  %1353 = vmatmul.mubr.bf16.gmra.mxu0 %v836
  %v1354 = vpop.f32.mrf.mxu0
  %v1355 = vadd.f32 %v1066, %v1354
  %v1356 = vpop.f32.mrf.mxu0
  %v1357 = vpop.f32.mrf.mxu0
  %v1358 = vadd.f32 %v1069, %v1357
  %v1359 = vpop.f32.mrf.mxu0
  %1360 = vmatprep.mubr.bf16.mxu0 0
  %1361 = vmatmul.mubr.bf16.gmra.mxu0 %v839
  %v1362 = vpop.f32.mrf.mxu0
  %v1363 = vadd.f32 %v1074, %v1362
  %v1364 = vpop.f32.mrf.mxu0
  %v1365 = vpop.f32.mrf.mxu0
  %v1366 = vadd.f32 %v1077, %v1365
  %v1367 = vpop.f32.mrf.mxu0
  %1368 = vmatprep.mubr.bf16.mxu0 0
  %1369 = vmatmul.mubr.bf16.gmra.mxu0 %v842
  %v1370 = vpop.f32.mrf.mxu0
  %v1371 = vadd.f32 %v1082, %v1370
  %v1372 = vpop.f32.mrf.mxu0
  %v1373 = vpop.f32.mrf.mxu0
  %v1374 = vadd.f32 %v1085, %v1373
  %v1375 = vpop.f32.mrf.mxu0
  %1376 = vmatprep.mubr.bf16.mxu0 0
  %1377 = vmatmul.mubr.bf16.gmra.mxu0 %v845
  %v1378 = vpop.f32.mrf.mxu0
  %v1379 = vadd.f32 %v1090, %v1378
  %v1380 = vpop.f32.mrf.mxu0
  %v1381 = vpop.f32.mrf.mxu0
  %v1382 = vadd.f32 %v1093, %v1381
  %v1383 = vpop.f32.mrf.mxu0
  %1384 = vmatprep.mubr.bf16.mxu0 0
  %1385 = vmatmul.mubr.bf16.gmra.mxu0 %v848
  %v1386 = vpop.f32.mrf.mxu0
  %v1387 = vadd.f32 %v1098, %v1386
  %v1388 = vpop.f32.mrf.mxu0
  %v1389 = vpop.f32.mrf.mxu0
  %v1390 = vadd.f32 %v1101, %v1389
  %v1391 = vpop.f32.mrf.mxu0
  %1392 = vmatprep.mubr.bf16.mxu0 0
  %1393 = vmatmul.mubr.bf16.gmra.mxu0 %v851
  %v1394 = vpop.f32.mrf.mxu0
  %v1395 = vadd.f32 %v1106, %v1394
  %v1396 = vpop.f32.mrf.mxu0
  %v1397 = vpop.f32.mrf.mxu0
  %v1398 = vadd.f32 %v1109, %v1397
  %v1399 = vpop.f32.mrf.mxu0
  %1400 = vmatprep.mubr.bf16.mxu0 0
  %1401 = vmatmul.mubr.bf16.gmra.mxu0 %v854
  %v1402 = vpop.f32.mrf.mxu0
  %v1403 = vadd.f32 %v1114, %v1402
  %v1404 = vpop.f32.mrf.mxu0
  %v1405 = vpop.f32.mrf.mxu0
  %v1406 = vadd.f32 %v1117, %v1405
  %v1407 = vpop.f32.mrf.mxu0
  %1408 = vmatprep.mubr.bf16.mxu0 0
  %1409 = vmatmul.mubr.bf16.gmra.mxu0 %v857
  %v1410 = vpop.f32.mrf.mxu0
  %v1411 = vadd.f32 %v1122, %v1410
  %v1412 = vpop.f32.mrf.mxu0
  %v1413 = vpop.f32.mrf.mxu0
  %v1414 = vadd.f32 %v1125, %v1413
  %v1415 = vpop.f32.mrf.mxu0
  %1416 = vmatprep.mubr.bf16.mxu0 0
  %1417 = vmatmul.mubr.bf16.gmra.mxu0 %v860
  %v1418 = vpop.f32.mrf.mxu0
  %v1419 = vadd.f32 %v1130, %v1418
  %v1420 = vpop.f32.mrf.mxu0
  %v1421 = vpop.f32.mrf.mxu0
  %v1422 = vadd.f32 %v1133, %v1421
  %v1423 = vpop.f32.mrf.mxu0
  %1424 = vmatprep.mubr.bf16.mxu0 0
  %1425 = vmatmul.mubr.bf16.gmra.mxu0 %v863
  %v1426 = vpop.f32.mrf.mxu0
  %v1427 = vadd.f32 %v1138, %v1426
  %v1428 = vpop.f32.mrf.mxu0
  %v1429 = vpop.f32.mrf.mxu0
  %v1430 = vadd.f32 %v1141, %v1429
  %v1431 = vpop.f32.mrf.mxu0
  %1432 = vmatprep.mubr.bf16.mxu0 0
  %1433 = vmatmul.mubr.bf16.gmra.mxu0 %v866
  %v1434 = vpop.f32.mrf.mxu0
  %v1435 = vadd.f32 %v1146, %v1434
  %v1436 = vpop.f32.mrf.mxu0
  %v1437 = vpop.f32.mrf.mxu0
  %v1438 = vadd.f32 %v1149, %v1437
  %v1439 = vpop.f32.mrf.mxu0
  %1440 = vmatprep.mubr.bf16.mxu0 0
  %1441 = vmatmul.mubr.bf16.gmra.mxu0 %v869
  %v1442 = vpop.f32.mrf.mxu0
  %v1443 = vadd.f32 %v1154, %v1442
  %v1444 = vpop.f32.mrf.mxu0
  %v1445 = vpop.f32.mrf.mxu0
  %v1446 = vadd.f32 %v1157, %v1445
  %v1447 = vpop.f32.mrf.mxu0
  %1448 = vdwg.mxu0
  %v1449 = vmax.f32 %v1195, 0.0
  %v1450 = vmax.f32 %v1198, 0.0
  %v1451 = vmax.f32 %v1203, 0.0
  %v1452 = vmax.f32 %v1206, 0.0
  %v1453 = vmax.f32 %v1211, 0.0
  %v1454 = vmax.f32 %v1214, 0.0
  %v1455 = vmax.f32 %v1219, 0.0
  %v1456 = vmax.f32 %v1222, 0.0
  %v1457 = vmax.f32 %v1227, 0.0
  %v1458 = vmax.f32 %v1230, 0.0
  %v1459 = vmax.f32 %v1235, 0.0
  %v1460 = vmax.f32 %v1238, 0.0
  %v1461 = vmax.f32 %v1243, 0.0
  %v1462 = vmax.f32 %v1246, 0.0
  %v1463 = vmax.f32 %v1251, 0.0
  %v1464 = vmax.f32 %v1254, 0.0
  %v1465 = vmax.f32 %v1259, 0.0
  %v1466 = vmax.f32 %v1262, 0.0
  %v1467 = vmax.f32 %v1267, 0.0
  %v1468 = vmax.f32 %v1270, 0.0
  %v1469 = vmax.f32 %v1275, 0.0
  %v1470 = vmax.f32 %v1278, 0.0
  %v1471 = vmax.f32 %v1283, 0.0
  %v1472 = vmax.f32 %v1286, 0.0
  %v1473 = vmax.f32 %v1291, 0.0
  %v1474 = vmax.f32 %v1294, 0.0
  %v1475 = vmax.f32 %v1299, 0.0
  %v1476 = vmax.f32 %v1302, 0.0
  %v1477 = vmax.f32 %v1307, 0.0
  %v1478 = vmax.f32 %v1310, 0.0
  %v1479 = vmax.f32 %v1315, 0.0
  %v1480 = vmax.f32 %v1318, 0.0
  %v1481 = vmax.f32 %v1323, 0.0
  %v1482 = vmax.f32 %v1326, 0.0
  %v1483 = vmax.f32 %v1331, 0.0
  %v1484 = vmax.f32 %v1334, 0.0
  %v1485 = vmax.f32 %v1339, 0.0
  %v1486 = vmax.f32 %v1342, 0.0
  %v1487 = vmax.f32 %v1347, 0.0
  %v1488 = vmax.f32 %v1350, 0.0
  %v1489 = vmax.f32 %v1355, 0.0
  %v1490 = vmax.f32 %v1358, 0.0
  %v1491 = vmax.f32 %v1363, 0.0
  %v1492 = vmax.f32 %v1366, 0.0
  %v1493 = vmax.f32 %v1371, 0.0
  %v1494 = vmax.f32 %v1374, 0.0
  %v1495 = vmax.f32 %v1379, 0.0
  %v1496 = vmax.f32 %v1382, 0.0
  %v1497 = vmax.f32 %v1387, 0.0
  %v1498 = vmax.f32 %v1390, 0.0
  %v1499 = vmax.f32 %v1395, 0.0
  %v1500 = vmax.f32 %v1398, 0.0
  %v1501 = vmax.f32 %v1403, 0.0
  %v1502 = vmax.f32 %v1406, 0.0
  %v1503 = vmax.f32 %v1411, 0.0
  %v1504 = vmax.f32 %v1414, 0.0
  %v1505 = vmax.f32 %v1419, 0.0
  %v1506 = vmax.f32 %v1422, 0.0
  %v1507 = vmax.f32 %v1427, 0.0
  %v1508 = vmax.f32 %v1430, 0.0
  %v1509 = vmax.f32 %v1435, 0.0
  %v1510 = vmax.f32 %v1438, 0.0
  %v1511 = vmax.f32 %v1443, 0.0
  %v1512 = vmax.f32 %v1446, 0.0
  %vm1513 = vcmask 523264
  %1514 = vst.msk [vmem:[%s3] sm:$0xff] %vm1513, %v1449
  %1515 = vst.msk [vmem:[%s3 + $0x8] sm:$0xff] %vm1513, %v1450
  %1516 = vst.msk [vmem:[%s3 + $0x10] sm:$0xff] %vm1513, %v1451
  %1517 = vst.msk [vmem:[%s3 + $0x18] sm:$0xff] %vm1513, %v1452
  %1518 = vst.msk [vmem:[%s3 + $0x20] sm:$0xff] %vm1513, %v1453
  %1519 = vst.msk [vmem:[%s3 + $0x28] sm:$0xff] %vm1513, %v1454
  %1520 = vst.msk [vmem:[%s3 + $0x30] sm:$0xff] %vm1513, %v1455
  %1521 = vst.msk [vmem:[%s3 + $0x38] sm:$0xff] %vm1513, %v1456
  %1522 = vst.msk [vmem:[%s3 + $0x40] sm:$0xff] %vm1513, %v1457
  %1523 = vst.msk [vmem:[%s3 + $0x48] sm:$0xff] %vm1513, %v1458
  %1524 = vst.msk [vmem:[%s3 + $0x50] sm:$0xff] %vm1513, %v1459
  %1525 = vst.msk [vmem:[%s3 + $0x58] sm:$0xff] %vm1513, %v1460
  %1526 = vst.msk [vmem:[%s3 + $0x60] sm:$0xff] %vm1513, %v1461
  %1527 = vst.msk [vmem:[%s3 + $0x68] sm:$0xff] %vm1513, %v1462
  %1528 = vst.msk [vmem:[%s3 + $0x70] sm:$0xff] %vm1513, %v1463
  %1529 = vst.msk [vmem:[%s3 + $0x78] sm:$0xff] %vm1513, %v1464
  %1530 = vst.msk [vmem:[%s3 + $0x80] sm:$0xff] %vm1513, %v1465
  %1531 = vst.msk [vmem:[%s3 + $0x88] sm:$0xff] %vm1513, %v1466
  %1532 = vst.msk [vmem:[%s3 + $0x90] sm:$0xff] %vm1513, %v1467
  %1533 = vst.msk [vmem:[%s3 + $0x98] sm:$0xff] %vm1513, %v1468
  %1534 = vst.msk [vmem:[%s3 + $0xa0] sm:$0xff] %vm1513, %v1469
  %1535 = vst.msk [vmem:[%s3 + $0xa8] sm:$0xff] %vm1513, %v1470
  %1536 = vst.msk [vmem:[%s3 + $0xb0] sm:$0xff] %vm1513, %v1471
  %1537 = vst.msk [vmem:[%s3 + $0xb8] sm:$0xff] %vm1513, %v1472
  %1538 = vst.msk [vmem:[%s3 + $0xc0] sm:$0xff] %vm1513, %v1473
  %1539 = vst.msk [vmem:[%s3 + $0xc8] sm:$0xff] %vm1513, %v1474
  %1540 = vst.msk [vmem:[%s3 + $0xd0] sm:$0xff] %vm1513, %v1475
  %1541 = vst.msk [vmem:[%s3 + $0xd8] sm:$0xff] %vm1513, %v1476
  %1542 = vst.msk [vmem:[%s3 + $0xe0] sm:$0xff] %vm1513, %v1477
  %1543 = vst.msk [vmem:[%s3 + $0xe8] sm:$0xff] %vm1513, %v1478
  %1544 = vst.msk [vmem:[%s3 + $0xf0] sm:$0xff] %vm1513, %v1479
  %1545 = vst.msk [vmem:[%s3 + $0xf8] sm:$0xff] %vm1513, %v1480
  %1546 = vst.msk [vmem:[%s3 + $0x100] sm:$0xff] %vm1513, %v1481
  %1547 = vst.msk [vmem:[%s3 + $0x108] sm:$0xff] %vm1513, %v1482
  %1548 = vst.msk [vmem:[%s3 + $0x110] sm:$0xff] %vm1513, %v1483
  %1549 = vst.msk [vmem:[%s3 + $0x118] sm:$0xff] %vm1513, %v1484
  %1550 = vst.msk [vmem:[%s3 + $0x120] sm:$0xff] %vm1513, %v1485
  %1551 = vst.msk [vmem:[%s3 + $0x128] sm:$0xff] %vm1513, %v1486
  %1552 = vst.msk [vmem:[%s3 + $0x130] sm:$0xff] %vm1513, %v1487
  %1553 = vst.msk [vmem:[%s3 + $0x138] sm:$0xff] %vm1513, %v1488
  %1554 = vst.msk [vmem:[%s3 + $0x140] sm:$0xff] %vm1513, %v1489
  %1555 = vst.msk [vmem:[%s3 + $0x148] sm:$0xff] %vm1513, %v1490
  %1556 = vst.msk [vmem:[%s3 + $0x150] sm:$0xff] %vm1513, %v1491
  %1557 = vst.msk [vmem:[%s3 + $0x158] sm:$0xff] %vm1513, %v1492
  %1558 = vst.msk [vmem:[%s3 + $0x160] sm:$0xff] %vm1513, %v1493
  %1559 = vst.msk [vmem:[%s3 + $0x168] sm:$0xff] %vm1513, %v1494
  %1560 = vst.msk [vmem:[%s3 + $0x170] sm:$0xff] %vm1513, %v1495
  %1561 = vst.msk [vmem:[%s3 + $0x178] sm:$0xff] %vm1513, %v1496
  %1562 = vst.msk [vmem:[%s3 + $0x180] sm:$0xff] %vm1513, %v1497
  %1563 = vst.msk [vmem:[%s3 + $0x188] sm:$0xff] %vm1513, %v1498
  %1564 = vst.msk [vmem:[%s3 + $0x190] sm:$0xff] %vm1513, %v1499
  %1565 = vst.msk [vmem:[%s3 + $0x198] sm:$0xff] %vm1513, %v1500
  %1566 = vst.msk [vmem:[%s3 + $0x1a0] sm:$0xff] %vm1513, %v1501
  %1567 = vst.msk [vmem:[%s3 + $0x1a8] sm:$0xff] %vm1513, %v1502
  %1568 = vst.msk [vmem:[%s3 + $0x1b0] sm:$0xff] %vm1513, %v1503
  %1569 = vst.msk [vmem:[%s3 + $0x1b8] sm:$0xff] %vm1513, %v1504
  %1570 = vst.msk [vmem:[%s3 + $0x1c0] sm:$0xff] %vm1513, %v1505
  %1571 = vst.msk [vmem:[%s3 + $0x1c8] sm:$0xff] %vm1513, %v1506
  %1572 = vst.msk [vmem:[%s3 + $0x1d0] sm:$0xff] %vm1513, %v1507
  %1573 = vst.msk [vmem:[%s3 + $0x1d8] sm:$0xff] %vm1513, %v1508
  %1574 = vst.msk [vmem:[%s3 + $0x1e0] sm:$0xff] %vm1513, %v1509
  %1575 = vst.msk [vmem:[%s3 + $0x1e8] sm:$0xff] %vm1513, %v1510
  %1576 = vst.msk [vmem:[%s3 + $0x1f0] sm:$0xff] %vm1513, %v1511
  %1577 = vst.msk [vmem:[%s3 + $0x1f8] sm:$0xff] %vm1513, %v1512
  // Predicated region
  $region14: #{dueling_qnet_forward_pallas.5} parent=0 // pred_check
    _
  $region15: #{dueling_qnet_forward_pallas.5} parent=0 // pred_check_branch
    %1579 = sbr.rel (0) target = $region17
  $region16: #{dueling_qnet_forward_pallas.5} parent=0 // pred_region
    _
  $region17: #{dueling_qnet_forward_pallas.5} parent=0 // pred_fallthru
    _
  // Predicated region
  $region18: #{dueling_qnet_forward_pallas.5} parent=0 // pred_check
    _
  $region19: #{dueling_qnet_forward_pallas.5} parent=0 // pred_check_branch
    %1581 = sbr.rel (0) target = $region21
  $region20: #{dueling_qnet_forward_pallas.5} parent=0 // pred_region
    _
  $region21: #{dueling_qnet_forward_pallas.5} parent=0 // pred_fallthru
    _

// kernel: dueling_qnet_forward_pallas.6
$region0: #{dueling_qnet_forward_pallas.6}
  #allocation0 [shape = 'u32[]', space=smem, size = 0x4, offset = 0x4, fixed_abs, tag = 'smem constant byte address 0x4 - core index']
  #allocation1 [shape = 'u32[144,128]{1,0:T(1,128)}', space=vmem, size = 0x12000, scoped, tag = 'internal scratch']
  %s0 = inlined_call_operand.vmem [shape: bf16[72,576], index: 0, kind: input, shape index: {}]
  %s1 = inlined_call_operand.vmem [shape: bf16[576,128], index: 1, kind: input, shape index: {}]
  %s2 = inlined_call_operand.vmem [shape: f32[1,128], index: 2, kind: input, shape index: {}]
  %s3 = inlined_call_operand.vmem [shape: f32[72,128], index: 3, kind: output, shape index: {}]
  %s4 = sld [smem:[#allocation0]]
  $region22: #{dueling_qnet_forward_pallas.6} parent=0
    _
  %s6 = ssub.s32 1, %s4
  %s7 = scalar_select 0, %s6, %s4
  // Predicated region
  $region2: #{dueling_qnet_forward_pallas.6} parent=0 // pred_check
    _
  $region3: #{dueling_qnet_forward_pallas.6} parent=0 // pred_check_branch
    %9 = sbr.rel (0) target = $region5
  $region4: #{dueling_qnet_forward_pallas.6} parent=0 // pred_region
    _
  $region5: #{dueling_qnet_forward_pallas.6} parent=0 // pred_fallthru
    _
  // Predicated region
  $region6: #{dueling_qnet_forward_pallas.6} parent=0 // pred_check
    _
  $region7: #{dueling_qnet_forward_pallas.6} parent=0 // pred_check_branch
    %11 = sbr.rel (0) target = $region9
  $region8: #{dueling_qnet_forward_pallas.6} parent=0 // pred_region
    _
  $region9: #{dueling_qnet_forward_pallas.6} parent=0 // pred_fallthru
    _
  // Predicated region
  $region10: #{dueling_qnet_forward_pallas.6} parent=0 // pred_check
    _
  $region11: #{dueling_qnet_forward_pallas.6} parent=0 // pred_check_branch
    %13 = sbr.rel (0) target = $region13
  $region12: #{dueling_qnet_forward_pallas.6} parent=0 // pred_region
    _
  $region13: #{dueling_qnet_forward_pallas.6} parent=0 // pred_fallthru
    _
  %v15 = vld [vmem:[%s0] sm:$0xff]
  %v16 = vld [vmem:[%s0 + $0x8] sm:$0xff]
  %v17 = vld [vmem:[%s0 + $0x10] sm:$0xf]
  %v18 = vld [vmem:[%s0 + $0x14] sm:$0xff]
  %v19 = vld [vmem:[%s0 + $0x1c] sm:$0xff]
  %v20 = vld [vmem:[%s0 + $0x24] sm:$0xf]
  %v21 = vld [vmem:[%s0 + $0x28] sm:$0xff]
  %v22 = vld [vmem:[%s0 + $0x30] sm:$0xff]
  %v23 = vld [vmem:[%s0 + $0x38] sm:$0xf]
  %v24 = vld [vmem:[%s0 + $0x3c] sm:$0xff]
  %v25 = vld [vmem:[%s0 + $0x44] sm:$0xff]
  %v26 = vld [vmem:[%s0 + $0x4c] sm:$0xf]
  %v27 = vld [vmem:[%s0 + $0x50] sm:$0xff]
  %v28 = vld [vmem:[%s0 + $0x58] sm:$0xff]
  %v29 = vld [vmem:[%s0 + $0x60] sm:$0xf]
  %v30 = vld [vmem:[%s0 + $0x64] sm:$0xff]
  %v31 = vld [vmem:[%s0 + $0x6c] sm:$0xff]
  %v32 = vld [vmem:[%s0 + $0x74] sm:$0xf]
  %v33 = vld [vmem:[%s0 + $0x78] sm:$0xff]
  %v34 = vld [vmem:[%s0 + $0x80] sm:$0xff]
  %v35 = vld [vmem:[%s0 + $0x88] sm:$0xf]
  %v36 = vld [vmem:[%s0 + $0x8c] sm:$0xff]
  %v37 = vld [vmem:[%s0 + $0x94] sm:$0xff]
  %v38 = vld [vmem:[%s0 + $0x9c] sm:$0xf]
  %v39 = vld [vmem:[%s0 + $0xa0] sm:$0xff]
  %v40 = vld [vmem:[%s0 + $0xa8] sm:$0xff]
  %v41 = vld [vmem:[%s0 + $0xb0] sm:$0xf]
  %v42 = vld [vmem:[%s1] sm:$0xf]
  %v43 = vld [vmem:[%s1 + $0x4] sm:$0xf]
  %v44 = vld [vmem:[%s1 + $0x8] sm:$0xf]
  %v45 = vld [vmem:[%s1 + $0xc] sm:$0xf]
  %v46 = vld [vmem:[%s1 + $0x10] sm:$0xf]
  %v47 = vld [vmem:[%s1 + $0x14] sm:$0xf]
  %v48 = vld [vmem:[%s1 + $0x18] sm:$0xf]
  %v49 = vld [vmem:[%s1 + $0x1c] sm:$0xf]
  %v50 = vld [vmem:[%s1 + $0x20] sm:$0xf]
  %v51 = vld [vmem:[%s1 + $0x24] sm:$0xf]
  %v52 = vld [vmem:[%s1 + $0x28] sm:$0xf]
  %v53 = vld [vmem:[%s1 + $0x2c] sm:$0xf]
  %v54 = vld [vmem:[%s1 + $0x30] sm:$0xf]
  %v55 = vld [vmem:[%s1 + $0x34] sm:$0xf]
  %v56 = vld [vmem:[%s1 + $0x38] sm:$0xf]
  %v57 = vld [vmem:[%s1 + $0x3c] sm:$0xf]
  %v58 = vld [vmem:[%s1 + $0x40] sm:$0xf]
  %v59 = vld [vmem:[%s1 + $0x44] sm:$0xf]
  %v60 = vld [vmem:[%s1 + $0x48] sm:$0xf]
  %v61 = vld [vmem:[%s1 + $0x4c] sm:$0xf]
  %v62 = vld [vmem:[%s1 + $0x50] sm:$0xf]
  %v63 = vld [vmem:[%s1 + $0x54] sm:$0xf]
  %v64 = vld [vmem:[%s1 + $0x58] sm:$0xf]
  %v65 = vld [vmem:[%s1 + $0x5c] sm:$0xf]
  %v66 = vld [vmem:[%s1 + $0x60] sm:$0xf]
  %v67 = vld [vmem:[%s1 + $0x64] sm:$0xf]
  %v68 = vld [vmem:[%s1 + $0x68] sm:$0xf]
  %v69 = vld [vmem:[%s1 + $0x6c] sm:$0xf]
  %v70 = vld [vmem:[%s1 + $0x70] sm:$0xf]
  %v71 = vld [vmem:[%s1 + $0x74] sm:$0xf]
  %v72 = vld [vmem:[%s1 + $0x78] sm:$0xf]
  %v73 = vld [vmem:[%s1 + $0x7c] sm:$0xf]
  %v74 = vld [vmem:[%s1 + $0x80] sm:$0xf]
  %v75 = vld [vmem:[%s1 + $0x84] sm:$0xf]
  %v76 = vld [vmem:[%s1 + $0x88] sm:$0xf]
  %v77 = vld [vmem:[%s1 + $0x8c] sm:$0xf]
  %v78 = vld [vmem:[%s1 + $0x90] sm:$0xf]
  %v79 = vld [vmem:[%s1 + $0x94] sm:$0xf]
  %v80 = vld [vmem:[%s1 + $0x98] sm:$0xf]
  %v81 = vld [vmem:[%s1 + $0x9c] sm:$0xf]
  %v82 = vld [vmem:[%s1 + $0xa0] sm:$0xf]
  %v83 = vld [vmem:[%s1 + $0xa4] sm:$0xf]
  %v84 = vld [vmem:[%s1 + $0xa8] sm:$0xf]
  %v85 = vld [vmem:[%s1 + $0xac] sm:$0xf]
  %v86 = vld [vmem:[%s1 + $0xb0] sm:$0xf]
  %v87 = vld [vmem:[%s1 + $0xb4] sm:$0xf]
  %v88 = vld [vmem:[%s1 + $0xb8] sm:$0xf]
  %v89 = vld [vmem:[%s1 + $0xbc] sm:$0xf]
  %v90 = vld [vmem:[%s1 + $0xc0] sm:$0xf]
  %v91 = vld [vmem:[%s1 + $0xc4] sm:$0xf]
  %v92 = vld [vmem:[%s1 + $0xc8] sm:$0xf]
  %v93 = vld [vmem:[%s1 + $0xcc] sm:$0xf]
  %v94 = vld [vmem:[%s1 + $0xd0] sm:$0xf]
  %v95 = vld [vmem:[%s1 + $0xd4] sm:$0xf]
  %v96 = vld [vmem:[%s1 + $0xd8] sm:$0xf]
  %v97 = vld [vmem:[%s1 + $0xdc] sm:$0xf]
  %v98 = vld [vmem:[%s1 + $0xe0] sm:$0xf]
  %v99 = vld [vmem:[%s1 + $0xe4] sm:$0xf]
  %v100 = vld [vmem:[%s1 + $0xe8] sm:$0xf]
  %v101 = vld [vmem:[%s1 + $0xec] sm:$0xf]
  %v102 = vld [vmem:[%s1 + $0xf0] sm:$0xf]
  %v103 = vld [vmem:[%s1 + $0xf4] sm:$0xf]
  %v104 = vld [vmem:[%s1 + $0xf8] sm:$0xf]
  %v105 = vld [vmem:[%s1 + $0xfc] sm:$0xf]
  %v106 = vld [vmem:[%s1 + $0x100] sm:$0xf]
  %v107 = vld [vmem:[%s1 + $0x104] sm:$0xf]
  %v108 = vld [vmem:[%s1 + $0x108] sm:$0xf]
  %v109 = vld [vmem:[%s1 + $0x10c] sm:$0xf]
  %v110 = vld [vmem:[%s1 + $0x110] sm:$0xf]
  %v111 = vld [vmem:[%s1 + $0x114] sm:$0xf]
  %v112 = vld [vmem:[%s1 + $0x118] sm:$0xf]
  %v113 = vld [vmem:[%s1 + $0x11c] sm:$0xf]
  %v114 = vld [vmem:[%s2] sm:$0x1]
  %v116 = vlaneseq
  %v117 = vshrl.u32 %v116, 7
  %v118 = vsub.s32 0, %v117
  %v119 = vrot.slane %v114, %v118
  %v148 = vunpack.c.l.b16 %v15
  %v149 = vunpack.c.h.b16 %v15
  %v150 = vunpack.c.l.b16 %v16
  %v151 = vunpack.c.h.b16 %v16
  %v152 = vunpack.c.l.b16 %v17
  %v153 = vunpack.c.l.b16 %v18
  %v154 = vunpack.c.h.b16 %v18
  %v155 = vunpack.c.l.b16 %v19
  %v156 = vunpack.c.h.b16 %v19
  %v157 = vunpack.c.l.b16 %v20
  %v158 = vunpack.c.l.b16 %v21
  %v159 = vunpack.c.h.b16 %v21
  %v160 = vunpack.c.l.b16 %v22
  %v161 = vunpack.c.h.b16 %v22
  %v162 = vunpack.c.l.b16 %v23
  %v163 = vunpack.c.l.b16 %v24
  %v164 = vunpack.c.h.b16 %v24
  %v165 = vunpack.c.l.b16 %v25
  %v166 = vunpack.c.h.b16 %v25
  %v167 = vunpack.c.l.b16 %v26
  %v168 = vunpack.c.l.b16 %v27
  %v169 = vunpack.c.h.b16 %v27
  %v170 = vunpack.c.l.b16 %v28
  %v171 = vunpack.c.h.b16 %v28
  %v172 = vunpack.c.l.b16 %v29
  %v173 = vunpack.c.l.b16 %v30
  %v174 = vunpack.c.h.b16 %v30
  %v175 = vunpack.c.l.b16 %v31
  %v176 = vunpack.c.h.b16 %v31
  %v177 = vunpack.c.l.b16 %v32
  %v178 = vunpack.c.l.b16 %v33
  %v179 = vunpack.c.h.b16 %v33
  %v180 = vunpack.c.l.b16 %v34
  %v181 = vunpack.c.h.b16 %v34
  %v182 = vunpack.c.l.b16 %v35
  %v183 = vunpack.c.l.b16 %v36
  %v184 = vunpack.c.h.b16 %v36
  %v185 = vunpack.c.l.b16 %v37
  %v186 = vunpack.c.h.b16 %v37
  %v187 = vunpack.c.l.b16 %v38
  %v188 = vunpack.c.l.b16 %v39
  %v189 = vunpack.c.h.b16 %v39
  %v190 = vunpack.c.l.b16 %v40
  %v191 = vunpack.c.h.b16 %v40
  %v192 = vunpack.c.l.b16 %v41
  %v193 = vpack.c.b16 %v153, %v148
  %v194 = vpack.c.b16 %v154, %v149
  %v195 = vpack.c.b16 %v155, %v150
  %v196 = vpack.c.b16 %v156, %v151
  %v197 = vpack.c.b16 %v157, %v152
  %v198 = vpack.c.b16 %v163, %v158
  %v199 = vpack.c.b16 %v164, %v159
  %v200 = vpack.c.b16 %v165, %v160
  %v201 = vpack.c.b16 %v166, %v161
  %v202 = vpack.c.b16 %v167, %v162
  %v203 = vpack.c.b16 %v173, %v168
  %v204 = vpack.c.b16 %v174, %v169
  %v205 = vpack.c.b16 %v175, %v170
  %v206 = vpack.c.b16 %v176, %v171
  %v207 = vpack.c.b16 %v177, %v172
  %v208 = vpack.c.b16 %v183, %v178
  %v209 = vpack.c.b16 %v184, %v179
  %v210 = vpack.c.b16 %v185, %v180
  %v211 = vpack.c.b16 %v186, %v181
  %v212 = vpack.c.b16 %v187, %v182
  %v213 = vpack.c.b16 %v188, %v188
  %v214 = vpack.c.b16 %v189, %v189
  %v215 = vpack.c.b16 %v190, %v190
  %v216 = vpack.c.b16 %v191, %v191
  %v217 = vpack.c.b16 %v192, %v192
  %v310 = vunpack.c.l.b16 %v42
  %v311 = vunpack.c.l.b16 %v43
  %v312 = vunpack.c.l.b16 %v44
  %v313 = vunpack.c.l.b16 %v45
  %v314 = vunpack.c.l.b16 %v46
  %v315 = vunpack.c.l.b16 %v47
  %v316 = vunpack.c.l.b16 %v48
  %v317 = vunpack.c.l.b16 %v49
  %v318 = vunpack.c.l.b16 %v50
  %v319 = vunpack.c.l.b16 %v51
  %v320 = vunpack.c.l.b16 %v52
  %v321 = vunpack.c.l.b16 %v53
  %v322 = vunpack.c.l.b16 %v54
  %v323 = vunpack.c.l.b16 %v55
  %v324 = vunpack.c.l.b16 %v56
  %v325 = vunpack.c.l.b16 %v57
  %v326 = vunpack.c.l.b16 %v58
  %v327 = vunpack.c.l.b16 %v59
  %v328 = vunpack.c.l.b16 %v60
  %v329 = vunpack.c.l.b16 %v61
  %v330 = vunpack.c.l.b16 %v62
  %v331 = vunpack.c.l.b16 %v63
  %v332 = vunpack.c.l.b16 %v64
  %v333 = vunpack.c.l.b16 %v65
  %v334 = vunpack.c.l.b16 %v66
  %v335 = vunpack.c.l.b16 %v67
  %v336 = vunpack.c.l.b16 %v68
  %v337 = vunpack.c.l.b16 %v69
  %v338 = vunpack.c.l.b16 %v70
  %v339 = vunpack.c.l.b16 %v71
  %v340 = vunpack.c.l.b16 %v72
  %v341 = vunpack.c.l.b16 %v73
  %v342 = vunpack.c.l.b16 %v74
  %v343 = vunpack.c.l.b16 %v75
  %v344 = vunpack.c.l.b16 %v76
  %v345 = vunpack.c.l.b16 %v77
  %v346 = vunpack.c.l.b16 %v78
  %v347 = vunpack.c.l.b16 %v79
  %v348 = vunpack.c.l.b16 %v80
  %v349 = vunpack.c.l.b16 %v81
  %v350 = vunpack.c.l.b16 %v82
  %v351 = vunpack.c.l.b16 %v83
  %v352 = vunpack.c.l.b16 %v84
  %v353 = vunpack.c.l.b16 %v85
  %v354 = vunpack.c.l.b16 %v86
  %v355 = vunpack.c.l.b16 %v87
  %v356 = vunpack.c.l.b16 %v88
  %v357 = vunpack.c.l.b16 %v89
  %v358 = vunpack.c.l.b16 %v90
  %v359 = vunpack.c.l.b16 %v91
  %v360 = vunpack.c.l.b16 %v92
  %v361 = vunpack.c.l.b16 %v93
  %v362 = vunpack.c.l.b16 %v94
  %v363 = vunpack.c.l.b16 %v95
  %v364 = vunpack.c.l.b16 %v96
  %v365 = vunpack.c.l.b16 %v97
  %v366 = vunpack.c.l.b16 %v98
  %v367 = vunpack.c.l.b16 %v99
  %v368 = vunpack.c.l.b16 %v100
  %v369 = vunpack.c.l.b16 %v101
  %v370 = vunpack.c.l.b16 %v102
  %v371 = vunpack.c.l.b16 %v103
  %v372 = vunpack.c.l.b16 %v104
  %v373 = vunpack.c.l.b16 %v105
  %v374 = vunpack.c.l.b16 %v106
  %v375 = vunpack.c.l.b16 %v107
  %v376 = vunpack.c.l.b16 %v108
  %v377 = vunpack.c.l.b16 %v109
  %v378 = vunpack.c.l.b16 %v110
  %v379 = vunpack.c.l.b16 %v111
  %v380 = vunpack.c.l.b16 %v112
  %v381 = vunpack.c.l.b16 %v113
  %v382 = vpack.c.b16 %v311, %v310
  %v383 = vpack.c.b16 %v313, %v312
  %v384 = vpack.c.b16 %v315, %v314
  %v385 = vpack.c.b16 %v317, %v316
  %v386 = vpack.c.b16 %v319, %v318
  %v387 = vpack.c.b16 %v321, %v320
  %v388 = vpack.c.b16 %v323, %v322
  %v389 = vpack.c.b16 %v325, %v324
  %v390 = vpack.c.b16 %v327, %v326
  %v391 = vpack.c.b16 %v329, %v328
  %v392 = vpack.c.b16 %v331, %v330
  %v393 = vpack.c.b16 %v333, %v332
  %v394 = vpack.c.b16 %v335, %v334
  %v395 = vpack.c.b16 %v337, %v336
  %v396 = vpack.c.b16 %v339, %v338
  %v397 = vpack.c.b16 %v341, %v340
  %v398 = vpack.c.b16 %v343, %v342
  %v399 = vpack.c.b16 %v345, %v344
  %v400 = vpack.c.b16 %v347, %v346
  %v401 = vpack.c.b16 %v349, %v348
  %v402 = vpack.c.b16 %v351, %v350
  %v403 = vpack.c.b16 %v353, %v352
  %v404 = vpack.c.b16 %v355, %v354
  %v405 = vpack.c.b16 %v357, %v356
  %v406 = vpack.c.b16 %v359, %v358
  %v407 = vpack.c.b16 %v361, %v360
  %v408 = vpack.c.b16 %v363, %v362
  %v409 = vpack.c.b16 %v365, %v364
  %v410 = vpack.c.b16 %v367, %v366
  %v411 = vpack.c.b16 %v369, %v368
  %v412 = vpack.c.b16 %v371, %v370
  %v413 = vpack.c.b16 %v373, %v372
  %v414 = vpack.c.b16 %v375, %v374
  %v415 = vpack.c.b16 %v377, %v376
  %v416 = vpack.c.b16 %v379, %v378
  %v417 = vpack.c.b16 %v381, %v380
  %vm454 = vcmask 523264
  %v456 = vsel %vm454, %v197, 0
  %v459 = vsel %vm454, %v202, 0
  %v462 = vsel %vm454, %v207, 0
  %v465 = vsel %vm454, %v212, 0
  %v468 = vsel %vm454, %v217, 0
  %470 = vmatprep.subr.bf16.mxu0 0
  %471 = vmatpush1.bf16.msra.mxu0 %v389
  %472 = vmatprep.subr.bf16.mxu0 0
  %473 = vmatpush1.bf16.msra.mxu0 %v388
  %474 = vmatprep.subr.bf16.mxu0 0
  %475 = vmatpush1.bf16.msra.mxu0 %v387
  %476 = vmatprep.subr.bf16.mxu0 0
  %477 = vmatpush1.bf16.msra.mxu0 %v386
  %478 = vmatprep.subr.bf16.mxu0 0
  %479 = vmatpush1.bf16.msra.mxu0 %v385
  %480 = vmatprep.subr.bf16.mxu0 0
  %481 = vmatpush1.bf16.msra.mxu0 %v384
  %482 = vmatprep.subr.bf16.mxu0 0
  %483 = vmatpush1.bf16.msra.mxu0 %v383
  %484 = vmatprep.subr.bf16.mxu0 0
  %485 = vmatpush1.bf16.msra.mxu0 %v382
  %486 = vmatprep.subr.bf16.mxu0 0
  %487 = vmatpush2.bf16.msra.mxu0 %v397
  %488 = vmatprep.subr.bf16.mxu0 0
  %489 = vmatpush2.bf16.msra.mxu0 %v396
  %490 = vmatprep.subr.bf16.mxu0 0
  %491 = vmatpush2.bf16.msra.mxu0 %v395
  %492 = vmatprep.subr.bf16.mxu0 0
  %493 = vmatpush2.bf16.msra.mxu0 %v394
  %494 = vmatprep.subr.bf16.mxu0 0
  %495 = vmatpush2.bf16.msra.mxu0 %v393
  %496 = vmatprep.subr.bf16.mxu0 0
  %497 = vmatpush2.bf16.msra.mxu0 %v392
  %498 = vmatprep.subr.bf16.mxu0 0
  %499 = vmatpush2.bf16.msra.mxu0 %v391
  %500 = vmatprep.subr.bf16.mxu0 0
  %501 = vmatpush2.bf16.msra.mxu0 %v390
  %502 = vmatprep.mubr.bf16.mxu0 %v194
  %503 = vmatmul.mubr.bf16.gmra.mxu0 %v193
  %v504 = vpop.f32.mrf.mxu0
  %v505 = vadd.f32 %v119, %v504
  %v506 = vpop.f32.mrf.mxu0
  %v507 = vpop.f32.mrf.mxu0
  %v508 = vadd.f32 %v119, %v507
  %v509 = vpop.f32.mrf.mxu0
  %510 = vmatprep.mubr.bf16.mxu0 %v199
  %511 = vmatmul.mubr.bf16.gmra.mxu0 %v198
  %v512 = vpop.f32.mrf.mxu0
  %v513 = vadd.f32 %v119, %v512
  %v514 = vpop.f32.mrf.mxu0
  %v515 = vpop.f32.mrf.mxu0
  %v516 = vadd.f32 %v119, %v515
  %v517 = vpop.f32.mrf.mxu0
  %518 = vmatprep.mubr.bf16.mxu0 %v204
  %519 = vmatmul.mubr.bf16.gmra.mxu0 %v203
  %v520 = vpop.f32.mrf.mxu0
  %v521 = vadd.f32 %v119, %v520
  %v522 = vpop.f32.mrf.mxu0
  %v523 = vpop.f32.mrf.mxu0
  %v524 = vadd.f32 %v119, %v523
  %v525 = vpop.f32.mrf.mxu0
  %526 = vmatprep.mubr.bf16.mxu0 %v209
  %527 = vmatmul.mubr.bf16.gmra.mxu0 %v208
  %v528 = vpop.f32.mrf.mxu0
  %v529 = vadd.f32 %v119, %v528
  %v530 = vpop.f32.mrf.mxu0
  %v531 = vpop.f32.mrf.mxu0
  %v532 = vadd.f32 %v119, %v531
  %v533 = vpop.f32.mrf.mxu0
  %534 = vmatprep.mubr.bf16.mxu0 %v214
  %535 = vmatmul.mubr.bf16.gmra.mxu0 %v213
  %v536 = vpop.f32.mrf.mxu0
  %v537 = vadd.f32 %v119, %v536
  %v538 = vpop.f32.mrf.mxu0
  %v539 = vpop.f32.mrf.mxu0
  %v540 = vpop.f32.mrf.mxu0
  %541 = vdwg.mxu0
  %542 = vmatprep.subr.bf16.mxu0 0
  %543 = vmatpush1.bf16.msra.mxu0 %v405
  %544 = vmatprep.subr.bf16.mxu0 0
  %545 = vmatpush1.bf16.msra.mxu0 %v404
  %546 = vmatprep.subr.bf16.mxu0 0
  %547 = vmatpush1.bf16.msra.mxu0 %v403
  %548 = vmatprep.subr.bf16.mxu0 0
  %549 = vmatpush1.bf16.msra.mxu0 %v402
  %550 = vmatprep.subr.bf16.mxu0 0
  %551 = vmatpush1.bf16.msra.mxu0 %v401
  %552 = vmatprep.subr.bf16.mxu0 0
  %553 = vmatpush1.bf16.msra.mxu0 %v400
  %554 = vmatprep.subr.bf16.mxu0 0
  %555 = vmatpush1.bf16.msra.mxu0 %v399
  %556 = vmatprep.subr.bf16.mxu0 0
  %557 = vmatpush1.bf16.msra.mxu0 %v398
  %558 = vmatprep.subr.bf16.mxu0 0
  %559 = vmatpush2.bf16.msra.mxu0 %v413
  %560 = vmatprep.subr.bf16.mxu0 0
  %561 = vmatpush2.bf16.msra.mxu0 %v412
  %562 = vmatprep.subr.bf16.mxu0 0
  %563 = vmatpush2.bf16.msra.mxu0 %v411
  %564 = vmatprep.subr.bf16.mxu0 0
  %565 = vmatpush2.bf16.msra.mxu0 %v410
  %566 = vmatprep.subr.bf16.mxu0 0
  %567 = vmatpush2.bf16.msra.mxu0 %v409
  %568 = vmatprep.subr.bf16.mxu0 0
  %569 = vmatpush2.bf16.msra.mxu0 %v408
  %570 = vmatprep.subr.bf16.mxu0 0
  %571 = vmatpush2.bf16.msra.mxu0 %v407
  %572 = vmatprep.subr.bf16.mxu0 0
  %573 = vmatpush2.bf16.msra.mxu0 %v406
  %574 = vmatprep.mubr.bf16.mxu0 %v196
  %575 = vmatmul.mubr.bf16.gmra.mxu0 %v195
  %v576 = vpop.f32.mrf.mxu0
  %v577 = vadd.f32 %v505, %v576
  %v578 = vpop.f32.mrf.mxu0
  %v579 = vpop.f32.mrf.mxu0
  %v580 = vadd.f32 %v508, %v579
  %v581 = vpop.f32.mrf.mxu0
  %582 = vmatprep.mubr.bf16.mxu0 %v201
  %583 = vmatmul.mubr.bf16.gmra.mxu0 %v200
  %v584 = vpop.f32.mrf.mxu0
  %v585 = vadd.f32 %v513, %v584
  %v586 = vpop.f32.mrf.mxu0
  %v587 = vpop.f32.mrf.mxu0
  %v588 = vadd.f32 %v516, %v587
  %v589 = vpop.f32.mrf.mxu0
  %590 = vmatprep.mubr.bf16.mxu0 %v206
  %591 = vmatmul.mubr.bf16.gmra.mxu0 %v205
  %v592 = vpop.f32.mrf.mxu0
  %v593 = vadd.f32 %v521, %v592
  %v594 = vpop.f32.mrf.mxu0
  %v595 = vpop.f32.mrf.mxu0
  %v596 = vadd.f32 %v524, %v595
  %v597 = vpop.f32.mrf.mxu0
  %598 = vmatprep.mubr.bf16.mxu0 %v211
  %599 = vmatmul.mubr.bf16.gmra.mxu0 %v210
  %v600 = vpop.f32.mrf.mxu0
  %v601 = vadd.f32 %v529, %v600
  %v602 = vpop.f32.mrf.mxu0
  %v603 = vpop.f32.mrf.mxu0
  %v604 = vadd.f32 %v532, %v603
  %v605 = vpop.f32.mrf.mxu0
  %606 = vmatprep.mubr.bf16.mxu0 %v216
  %607 = vmatmul.mubr.bf16.gmra.mxu0 %v215
  %v608 = vpop.f32.mrf.mxu0
  %v609 = vadd.f32 %v537, %v608
  %v610 = vpop.f32.mrf.mxu0
  %v611 = vpop.f32.mrf.mxu0
  %v612 = vpop.f32.mrf.mxu0
  %613 = vdwg.mxu0
  %614 = vmatprep.subr.bf16.mxu0 0
  %615 = vmatpush1.bf16.msra.mxu0 0
  %616 = vmatprep.subr.bf16.mxu0 0
  %617 = vmatpush1.bf16.msra.mxu0 0
  %618 = vmatprep.subr.bf16.mxu0 0
  %619 = vmatpush1.bf16.msra.mxu0 0
  %620 = vmatprep.subr.bf16.mxu0 0
  %621 = vmatpush1.bf16.msra.mxu0 0
  %622 = vmatprep.subr.bf16.mxu0 0
  %623 = vmatpush1.bf16.msra.mxu0 %v417
  %624 = vmatprep.subr.bf16.mxu0 0
  %625 = vmatpush1.bf16.msra.mxu0 %v416
  %626 = vmatprep.subr.bf16.mxu0 0
  %627 = vmatpush1.bf16.msra.mxu0 %v415
  %628 = vmatprep.subr.bf16.mxu0 0
  %629 = vmatpush1.bf16.msra.mxu0 %v414
  %630 = vmatprep.subr.bf16.mxu0 0
  %631 = vmatpush2.bf16.msra.mxu0 0
  %632 = vmatprep.subr.bf16.mxu0 0
  %633 = vmatpush2.bf16.msra.mxu0 0
  %634 = vmatprep.subr.bf16.mxu0 0
  %635 = vmatpush2.bf16.msra.mxu0 0
  %636 = vmatprep.subr.bf16.mxu0 0
  %637 = vmatpush2.bf16.msra.mxu0 0
  %638 = vmatprep.subr.bf16.mxu0 0
  %639 = vmatpush2.bf16.msra.mxu0 0
  %640 = vmatprep.subr.bf16.mxu0 0
  %641 = vmatpush2.bf16.msra.mxu0 0
  %642 = vmatprep.subr.bf16.mxu0 0
  %643 = vmatpush2.bf16.msra.mxu0 0
  %644 = vmatprep.subr.bf16.mxu0 0
  %645 = vmatpush2.bf16.msra.mxu0 0
  %646 = vmatprep.mubr.bf16.mxu0 0
  %647 = vmatmul.mubr.bf16.gmra.mxu0 %v456
  %v648 = vpop.f32.mrf.mxu0
  %v649 = vadd.f32 %v577, %v648
  %v650 = vpop.f32.mrf.mxu0
  %v651 = vpop.f32.mrf.mxu0
  %v652 = vadd.f32 %v580, %v651
  %v653 = vpop.f32.mrf.mxu0
  %654 = vmatprep.mubr.bf16.mxu0 0
  %655 = vmatmul.mubr.bf16.gmra.mxu0 %v459
  %v656 = vpop.f32.mrf.mxu0
  %v657 = vadd.f32 %v585, %v656
  %v658 = vpop.f32.mrf.mxu0
  %v659 = vpop.f32.mrf.mxu0
  %v660 = vadd.f32 %v588, %v659
  %v661 = vpop.f32.mrf.mxu0
  %662 = vmatprep.mubr.bf16.mxu0 0
  %663 = vmatmul.mubr.bf16.gmra.mxu0 %v462
  %v664 = vpop.f32.mrf.mxu0
  %v665 = vadd.f32 %v593, %v664
  %v666 = vpop.f32.mrf.mxu0
  %v667 = vpop.f32.mrf.mxu0
  %v668 = vadd.f32 %v596, %v667
  %v669 = vpop.f32.mrf.mxu0
  %670 = vmatprep.mubr.bf16.mxu0 0
  %671 = vmatmul.mubr.bf16.gmra.mxu0 %v465
  %v672 = vpop.f32.mrf.mxu0
  %v673 = vadd.f32 %v601, %v672
  %v674 = vpop.f32.mrf.mxu0
  %v675 = vpop.f32.mrf.mxu0
  %v676 = vadd.f32 %v604, %v675
  %v677 = vpop.f32.mrf.mxu0
  %678 = vmatprep.mubr.bf16.mxu0 0
  %679 = vmatmul.mubr.bf16.gmra.mxu0 %v468
  %v680 = vpop.f32.mrf.mxu0
  %v681 = vadd.f32 %v609, %v680
  %v682 = vpop.f32.mrf.mxu0
  %v683 = vpop.f32.mrf.mxu0
  %v684 = vpop.f32.mrf.mxu0
  %685 = vdwg.mxu0
  %v686 = vmax.f32 %v649, 0.0
  %v687 = vmax.f32 %v652, 0.0
  %v688 = vmax.f32 %v657, 0.0
  %v689 = vmax.f32 %v660, 0.0
  %v690 = vmax.f32 %v665, 0.0
  %v691 = vmax.f32 %v668, 0.0
  %v692 = vmax.f32 %v673, 0.0
  %v693 = vmax.f32 %v676, 0.0
  %v694 = vmax.f32 %v681, 0.0
  %695 = vst [vmem:[%s3] sm:$0xff] %v686
  %696 = vst [vmem:[%s3 + $0x8] sm:$0xff] %v687
  %697 = vst [vmem:[%s3 + $0x10] sm:$0xff] %v688
  %698 = vst [vmem:[%s3 + $0x18] sm:$0xff] %v689
  %699 = vst [vmem:[%s3 + $0x20] sm:$0xff] %v690
  %700 = vst [vmem:[%s3 + $0x28] sm:$0xff] %v691
  %701 = vst [vmem:[%s3 + $0x30] sm:$0xff] %v692
  %702 = vst [vmem:[%s3 + $0x38] sm:$0xff] %v693
  %703 = vst [vmem:[%s3 + $0x40] sm:$0xff] %v694
  // Predicated region
  $region14: #{dueling_qnet_forward_pallas.6} parent=0 // pred_check
    _
  $region15: #{dueling_qnet_forward_pallas.6} parent=0 // pred_check_branch
    %705 = sbr.rel (0) target = $region17
  $region16: #{dueling_qnet_forward_pallas.6} parent=0 // pred_region
    _
  $region17: #{dueling_qnet_forward_pallas.6} parent=0 // pred_fallthru
    _
  // Predicated region
  $region18: #{dueling_qnet_forward_pallas.6} parent=0 // pred_check
    _
  $region19: #{dueling_qnet_forward_pallas.6} parent=0 // pred_check_branch
    %707 = sbr.rel (0) target = $region21
  $region20: #{dueling_qnet_forward_pallas.6} parent=0 // pred_region
    _
  $region21: #{dueling_qnet_forward_pallas.6} parent=0 // pred_fallthru
    _

// kernel: dueling_qnet_forward_pallas.7
$region0: #{dueling_qnet_forward_pallas.7}
  #allocation0 [shape = 'u32[]', space=smem, size = 0x4, offset = 0x4, fixed_abs, tag = 'smem constant byte address 0x4 - core index']
  #allocation1 [shape = 'u32[144,128]{1,0:T(1,128)}', space=vmem, size = 0x12000, scoped, tag = 'internal scratch']
  #allocation2 [shape = 'f32[2,512]{1,0:T(2,128)}', space=vmem, size = 0x1000, scoped, tag = 'scratch operand']
  %s0 = inlined_call_operand.vmem [shape: bf16[2,4608], index: 0, kind: input, shape index: {}]
  %s1 = inlined_call_operand.vmem [shape: bf16[4608,512], index: 1, kind: input, shape index: {}]
  %s2 = inlined_call_operand.vmem [shape: f32[2,11], index: 2, kind: input, shape index: {}]
  %s3 = inlined_call_operand.vmem [shape: f32[11,32], index: 3, kind: input, shape index: {}]
  %s4 = inlined_call_operand.vmem [shape: f32[1,32], index: 4, kind: input, shape index: {}]
  %s5 = inlined_call_operand.vmem [shape: f32[1,32], index: 5, kind: input, shape index: {}]
  %s6 = inlined_call_operand.vmem [shape: f32[1,32], index: 6, kind: input, shape index: {}]
  %s7 = inlined_call_operand.vmem [shape: bf16[32,512], index: 7, kind: input, shape index: {}]
  %s8 = inlined_call_operand.vmem [shape: f32[1,512], index: 8, kind: input, shape index: {}]
  %s9 = inlined_call_operand.vmem [shape: f32[512,4], index: 9, kind: input, shape index: {}]
  %s10 = inlined_call_operand.vmem [shape: f32[1,4], index: 10, kind: input, shape index: {}]
  %s11 = inlined_call_operand.hbm [shape: f32[2,3], index: 11, kind: output, shape index: {}]
  %s12 = sld [smem:[#allocation0]]
  $region85: #{dueling_qnet_forward_pallas.7} parent=0
    _
  %s14 = ssub.s32 1, %s12
  %s15 = scalar_select 0, %s14, %s12
  $region1: #{dueling_qnet_forward_pallas.7} parent=0
    #allocation3 [shape = 'u8[1024]{0}', space=vmem, size = 0x400, scoped, tag = 'output window, operand 0, single buffered']
    #allocation4 [shape = 's32[2]{0}', space=sflag, size = 0x8, scoped, tag = 'scoped memory for dueling_qnet_forward_pallas.7']
    %16 = vsyncpa [#allocation4], 0
    loop: start=0, step=1, limit=6
    $region2: #{dueling_qnet_forward_pallas.7} parent=1 // loop_pre_header
      _
    $region3: #{dueling_qnet_forward_pallas.7} parent=1 // loop_header
      %s18 = sphi 0, %s22
      %p19 = scmp.ge.s32.totalorder %s18, 6
      %s28 = sphi 0, %s30
      %s31 = sphi 0, %s28
      %s32 = sphi 0, %s31
      %s48 = sphi 0, %s32
      %s54 = sphi 0, %s56
      %s57 = sphi 0, %s54
      %s58 = sphi 0, %s57
      %s74 = sphi 0, %s58
      %s78 = sphi 0, %s78
      %s80 = sphi 0, %s78
      %s81 = sphi 0, %s80
      %s95 = sphi 0, %s81
      %s99 = sphi 0, %s99
      %s101 = sphi 0, %s99
      %s102 = sphi 0, %s101
      %s116 = sphi 0, %s102
      %s120 = sphi 0, %s120
      %s122 = sphi 0, %s120
      %s123 = sphi 0, %s122
      %s137 = sphi 0, %s123
      %s141 = sphi 0, %s141
      %s143 = sphi 0, %s141
      %s144 = sphi 0, %s143
      %s158 = sphi 0, %s144
      %s162 = sphi 0, %s162
      %s164 = sphi 0, %s162
      %s165 = sphi 0, %s164
      %s179 = sphi 0, %s165
      %s183 = sphi 0, %s183
      %s185 = sphi 0, %s183
      %s186 = sphi 0, %s185
      %s200 = sphi 0, %s186
      %s204 = sphi 0, %s204
      %s206 = sphi 0, %s204
      %s207 = sphi 0, %s206
      %s221 = sphi 0, %s207
      %s225 = sphi 0, %s225
      %s227 = sphi 0, %s225
      %s228 = sphi 0, %s227
      %s242 = sphi 0, %s228
      %s246 = sphi 0, %s246
      %s248 = sphi 0, %s246
      %s249 = sphi 0, %s248
      %s263 = sphi 0, %s249
      %s267 = sphi 0, %s267
      %s269 = sphi 0, %s267
      %s270 = sphi 0, %s269
      %s284 = sphi 0, %s270
    $region4: #{dueling_qnet_forward_pallas.7} parent=1 // loop_header_branch
      %21 = sbr.rel (%p19) target = $region8
    $region5: #{dueling_qnet_forward_pallas.7} parent=1 // loop_body
      %s23 = ssub.s32 %s18, 1
      %s24 = ssub.s32 %s18, 2
      %s25 = sadd.s32 %s18, 1
      %s26 = ssub.s32 %s18, %s25
      %p27 = scmp.eq.s32.totalorder %s26, 0
      %s29 = sadd.s32 %s28, 1
      %s30 = scalar_select %p27, %s28, %s29
      %p33 = pneg %p27
      %p34 = scmp.eq.s32.totalorder %s18, 3
      %p35 = por %p33, %p34
      %p36 = scmp.ne.s32.totalorder %s28, %s31
      %p37 = scmp.eq.s32.totalorder %s18, 0
      %p38 = por %p36, %p37
      %p39 = scmp.ne.s32.totalorder %s28, %s31
      %p40 = scmp.eq.s32.totalorder %s23, 3
      %p41 = por %p39, %p40
      %p42 = scmp.ne.s32.totalorder %s31, %s32
      %p43 = scmp.eq.s32.totalorder %s23, 0
      %p44 = por %p42, %p43
      %p45 = scmp.ne.s32.totalorder %s31, %s32
      %p46 = scmp.eq.s32.totalorder %s24, 3
      %p47 = por %p45, %p46
      %p49 = scmp.ne.s32.totalorder %s32, %s48
      %p50 = scmp.eq.s32.totalorder %s24, 0
      %p51 = por %p49, %p50
      %s52 = ssub.s32 %s18, %s25
      %p53 = scmp.eq.s32.totalorder %s52, 0
      %s55 = sadd.s32 %s54, 1
      %s56 = scalar_select %p53, %s54, %s55
      %p59 = pneg %p53
      %p60 = scmp.eq.s32.totalorder %s18, 3
      %p61 = por %p59, %p60
      %p62 = scmp.ne.s32.totalorder %s54, %s57
      %p63 = scmp.eq.s32.totalorder %s18, 0
      %p64 = por %p62, %p63
      %p65 = scmp.ne.s32.totalorder %s54, %s57
      %p66 = scmp.eq.s32.totalorder %s23, 3
      %p67 = por %p65, %p66
      %p68 = scmp.ne.s32.totalorder %s57, %s58
      %p69 = scmp.eq.s32.totalorder %s23, 0
      %p70 = por %p68, %p69
      %p71 = scmp.ne.s32.totalorder %s57, %s58
      %p72 = scmp.eq.s32.totalorder %s24, 3
      %p73 = por %p71, %p72
      %p75 = scmp.ne.s32.totalorder %s58, %s74
      %p76 = scmp.eq.s32.totalorder %s24, 0
      %p77 = por %p75, %p76
      %s79 = sadd.s32 %s78, 1
      %p82 = scmp.eq.s32.totalorder %s18, 3
      %p83 = scmp.ne.s32.totalorder %s78, %s80
      %p84 = scmp.eq.s32.totalorder %s18, 0
      %p85 = por %p83, %p84
      %p86 = scmp.ne.s32.totalorder %s78, %s80
      %p87 = scmp.eq.s32.totalorder %s23, 3
      %p88 = por %p86, %p87
      %p89 = scmp.ne.s32.totalorder %s80, %s81
      %p90 = scmp.eq.s32.totalorder %s23, 0
      %p91 = por %p89, %p90
      %p92 = scmp.ne.s32.totalorder %s80, %s81
      %p93 = scmp.eq.s32.totalorder %s24, 3
      %p94 = por %p92, %p93
      %p96 = scmp.ne.s32.totalorder %s81, %s95
      %p97 = scmp.eq.s32.totalorder %s24, 0
      %p98 = por %p96, %p97
      %s100 = sadd.s32 %s99, 1
      %p103 = scmp.eq.s32.totalorder %s18, 3
      %p104 = scmp.ne.s32.totalorder %s99, %s101
      %p105 = scmp.eq.s32.totalorder %s18, 0
      %p106 = por %p104, %p105
      %p107 = scmp.ne.s32.totalorder %s99, %s101
      %p108 = scmp.eq.s32.totalorder %s23, 3
      %p109 = por %p107, %p108
      %p110 = scmp.ne.s32.totalorder %s101, %s102
      %p111 = scmp.eq.s32.totalorder %s23, 0
      %p112 = por %p110, %p111
      %p113 = scmp.ne.s32.totalorder %s101, %s102
      %p114 = scmp.eq.s32.totalorder %s24, 3
      %p115 = por %p113, %p114
      %p117 = scmp.ne.s32.totalorder %s102, %s116
      %p118 = scmp.eq.s32.totalorder %s24, 0
      %p119 = por %p117, %p118
      %s121 = sadd.s32 %s120, 1
      %p124 = scmp.eq.s32.totalorder %s18, 3
      %p125 = scmp.ne.s32.totalorder %s120, %s122
      %p126 = scmp.eq.s32.totalorder %s18, 0
      %p127 = por %p125, %p126
      %p128 = scmp.ne.s32.totalorder %s120, %s122
      %p129 = scmp.eq.s32.totalorder %s23, 3
      %p130 = por %p128, %p129
      %p131 = scmp.ne.s32.totalorder %s122, %s123
      %p132 = scmp.eq.s32.totalorder %s23, 0
      %p133 = por %p131, %p132
      %p134 = scmp.ne.s32.totalorder %s122, %s123
      %p135 = scmp.eq.s32.totalorder %s24, 3
      %p136 = por %p134, %p135
      %p138 = scmp.ne.s32.totalorder %s123, %s137
      %p139 = scmp.eq.s32.totalorder %s24, 0
      %p140 = por %p138, %p139
      %s142 = sadd.s32 %s141, 1
      %p145 = scmp.eq.s32.totalorder %s18, 3
      %p146 = scmp.ne.s32.totalorder %s141, %s143
      %p147 = scmp.eq.s32.totalorder %s18, 0
      %p148 = por %p146, %p147
      %p149 = scmp.ne.s32.totalorder %s141, %s143
      %p150 = scmp.eq.s32.totalorder %s23, 3
      %p151 = por %p149, %p150
      %p152 = scmp.ne.s32.totalorder %s143, %s144
      %p153 = scmp.eq.s32.totalorder %s23, 0
      %p154 = por %p152, %p153
      %p155 = scmp.ne.s32.totalorder %s143, %s144
      %p156 = scmp.eq.s32.totalorder %s24, 3
      %p157 = por %p155, %p156
      %p159 = scmp.ne.s32.totalorder %s144, %s158
      %p160 = scmp.eq.s32.totalorder %s24, 0
      %p161 = por %p159, %p160
      %s163 = sadd.s32 %s162, 1
      %p166 = scmp.eq.s32.totalorder %s18, 3
      %p167 = scmp.ne.s32.totalorder %s162, %s164
      %p168 = scmp.eq.s32.totalorder %s18, 0
      %p169 = por %p167, %p168
      %p170 = scmp.ne.s32.totalorder %s162, %s164
      %p171 = scmp.eq.s32.totalorder %s23, 3
      %p172 = por %p170, %p171
      %p173 = scmp.ne.s32.totalorder %s164, %s165
      %p174 = scmp.eq.s32.totalorder %s23, 0
      %p175 = por %p173, %p174
      %p176 = scmp.ne.s32.totalorder %s164, %s165
      %p177 = scmp.eq.s32.totalorder %s24, 3
      %p178 = por %p176, %p177
      %p180 = scmp.ne.s32.totalorder %s165, %s179
      %p181 = scmp.eq.s32.totalorder %s24, 0
      %p182 = por %p180, %p181
      %s184 = sadd.s32 %s183, 1
      %p187 = scmp.eq.s32.totalorder %s18, 3
      %p188 = scmp.ne.s32.totalorder %s183, %s185
      %p189 = scmp.eq.s32.totalorder %s18, 0
      %p190 = por %p188, %p189
      %p191 = scmp.ne.s32.totalorder %s183, %s185
      %p192 = scmp.eq.s32.totalorder %s23, 3
      %p193 = por %p191, %p192
      %p194 = scmp.ne.s32.totalorder %s185, %s186
      %p195 = scmp.eq.s32.totalorder %s23, 0
      %p196 = por %p194, %p195
      %p197 = scmp.ne.s32.totalorder %s185, %s186
      %p198 = scmp.eq.s32.totalorder %s24, 3
      %p199 = por %p197, %p198
      %p201 = scmp.ne.s32.totalorder %s186, %s200
      %p202 = scmp.eq.s32.totalorder %s24, 0
      %p203 = por %p201, %p202
      %s205 = sadd.s32 %s204, 1
      %p208 = scmp.eq.s32.totalorder %s18, 3
      %p209 = scmp.ne.s32.totalorder %s204, %s206
      %p210 = scmp.eq.s32.totalorder %s18, 0
      %p211 = por %p209, %p210
      %p212 = scmp.ne.s32.totalorder %s204, %s206
      %p213 = scmp.eq.s32.totalorder %s23, 3
      %p214 = por %p212, %p213
      %p215 = scmp.ne.s32.totalorder %s206, %s207
      %p216 = scmp.eq.s32.totalorder %s23, 0
      %p217 = por %p215, %p216
      %p218 = scmp.ne.s32.totalorder %s206, %s207
      %p219 = scmp.eq.s32.totalorder %s24, 3
      %p220 = por %p218, %p219
      %p222 = scmp.ne.s32.totalorder %s207, %s221
      %p223 = scmp.eq.s32.totalorder %s24, 0
      %p224 = por %p222, %p223
      %s226 = sadd.s32 %s225, 1
      %p229 = scmp.eq.s32.totalorder %s18, 3
      %p230 = scmp.ne.s32.totalorder %s225, %s227
      %p231 = scmp.eq.s32.totalorder %s18, 0
      %p232 = por %p230, %p231
      %p233 = scmp.ne.s32.totalorder %s225, %s227
      %p234 = scmp.eq.s32.totalorder %s23, 3
      %p235 = por %p233, %p234
      %p236 = scmp.ne.s32.totalorder %s227, %s228
      %p237 = scmp.eq.s32.totalorder %s23, 0
      %p238 = por %p236, %p237
      %p239 = scmp.ne.s32.totalorder %s227, %s228
      %p240 = scmp.eq.s32.totalorder %s24, 3
      %p241 = por %p239, %p240
      %p243 = scmp.ne.s32.totalorder %s228, %s242
      %p244 = scmp.eq.s32.totalorder %s24, 0
      %p245 = por %p243, %p244
      %s247 = sadd.s32 %s246, 1
      %p250 = scmp.eq.s32.totalorder %s18, 3
      %p251 = scmp.ne.s32.totalorder %s246, %s248
      %p252 = scmp.eq.s32.totalorder %s18, 0
      %p253 = por %p251, %p252
      %p254 = scmp.ne.s32.totalorder %s246, %s248
      %p255 = scmp.eq.s32.totalorder %s23, 3
      %p256 = por %p254, %p255
      %p257 = scmp.ne.s32.totalorder %s248, %s249
      %p258 = scmp.eq.s32.totalorder %s23, 0
      %p259 = por %p257, %p258
      %p260 = scmp.ne.s32.totalorder %s248, %s249
      %p261 = scmp.eq.s32.totalorder %s24, 3
      %p262 = por %p260, %p261
      %p264 = scmp.ne.s32.totalorder %s249, %s263
      %p265 = scmp.eq.s32.totalorder %s24, 0
      %p266 = por %p264, %p265
      %s268 = sadd.s32 %s267, 1
      %p271 = scmp.eq.s32.totalorder %s18, 3
      %p272 = scmp.ne.s32.totalorder %s267, %s269
      %p273 = scmp.eq.s32.totalorder %s18, 0
      %p274 = por %p272, %p273
      %p275 = scmp.ne.s32.totalorder %s267, %s269
      %p276 = scmp.eq.s32.totalorder %s23, 3
      %p277 = por %p275, %p276
      %p278 = scmp.ne.s32.totalorder %s269, %s270
      %p279 = scmp.eq.s32.totalorder %s23, 0
      %p280 = por %p278, %p279
      %p281 = scmp.ne.s32.totalorder %s269, %s270
      %p282 = scmp.eq.s32.totalorder %s24, 3
      %p283 = por %p281, %p282
      %p285 = scmp.ne.s32.totalorder %s270, %s284
      %p286 = scmp.eq.s32.totalorder %s24, 0
      %p287 = por %p285, %p286
      %p288 = scmp.le.s32.totalorder 1, %s18
      %p289 = scmp.lt.s32.totalorder %s18, 5
      %p290 = pnand %p288, %p289
      %p291 = pneg %p290
      // Predicated region
      $region9: #{dueling_qnet_forward_pallas.7} parent=5 // pred_check
        _
      $region10: #{dueling_qnet_forward_pallas.7} parent=5 // pred_check_branch
        %293 = sbr.rel (%p290) target = $region12
      $region11: #{dueling_qnet_forward_pallas.7} parent=5 // pred_region
        %s294 = ssub.s32 %s18, 1
        // Predicated region
        $region13: #{dueling_qnet_forward_pallas.7} parent=11 // pred_check
          %p295 = pneg %p91
        $region14: #{dueling_qnet_forward_pallas.7} parent=11 // pred_check_branch
          %297 = sbr.rel (%p295) target = $region16
        $region15: #{dueling_qnet_forward_pallas.7} parent=11 // pred_region
          _
        $region16: #{dueling_qnet_forward_pallas.7} parent=11 // pred_fallthru
          _
        // Predicated region
        $region17: #{dueling_qnet_forward_pallas.7} parent=11 // pred_check
          %p298 = pneg %p112
        $region18: #{dueling_qnet_forward_pallas.7} parent=11 // pred_check_branch
          %300 = sbr.rel (%p298) target = $region20
        $region19: #{dueling_qnet_forward_pallas.7} parent=11 // pred_region
          _
        $region20: #{dueling_qnet_forward_pallas.7} parent=11 // pred_fallthru
          _
        // Predicated region
        $region21: #{dueling_qnet_forward_pallas.7} parent=11 // pred_check
          %p301 = pneg %p133
        $region22: #{dueling_qnet_forward_pallas.7} parent=11 // pred_check_branch
          %303 = sbr.rel (%p301) target = $region24
        $region23: #{dueling_qnet_forward_pallas.7} parent=11 // pred_region
          _
        $region24: #{dueling_qnet_forward_pallas.7} parent=11 // pred_fallthru
          _
        // Predicated region
        $region25: #{dueling_qnet_forward_pallas.7} parent=11 // pred_check
          %p304 = pneg %p154
        $region26: #{dueling_qnet_forward_pallas.7} parent=11 // pred_check_branch
          %306 = sbr.rel (%p304) target = $region28
        $region27: #{dueling_qnet_forward_pallas.7} parent=11 // pred_region
          _
        $region28: #{dueling_qnet_forward_pallas.7} parent=11 // pred_fallthru
          _
        // Predicated region
        $region29: #{dueling_qnet_forward_pallas.7} parent=11 // pred_check
          %p307 = pneg %p175
        $region30: #{dueling_qnet_forward_pallas.7} parent=11 // pred_check_branch
          %309 = sbr.rel (%p307) target = $region32
        $region31: #{dueling_qnet_forward_pallas.7} parent=11 // pred_region
          _
        $region32: #{dueling_qnet_forward_pallas.7} parent=11 // pred_fallthru
          _
        // Predicated region
        $region33: #{dueling_qnet_forward_pallas.7} parent=11 // pred_check
          %p310 = pneg %p196
        $region34: #{dueling_qnet_forward_pallas.7} parent=11 // pred_check_branch
          %312 = sbr.rel (%p310) target = $region36
        $region35: #{dueling_qnet_forward_pallas.7} parent=11 // pred_region
          _
        $region36: #{dueling_qnet_forward_pallas.7} parent=11 // pred_fallthru
          _
        // Predicated region
        $region37: #{dueling_qnet_forward_pallas.7} parent=11 // pred_check
          %p313 = pneg %p217
        $region38: #{dueling_qnet_forward_pallas.7} parent=11 // pred_check_branch
          %315 = sbr.rel (%p313) target = $region40
        $region39: #{dueling_qnet_forward_pallas.7} parent=11 // pred_region
          _
        $region40: #{dueling_qnet_forward_pallas.7} parent=11 // pred_fallthru
          _
        // Predicated region
        $region41: #{dueling_qnet_forward_pallas.7} parent=11 // pred_check
          %p316 = pneg %p238
        $region42: #{dueling_qnet_forward_pallas.7} parent=11 // pred_check_branch
          %318 = sbr.rel (%p316) target = $region44
        $region43: #{dueling_qnet_forward_pallas.7} parent=11 // pred_region
          _
        $region44: #{dueling_qnet_forward_pallas.7} parent=11 // pred_fallthru
          _
        // Predicated region
        $region45: #{dueling_qnet_forward_pallas.7} parent=11 // pred_check
          %p319 = pneg %p259
        $region46: #{dueling_qnet_forward_pallas.7} parent=11 // pred_check_branch
          %321 = sbr.rel (%p319) target = $region48
        $region47: #{dueling_qnet_forward_pallas.7} parent=11 // pred_region
          _
        $region48: #{dueling_qnet_forward_pallas.7} parent=11 // pred_fallthru
          _
      $region12: #{dueling_qnet_forward_pallas.7} parent=5 // pred_fallthru
        _
      %p322 = scmp.lt.s32.totalorder %s18, 4
      // Predicated region
      $region49: #{dueling_qnet_forward_pallas.7} parent=5 // pred_check
        %p323 = pneg %p322
      $region50: #{dueling_qnet_forward_pallas.7} parent=5 // pred_check_branch
        %325 = sbr.rel (%p323) target = $region52
      $region51: #{dueling_qnet_forward_pallas.7} parent=5 // pred_region
        // Predicated region
        $region53: #{dueling_qnet_forward_pallas.7} parent=51 // pred_check
          %p326 = pneg %p38
        $region54: #{dueling_qnet_forward_pallas.7} parent=51 // pred_check_branch
          %328 = sbr.rel (%p326) target = $region56
        $region55: #{dueling_qnet_forward_pallas.7} parent=51 // pred_region
          %s329 = smul.u32 9, %s18
          %p330 = scmp.lt.s32.totalorder %s329, 35
          %s331 = scalar_select %p330, %s329, 35
          %s332 = scalar_lea.vmem %s0, %s331
          %s333 = smul.u32 9, %s18
        $region56: #{dueling_qnet_forward_pallas.7} parent=51 // pred_fallthru
          _
        // Predicated region
        $region57: #{dueling_qnet_forward_pallas.7} parent=51 // pred_check
          %p334 = pneg %p64
        $region58: #{dueling_qnet_forward_pallas.7} parent=51 // pred_check_branch
          %336 = sbr.rel (%p334) target = $region60
        $region59: #{dueling_qnet_forward_pallas.7} parent=51 // pred_region
          %s337 = smul.u32 144, %s18
          %p338 = scmp.lt.s32.totalorder %s337, 575
          %s339 = scalar_select %p338, %s337, 575
          %s340 = smul.addr %s339, 4
          %s341 = smul.addr %s340, 4
          %s342 = scalar_lea.vmem %s1, %s341
          %s343 = smul.u32 144, %s18
        $region60: #{dueling_qnet_forward_pallas.7} parent=51 // pred_fallthru
          _
      $region52: #{dueling_qnet_forward_pallas.7} parent=5 // pred_fallthru
        _
      %p344 = scmp.le.s32.totalorder 1, %s18
      %p345 = scmp.lt.s32.totalorder %s18, 5
      %p346 = pnand %p344, %p345
      %p347 = pneg %p346
      // Predicated region
      $region61: #{dueling_qnet_forward_pallas.7} parent=5 // pred_check
        _
      $region62: #{dueling_qnet_forward_pallas.7} parent=5 // pred_check_branch
        %349 = sbr.rel (%p346) target = $region64
      $region63: #{dueling_qnet_forward_pallas.7} parent=5 // pred_region
        %s350 = ssub.s32 %s18, 1
        %s351 = smul.u32 9, %s23
        %p352 = scmp.lt.s32.totalorder %s351, 35
        %s353 = scalar_select %p352, %s351, 35
        %s354 = scalar_lea.vmem %s0, %s353
        %p355 = pneg %p44
        %p356 = pneg %p41
        %s357 = smul.u32 144, %s23
        %p358 = scmp.lt.s32.totalorder %s357, 575
        %s359 = scalar_select %p358, %s357, 575
        %s360 = smul.addr %s359, 4
        %s361 = smul.addr %s360, 4
        %s362 = scalar_lea.vmem %s1, %s361
        %p363 = pneg %p70
        %p364 = pneg %p67
        %p365 = pneg %p91
        %p366 = pneg %p88
        %p367 = pneg %p112
        %p368 = pneg %p109
        %p369 = pneg %p133
        %p370 = pneg %p130
        %p371 = pneg %p154
        %p372 = pneg %p151
        %p373 = pneg %p175
        %p374 = pneg %p172
        %p375 = pneg %p196
        %p376 = pneg %p193
        %p377 = pneg %p217
        %p378 = pneg %p214
        %p379 = pneg %p238
        %p380 = pneg %p235
        %p381 = pneg %p259
        %p382 = pneg %p256
        %p383 = pneg %p280
        %p384 = pneg %p277
        %s385 = smul.u32 9, %s23
        %p386 = scmp.lt.s32.totalorder %s385, 35
        %s387 = scalar_select %p386, %s385, 35
        %s388 = scalar_lea.vmem %s0, %s387
        %s389 = smul.u32 9, %s23
        %s390 = smul.u32 144, %s23
        %p391 = scmp.lt.s32.totalorder %s390, 575
        %s392 = scalar_select %p391, %s390, 575
        %s393 = smul.addr %s392, 4
        %s394 = smul.addr %s393, 4
        %s395 = scalar_lea.vmem %s1, %s394
        %s396 = smul.u32 144, %s23
        %p398 = scmp.eq.s32.totalorder %s23, 0
        // Predicated region
        $region65: #{dueling_qnet_forward_pallas.7} parent=63 // pred_check
          %p399 = pneg %p398
        $region66: #{dueling_qnet_forward_pallas.7} parent=63 // pred_check_branch
          %401 = sbr.rel (%p399) target = $region68
        $region67: #{dueling_qnet_forward_pallas.7} parent=63 // pred_region
          %v402 = vld [vmem:[%s2] sm:$0x3]
          %v403 = vld [vmem:[%s3] sm:$0xff]
          %v404 = vld [vmem:[%s3 + $0x8] sm:$0x7]
          %v405 = vld [vmem:[%s4] sm:$0x1]
          %v407 = vlaneseq
          %v408 = vshrl.u32 %v407, 7
          %v409 = vsub.s32 0, %v408
          %v410 = vrot.slane %v405, %v409
          %vm412 = vcmask 89088
          %v414 = vsel %vm412, %v402, 0
          %vm416 = vcmask 1042432
          %v418 = vsel %vm416, %v404, 0
          %420 = vmatprep.subr.mxu0 0.0
          %421 = vmatpush1.msra.mxu0 0.0
          %422 = vmatprep.subr.mxu0 0.0
          %423 = vmatpush1.msra.mxu0 0.0
          %424 = vmatprep.subr.mxu0 0.0
          %425 = vmatpush1.msra.mxu0 0.0
          %426 = vmatprep.subr.mxu0 0.0
          %427 = vmatpush1.msra.mxu0 0.0
          %428 = vmatprep.subr.mxu0 0.0
          %429 = vmatpush1.msra.mxu0 0.0
          %430 = vmatprep.subr.mxu0 0.0
          %431 = vmatpush1.msra.mxu0 0.0
          %432 = vmatprep.subr.mxu0 0.0
          %433 = vmatpush1.msra.mxu0 0.0
          %434 = vmatprep.subr.mxu0 0.0
          %435 = vmatpush1.msra.mxu0 0.0
          %436 = vmatprep.subr.mxu0 0.0
          %437 = vmatpush1.msra.mxu0 0.0
          %438 = vmatprep.subr.mxu0 0.0
          %439 = vmatpush1.msra.mxu0 0.0
          %440 = vmatprep.subr.mxu0 0.0
          %441 = vmatpush1.msra.mxu0 0.0
          %442 = vmatprep.subr.mxu0 0.0
          %443 = vmatpush1.msra.mxu0 0.0
          %444 = vmatprep.subr.mxu0 0.0
          %445 = vmatpush1.msra.mxu0 0.0
          %446 = vmatprep.subr.mxu0 0.0
          %447 = vmatpush1.msra.mxu0 0.0
          %448 = vmatprep.subr.mxu0 0.0
          %449 = vmatpush1.msra.mxu0 %v418
          %450 = vmatprep.subr.mxu0 0.0
          %451 = vmatpush1.msra.mxu0 %v403
          %452 = vmatprep.subr.mxu0 0.0
          %453 = vmatpush2.msra.mxu0 0.0
          %454 = vmatprep.subr.mxu0 0.0
          %455 = vmatpush2.msra.mxu0 0.0
          %456 = vmatprep.subr.mxu0 0.0
          %457 = vmatpush2.msra.mxu0 0.0
          %458 = vmatprep.subr.mxu0 0.0
          %459 = vmatpush2.msra.mxu0 0.0
          %460 = vmatprep.subr.mxu0 0.0
          %461 = vmatpush2.msra.mxu0 0.0
          %462 = vmatprep.subr.mxu0 0.0
          %463 = vmatpush2.msra.mxu0 0.0
          %464 = vmatprep.subr.mxu0 0.0
          %465 = vmatpush2.msra.mxu0 0.0
          %466 = vmatprep.subr.mxu0 0.0
          %467 = vmatpush2.msra.mxu0 0.0
          %468 = vmatprep.subr.mxu0 0.0
          %469 = vmatpush2.msra.mxu0 0.0
          %470 = vmatprep.subr.mxu0 0.0
          %471 = vmatpush2.msra.mxu0 0.0
          %472 = vmatprep.subr.mxu0 0.0
          %473 = vmatpush2.msra.mxu0 0.0
          %474 = vmatprep.subr.mxu0 0.0
          %475 = vmatpush2.msra.mxu0 0.0
          %476 = vmatprep.subr.mxu0 0.0
          %477 = vmatpush2.msra.mxu0 0.0
          %478 = vmatprep.subr.mxu0 0.0
          %479 = vmatpush2.msra.mxu0 0.0
          %480 = vmatprep.subr.mxu0 0.0
          %481 = vmatpush2.msra.mxu0 0.0
          %482 = vmatprep.subr.mxu0 0.0
          %483 = vmatpush2.msra.mxu0 0.0
          %484 = vmatprep.mubr.f32.mxu0 0.0
          %485 = vmatmul.mubr.f32.gmra.mxu0 %v414
          %v486 = vpop.f32.mrf.mxu0
          %v487 = vadd.f32 %v410, %v486
          %v488 = vpop.f32.mrf.mxu0
          %489 = vdwg.mxu0
          %vm490 = vcmask 254976
          %v491 = vsel %vm490, %v487, 0.0
          %492 = vadd.xlane.f32.xlu0 %v491
          %v493 = vpop.xlane.xlu0 %492
          %v494 = vrcp.pop 32.0
          %v495 = vmul.f32 %v493, %v494
          %v496 = vsub.f32 %v487, %v495
          %v497 = vmul.f32 %v496, %v496
          %v498 = vsel %vm490, %v497, 0.0
          %499 = vadd.xlane.f32.xlu0 %v498
          %v500 = vpop.xlane.xlu0 %499
          %v501 = vmul.f32 %v500, %v494
          %v502 = vadd.f32 %v501, 1e-05
          %v503 = vrsqrt.pop %v502
          %v504 = vmul.f32 %v496, %v503
          %v505 = vld [vmem:[%s5] sm:$0x1]
          %v507 = vlaneseq
          %v508 = vshrl.u32 %v507, 7
          %v509 = vsub.s32 0, %v508
          %v510 = vrot.slane %v505, %v509
          %v512 = vmul.f32 %v504, %v510
          %v513 = vld [vmem:[%s6] sm:$0x1]
          %v515 = vlaneseq
          %v516 = vshrl.u32 %v515, 7
          %v517 = vsub.s32 0, %v516
          %v518 = vrot.slane %v513, %v517
          %v520 = vadd.f32 %v512, %v518
          %v521 = vmax.f32 %v520, 0.0
          %v522 = vpack.c.bf16 %v521, %v521
          %v523 = vld [vmem:[%s7] sm:$0xff]
          %v524 = vld [vmem:[%s7 + $0x8] sm:$0xff]
          %v525 = vld [vmem:[%s7 + $0x10] sm:$0xff]
          %v526 = vld [vmem:[%s7 + $0x18] sm:$0xff]
          %v527 = vld [vmem:[%s7 + $0x20] sm:$0xff]
          %v528 = vld [vmem:[%s7 + $0x28] sm:$0xff]
          %v529 = vld [vmem:[%s7 + $0x30] sm:$0xff]
          %v530 = vld [vmem:[%s7 + $0x38] sm:$0xff]
          %v531 = vld [vmem:[%s8] sm:$0xf]
          %v533 = vlaneseq
          %v534 = vshrl.u32 %v533, 7
          %v535 = vsub.s32 0, %v534
          %v536 = vrot.slane %v531, %v535
          %v537 = vlaneseq
          %v538 = vshrl.u32 %v537, 7
          %v539 = vsub.s32 1, %v538
          %v540 = vrot.slane %v531, %v539
          %v541 = vlaneseq
          %v542 = vshrl.u32 %v541, 7
          %v543 = vsub.s32 2, %v542
          %v544 = vrot.slane %v531, %v543
          %v545 = vlaneseq
          %v546 = vshrl.u32 %v545, 7
          %v547 = vsub.s32 3, %v546
          %v548 = vrot.slane %v531, %v547
          %v561 = vunpack.c.l.b16 %v523
          %v562 = vunpack.c.h.b16 %v523
          %v563 = vunpack.c.l.b16 %v524
          %v564 = vunpack.c.h.b16 %v524
          %v565 = vunpack.c.l.b16 %v525
          %v566 = vunpack.c.h.b16 %v525
          %v567 = vunpack.c.l.b16 %v526
          %v568 = vunpack.c.h.b16 %v526
          %v569 = vunpack.c.l.b16 %v527
          %v570 = vunpack.c.h.b16 %v527
          %v571 = vunpack.c.l.b16 %v528
          %v572 = vunpack.c.h.b16 %v528
          %v573 = vunpack.c.l.b16 %v529
          %v574 = vunpack.c.h.b16 %v529
          %v575 = vunpack.c.l.b16 %v530
          %v576 = vunpack.c.h.b16 %v530
          %v577 = vpack.c.b16 %v565, %v561
          %v578 = vpack.c.b16 %v566, %v562
          %v579 = vpack.c.b16 %v567, %v563
          %v580 = vpack.c.b16 %v568, %v564
          %v581 = vpack.c.b16 %v573, %v569
          %v582 = vpack.c.b16 %v574, %v570
          %v583 = vpack.c.b16 %v575, %v571
          %v584 = vpack.c.b16 %v576, %v572
          %vm593 = vcmask 261120
          %v595 = vsel %vm593, %v522, 0
          %597 = vmatprep.subr.bf16.mxu0 0
          %598 = vmatpush1.bf16.msra.mxu0 0
          %599 = vmatprep.subr.bf16.mxu0 0
          %600 = vmatpush1.bf16.msra.mxu0 0
          %601 = vmatprep.subr.bf16.mxu0 0
          %602 = vmatpush1.bf16.msra.mxu0 0
          %603 = vmatprep.subr.bf16.mxu0 0
          %604 = vmatpush1.bf16.msra.mxu0 0
          %605 = vmatprep.subr.bf16.mxu0 0
          %606 = vmatpush1.bf16.msra.mxu0 0
          %607 = vmatprep.subr.bf16.mxu0 0
          %608 = vmatpush1.bf16.msra.mxu0 0
          %609 = vmatprep.subr.bf16.mxu0 %v582
          %610 = vmatpush1.bf16.msra.mxu0 %v581
          %611 = vmatprep.subr.bf16.mxu0 %v578
          %612 = vmatpush1.bf16.msra.mxu0 %v577
          %613 = vmatprep.subr.bf16.mxu0 0
          %614 = vmatpush2.bf16.msra.mxu0 0
          %615 = vmatprep.subr.bf16.mxu0 0
          %616 = vmatpush2.bf16.msra.mxu0 0
          %617 = vmatprep.subr.bf16.mxu0 0
          %618 = vmatpush2.bf16.msra.mxu0 0
          %619 = vmatprep.subr.bf16.mxu0 0
          %620 = vmatpush2.bf16.msra.mxu0 0
          %621 = vmatprep.subr.bf16.mxu0 0
          %622 = vmatpush2.bf16.msra.mxu0 0
          %623 = vmatprep.subr.bf16.mxu0 0
          %624 = vmatpush2.bf16.msra.mxu0 0
          %625 = vmatprep.subr.bf16.mxu0 0
          %626 = vmatpush2.bf16.msra.mxu0 0
          %627 = vmatprep.subr.bf16.mxu0 0
          %628 = vmatpush2.bf16.msra.mxu0 0
          %629 = vmatprep.mubr.bf16.mxu0 0
          %630 = vmatmul.mubr.bf16.gmra.mxu0 %v595
          %v631 = vpop.f32.mrf.mxu0
          %v632 = vadd.f32 %v536, %v631
          %v633 = vpop.f32.mrf.mxu0
          %v634 = vadd.f32 %v540, %v633
          %v635 = vpop.f32.mrf.mxu0
          %v636 = vpop.f32.mrf.mxu0
          %637 = vdwg.mxu0
          %638 = vmatprep.subr.bf16.mxu0 0
          %639 = vmatpush1.bf16.msra.mxu0 0
          %640 = vmatprep.subr.bf16.mxu0 0
          %641 = vmatpush1.bf16.msra.mxu0 0
          %642 = vmatprep.subr.bf16.mxu0 0
          %643 = vmatpush1.bf16.msra.mxu0 0
          %644 = vmatprep.subr.bf16.mxu0 0
          %645 = vmatpush1.bf16.msra.mxu0 0
          %646 = vmatprep.subr.bf16.mxu0 0
          %647 = vmatpush1.bf16.msra.mxu0 0
          %648 = vmatprep.subr.bf16.mxu0 0
          %649 = vmatpush1.bf16.msra.mxu0 0
          %650 = vmatprep.subr.bf16.mxu0 %v584
          %651 = vmatpush1.bf16.msra.mxu0 %v583
          %652 = vmatprep.subr.bf16.mxu0 %v580
          %653 = vmatpush1.bf16.msra.mxu0 %v579
          %654 = vmatprep.subr.bf16.mxu0 0
          %655 = vmatpush2.bf16.msra.mxu0 0
          %656 = vmatprep.subr.bf16.mxu0 0
          %657 = vmatpush2.bf16.msra.mxu0 0
          %658 = vmatprep.subr.bf16.mxu0 0
          %659 = vmatpush2.bf16.msra.mxu0 0
          %660 = vmatprep.subr.bf16.mxu0 0
          %661 = vmatpush2.bf16.msra.mxu0 0
          %662 = vmatprep.subr.bf16.mxu0 0
          %663 = vmatpush2.bf16.msra.mxu0 0
          %664 = vmatprep.subr.bf16.mxu0 0
          %665 = vmatpush2.bf16.msra.mxu0 0
          %666 = vmatprep.subr.bf16.mxu0 0
          %667 = vmatpush2.bf16.msra.mxu0 0
          %668 = vmatprep.subr.bf16.mxu0 0
          %669 = vmatpush2.bf16.msra.mxu0 0
          %670 = vmatprep.mubr.bf16.mxu0 0
          %671 = vmatmul.mubr.bf16.gmra.mxu0 %v595
          %v672 = vpop.f32.mrf.mxu0
          %v673 = vadd.f32 %v544, %v672
          %v674 = vpop.f32.mrf.mxu0
          %v675 = vadd.f32 %v548, %v674
          %v676 = vpop.f32.mrf.mxu0
          %v677 = vpop.f32.mrf.mxu0
          %678 = vdwg.mxu0
          %v683 = vcombine.low %v632, %v634
          %v684 = vcombine.low %v673, %v675
          %v686 = vunpack.c.l.s4 1983009808
          %v687 = vunpack.c.0.s8 %v686
          %v688 = vlaneseq
          %v689 = vshrl.u32 %v688, 7
          %v690 = vsub.s32 %v687, %v689
          %v691 = vrot.slane %v683, %v690
          %v693 = vunpack.c.l.s4 1983009808
          %v694 = vunpack.c.0.s8 %v693
          %v695 = vlaneseq
          %v696 = vshrl.u32 %v695, 7
          %v697 = vsub.s32 %v694, %v696
          %v698 = vrot.slane %v684, %v697
          %v699 = vcombine.low %v691, %v698
          %701 = vst [vmem:[#allocation2] sm:$0xff] %v699
        $region68: #{dueling_qnet_forward_pallas.7} parent=63 // pred_fallthru
          _
        %v702 = vld [vmem:[#allocation2] sm:$0xff]
        %v703 = vld [vmem:[%s388] sm:$0xff]
        %v704 = vld [vmem:[%s388 + $0x8] sm:$0x1]
        %v705 = vld [vmem:[%s395] sm:$0xff]
        %v706 = vld [vmem:[%s395 + $0x8] sm:$0xff]
        %v707 = vld [vmem:[%s395 + $0x10] sm:$0xff]
        %v708 = vld [vmem:[%s395 + $0x18] sm:$0xff]
        %v709 = vld [vmem:[%s395 + $0x20] sm:$0xff]
        %v710 = vld [vmem:[%s395 + $0x28] sm:$0xff]
        %v711 = vld [vmem:[%s395 + $0x30] sm:$0xff]
        %v712 = vld [vmem:[%s395 + $0x38] sm:$0xff]
        %v713 = vld [vmem:[%s395 + $0x40] sm:$0xff]
        %v714 = vld [vmem:[%s395 + $0x48] sm:$0xff]
        %v715 = vld [vmem:[%s395 + $0x50] sm:$0xff]
        %v716 = vld [vmem:[%s395 + $0x58] sm:$0xff]
        %v717 = vld [vmem:[%s395 + $0x60] sm:$0xff]
        %v718 = vld [vmem:[%s395 + $0x68] sm:$0xff]
        %v719 = vld [vmem:[%s395 + $0x70] sm:$0xff]
        %v720 = vld [vmem:[%s395 + $0x78] sm:$0xff]
        %v721 = vld [vmem:[%s395 + $0x80] sm:$0xff]
        %v722 = vld [vmem:[%s395 + $0x88] sm:$0xff]
        %v723 = vld [vmem:[%s395 + $0x90] sm:$0xff]
        %v724 = vld [vmem:[%s395 + $0x98] sm:$0xff]
        %v725 = vld [vmem:[%s395 + $0xa0] sm:$0xff]
        %v726 = vld [vmem:[%s395 + $0xa8] sm:$0xff]
        %v727 = vld [vmem:[%s395 + $0xb0] sm:$0xff]
        %v728 = vld [vmem:[%s395 + $0xb8] sm:$0xff]
        %v729 = vld [vmem:[%s395 + $0xc0] sm:$0xff]
        %v730 = vld [vmem:[%s395 + $0xc8] sm:$0xff]
        %v731 = vld [vmem:[%s395 + $0xd0] sm:$0xff]
        %v732 = vld [vmem:[%s395 + $0xd8] sm:$0xff]
        %v733 = vld [vmem:[%s395 + $0xe0] sm:$0xff]
        %v734 = vld [vmem:[%s395 + $0xe8] sm:$0xff]
        %v735 = vld [vmem:[%s395 + $0xf0] sm:$0xff]
        %v736 = vld [vmem:[%s395 + $0xf8] sm:$0xff]
        %v737 = vld [vmem:[%s395 + $0x100] sm:$0xff]
        %v738 = vld [vmem:[%s395 + $0x108] sm:$0xff]
        %v739 = vld [vmem:[%s395 + $0x110] sm:$0xff]
        %v740 = vld [vmem:[%s395 + $0x118] sm:$0xff]
        %v741 = vld [vmem:[%s395 + $0x120] sm:$0xff]
        %v742 = vld [vmem:[%s395 + $0x128] sm:$0xff]
        %v743 = vld [vmem:[%s395 + $0x130] sm:$0xff]
        %v744 = vld [vmem:[%s395 + $0x138] sm:$0xff]
        %v745 = vld [vmem:[%s395 + $0x140] sm:$0xff]
        %v746 = vld [vmem:[%s395 + $0x148] sm:$0xff]
        %v747 = vld [vmem:[%s395 + $0x150] sm:$0xff]
        %v748 = vld [vmem:[%s395 + $0x158] sm:$0xff]
        %v749 = vld [vmem:[%s395 + $0x160] sm:$0xff]
        %v750 = vld [vmem:[%s395 + $0x168] sm:$0xff]
        %v751 = vld [vmem:[%s395 + $0x170] sm:$0xff]
        %v752 = vld [vmem:[%s395 + $0x178] sm:$0xff]
        %v753 = vld [vmem:[%s395 + $0x180] sm:$0xff]
        %v754 = vld [vmem:[%s395 + $0x188] sm:$0xff]
        %v755 = vld [vmem:[%s395 + $0x190] sm:$0xff]
        %v756 = vld [vmem:[%s395 + $0x198] sm:$0xff]
        %v757 = vld [vmem:[%s395 + $0x1a0] sm:$0xff]
        %v758 = vld [vmem:[%s395 + $0x1a8] sm:$0xff]
        %v759 = vld [vmem:[%s395 + $0x1b0] sm:$0xff]
        %v760 = vld [vmem:[%s395 + $0x1b8] sm:$0xff]
        %v761 = vld [vmem:[%s395 + $0x1c0] sm:$0xff]
        %v762 = vld [vmem:[%s395 + $0x1c8] sm:$0xff]
        %v763 = vld [vmem:[%s395 + $0x1d0] sm:$0xff]
        %v764 = vld [vmem:[%s395 + $0x1d8] sm:$0xff]
        %v765 = vld [vmem:[%s395 + $0x1e0] sm:$0xff]
        %v766 = vld [vmem:[%s395 + $0x1e8] sm:$0xff]
        %v767 = vld [vmem:[%s395 + $0x1f0] sm:$0xff]
        %v768 = vld [vmem:[%s395 + $0x1f8] sm:$0xff]
        %v769 = vld [vmem:[%s395 + $0x200] sm:$0xff]
        %v770 = vld [vmem:[%s395 + $0x208] sm:$0xff]
        %v771 = vld [vmem:[%s395 + $0x210] sm:$0xff]
        %v772 = vld [vmem:[%s395 + $0x218] sm:$0xff]
        %v773 = vld [vmem:[%s395 + $0x220] sm:$0xff]
        %v774 = vld [vmem:[%s395 + $0x228] sm:$0xff]
        %v775 = vld [vmem:[%s395 + $0x230] sm:$0xff]
        %v776 = vld [vmem:[%s395 + $0x238] sm:$0xff]
        %v777 = vld [vmem:[%s395 + $0x240] sm:$0xff]
        %v778 = vld [vmem:[%s395 + $0x248] sm:$0xff]
        %v779 = vld [vmem:[%s395 + $0x250] sm:$0xff]
        %v780 = vld [vmem:[%s395 + $0x258] sm:$0xff]
        %v781 = vld [vmem:[%s395 + $0x260] sm:$0xff]
        %v782 = vld [vmem:[%s395 + $0x268] sm:$0xff]
        %v783 = vld [vmem:[%s395 + $0x270] sm:$0xff]
        %v784 = vld [vmem:[%s395 + $0x278] sm:$0xff]
        %v785 = vld [vmem:[%s395 + $0x280] sm:$0xff]
        %v786 = vld [vmem:[%s395 + $0x288] sm:$0xff]
        %v787 = vld [vmem:[%s395 + $0x290] sm:$0xff]
        %v788 = vld [vmem:[%s395 + $0x298] sm:$0xff]
        %v789 = vld [vmem:[%s395 + $0x2a0] sm:$0xff]
        %v790 = vld [vmem:[%s395 + $0x2a8] sm:$0xff]
        %v791 = vld [vmem:[%s395 + $0x2b0] sm:$0xff]
        %v792 = vld [vmem:[%s395 + $0x2b8] sm:$0xff]
        %v793 = vld [vmem:[%s395 + $0x2c0] sm:$0xff]
        %v794 = vld [vmem:[%s395 + $0x2c8] sm:$0xff]
        %v795 = vld [vmem:[%s395 + $0x2d0] sm:$0xff]
        %v796 = vld [vmem:[%s395 + $0x2d8] sm:$0xff]
        %v797 = vld [vmem:[%s395 + $0x2e0] sm:$0xff]
        %v798 = vld [vmem:[%s395 + $0x2e8] sm:$0xff]
        %v799 = vld [vmem:[%s395 + $0x2f0] sm:$0xff]
        %v800 = vld [vmem:[%s395 + $0x2f8] sm:$0xff]
        %v801 = vld [vmem:[%s395 + $0x300] sm:$0xff]
        %v802 = vld [vmem:[%s395 + $0x308] sm:$0xff]
        %v803 = vld [vmem:[%s395 + $0x310] sm:$0xff]
        %v804 = vld [vmem:[%s395 + $0x318] sm:$0xff]
        %v805 = vld [vmem:[%s395 + $0x320] sm:$0xff]
        %v806 = vld [vmem:[%s395 + $0x328] sm:$0xff]
        %v807 = vld [vmem:[%s395 + $0x330] sm:$0xff]
        %v808 = vld [vmem:[%s395 + $0x338] sm:$0xff]
        %v809 = vld [vmem:[%s395 + $0x340] sm:$0xff]
        %v810 = vld [vmem:[%s395 + $0x348] sm:$0xff]
        %v811 = vld [vmem:[%s395 + $0x350] sm:$0xff]
        %v812 = vld [vmem:[%s395 + $0x358] sm:$0xff]
        %v813 = vld [vmem:[%s395 + $0x360] sm:$0xff]
        %v814 = vld [vmem:[%s395 + $0x368] sm:$0xff]
        %v815 = vld [vmem:[%s395 + $0x370] sm:$0xff]
        %v816 = vld [vmem:[%s395 + $0x378] sm:$0xff]
        %v817 = vld [vmem:[%s395 + $0x380] sm:$0xff]
        %v818 = vld [vmem:[%s395 + $0x388] sm:$0xff]
        %v819 = vld [vmem:[%s395 + $0x390] sm:$0xff]
        %v820 = vld [vmem:[%s395 + $0x398] sm:$0xff]
        %v821 = vld [vmem:[%s395 + $0x3a0] sm:$0xff]
        %v822 = vld [vmem:[%s395 + $0x3a8] sm:$0xff]
        %v823 = vld [vmem:[%s395 + $0x3b0] sm:$0xff]
        %v824 = vld [vmem:[%s395 + $0x3b8] sm:$0xff]
        %v825 = vld [vmem:[%s395 + $0x3c0] sm:$0xff]
        %v826 = vld [vmem:[%s395 + $0x3c8] sm:$0xff]
        %v827 = vld [vmem:[%s395 + $0x3d0] sm:$0xff]
        %v828 = vld [vmem:[%s395 + $0x3d8] sm:$0xff]
        %v829 = vld [vmem:[%s395 + $0x3e0] sm:$0xff]
        %v830 = vld [vmem:[%s395 + $0x3e8] sm:$0xff]
        %v831 = vld [vmem:[%s395 + $0x3f0] sm:$0xff]
        %v832 = vld [vmem:[%s395 + $0x3f8] sm:$0xff]
        %v833 = vld [vmem:[%s395 + $0x400] sm:$0xff]
        %v834 = vld [vmem:[%s395 + $0x408] sm:$0xff]
        %v835 = vld [vmem:[%s395 + $0x410] sm:$0xff]
        %v836 = vld [vmem:[%s395 + $0x418] sm:$0xff]
        %v837 = vld [vmem:[%s395 + $0x420] sm:$0xff]
        %v838 = vld [vmem:[%s395 + $0x428] sm:$0xff]
        %v839 = vld [vmem:[%s395 + $0x430] sm:$0xff]
        %v840 = vld [vmem:[%s395 + $0x438] sm:$0xff]
        %v841 = vld [vmem:[%s395 + $0x440] sm:$0xff]
        %v842 = vld [vmem:[%s395 + $0x448] sm:$0xff]
        %v843 = vld [vmem:[%s395 + $0x450] sm:$0xff]
        %v844 = vld [vmem:[%s395 + $0x458] sm:$0xff]
        %v845 = vld [vmem:[%s395 + $0x460] sm:$0xff]
        %v846 = vld [vmem:[%s395 + $0x468] sm:$0xff]
        %v847 = vld [vmem:[%s395 + $0x470] sm:$0xff]
        %v848 = vld [vmem:[%s395 + $0x478] sm:$0xff]
        %v849 = vld [vmem:[%s395 + $0x480] sm:$0xff]
        %v850 = vld [vmem:[%s395 + $0x488] sm:$0xff]
        %v851 = vld [vmem:[%s395 + $0x490] sm:$0xff]
        %v852 = vld [vmem:[%s395 + $0x498] sm:$0xff]
        %v853 = vld [vmem:[%s395 + $0x4a0] sm:$0xff]
        %v854 = vld [vmem:[%s395 + $0x4a8] sm:$0xff]
        %v855 = vld [vmem:[%s395 + $0x4b0] sm:$0xff]
        %v856 = vld [vmem:[%s395 + $0x4b8] sm:$0xff]
        %v857 = vld [vmem:[%s395 + $0x4c0] sm:$0xff]
        %v858 = vld [vmem:[%s395 + $0x4c8] sm:$0xff]
        %v859 = vld [vmem:[%s395 + $0x4d0] sm:$0xff]
        %v860 = vld [vmem:[%s395 + $0x4d8] sm:$0xff]
        %v861 = vld [vmem:[%s395 + $0x4e0] sm:$0xff]
        %v862 = vld [vmem:[%s395 + $0x4e8] sm:$0xff]
        %v863 = vld [vmem:[%s395 + $0x4f0] sm:$0xff]
        %v864 = vld [vmem:[%s395 + $0x4f8] sm:$0xff]
        %v865 = vld [vmem:[%s395 + $0x500] sm:$0xff]
        %v866 = vld [vmem:[%s395 + $0x508] sm:$0xff]
        %v867 = vld [vmem:[%s395 + $0x510] sm:$0xff]
        %v868 = vld [vmem:[%s395 + $0x518] sm:$0xff]
        %v869 = vld [vmem:[%s395 + $0x520] sm:$0xff]
        %v870 = vld [vmem:[%s395 + $0x528] sm:$0xff]
        %v871 = vld [vmem:[%s395 + $0x530] sm:$0xff]
        %v872 = vld [vmem:[%s395 + $0x538] sm:$0xff]
        %v873 = vld [vmem:[%s395 + $0x540] sm:$0xff]
        %v874 = vld [vmem:[%s395 + $0x548] sm:$0xff]
        %v875 = vld [vmem:[%s395 + $0x550] sm:$0xff]
        %v876 = vld [vmem:[%s395 + $0x558] sm:$0xff]
        %v877 = vld [vmem:[%s395 + $0x560] sm:$0xff]
        %v878 = vld [vmem:[%s395 + $0x568] sm:$0xff]
        %v879 = vld [vmem:[%s395 + $0x570] sm:$0xff]
        %v880 = vld [vmem:[%s395 + $0x578] sm:$0xff]
        %v881 = vld [vmem:[%s395 + $0x580] sm:$0xff]
        %v882 = vld [vmem:[%s395 + $0x588] sm:$0xff]
        %v883 = vld [vmem:[%s395 + $0x590] sm:$0xff]
        %v884 = vld [vmem:[%s395 + $0x598] sm:$0xff]
        %v885 = vld [vmem:[%s395 + $0x5a0] sm:$0xff]
        %v886 = vld [vmem:[%s395 + $0x5a8] sm:$0xff]
        %v887 = vld [vmem:[%s395 + $0x5b0] sm:$0xff]
        %v888 = vld [vmem:[%s395 + $0x5b8] sm:$0xff]
        %v889 = vld [vmem:[%s395 + $0x5c0] sm:$0xff]
        %v890 = vld [vmem:[%s395 + $0x5c8] sm:$0xff]
        %v891 = vld [vmem:[%s395 + $0x5d0] sm:$0xff]
        %v892 = vld [vmem:[%s395 + $0x5d8] sm:$0xff]
        %v893 = vld [vmem:[%s395 + $0x5e0] sm:$0xff]
        %v894 = vld [vmem:[%s395 + $0x5e8] sm:$0xff]
        %v895 = vld [vmem:[%s395 + $0x5f0] sm:$0xff]
        %v896 = vld [vmem:[%s395 + $0x5f8] sm:$0xff]
        %v897 = vld [vmem:[%s395 + $0x600] sm:$0xff]
        %v898 = vld [vmem:[%s395 + $0x608] sm:$0xff]
        %v899 = vld [vmem:[%s395 + $0x610] sm:$0xff]
        %v900 = vld [vmem:[%s395 + $0x618] sm:$0xff]
        %v901 = vld [vmem:[%s395 + $0x620] sm:$0xff]
        %v902 = vld [vmem:[%s395 + $0x628] sm:$0xff]
        %v903 = vld [vmem:[%s395 + $0x630] sm:$0xff]
        %v904 = vld [vmem:[%s395 + $0x638] sm:$0xff]
        %v905 = vld [vmem:[%s395 + $0x640] sm:$0xff]
        %v906 = vld [vmem:[%s395 + $0x648] sm:$0xff]
        %v907 = vld [vmem:[%s395 + $0x650] sm:$0xff]
        %v908 = vld [vmem:[%s395 + $0x658] sm:$0xff]
        %v909 = vld [vmem:[%s395 + $0x660] sm:$0xff]
        %v910 = vld [vmem:[%s395 + $0x668] sm:$0xff]
        %v911 = vld [vmem:[%s395 + $0x670] sm:$0xff]
        %v912 = vld [vmem:[%s395 + $0x678] sm:$0xff]
        %v913 = vld [vmem:[%s395 + $0x680] sm:$0xff]
        %v914 = vld [vmem:[%s395 + $0x688] sm:$0xff]
        %v915 = vld [vmem:[%s395 + $0x690] sm:$0xff]
        %v916 = vld [vmem:[%s395 + $0x698] sm:$0xff]
        %v917 = vld [vmem:[%s395 + $0x6a0] sm:$0xff]
        %v918 = vld [vmem:[%s395 + $0x6a8] sm:$0xff]
        %v919 = vld [vmem:[%s395 + $0x6b0] sm:$0xff]
        %v920 = vld [vmem:[%s395 + $0x6b8] sm:$0xff]
        %v921 = vld [vmem:[%s395 + $0x6c0] sm:$0xff]
        %v922 = vld [vmem:[%s395 + $0x6c8] sm:$0xff]
        %v923 = vld [vmem:[%s395 + $0x6d0] sm:$0xff]
        %v924 = vld [vmem:[%s395 + $0x6d8] sm:$0xff]
        %v925 = vld [vmem:[%s395 + $0x6e0] sm:$0xff]
        %v926 = vld [vmem:[%s395 + $0x6e8] sm:$0xff]
        %v927 = vld [vmem:[%s395 + $0x6f0] sm:$0xff]
        %v928 = vld [vmem:[%s395 + $0x6f8] sm:$0xff]
        %v929 = vld [vmem:[%s395 + $0x700] sm:$0xff]
        %v930 = vld [vmem:[%s395 + $0x708] sm:$0xff]
        %v931 = vld [vmem:[%s395 + $0x710] sm:$0xff]
        %v932 = vld [vmem:[%s395 + $0x718] sm:$0xff]
        %v933 = vld [vmem:[%s395 + $0x720] sm:$0xff]
        %v934 = vld [vmem:[%s395 + $0x728] sm:$0xff]
        %v935 = vld [vmem:[%s395 + $0x730] sm:$0xff]
        %v936 = vld [vmem:[%s395 + $0x738] sm:$0xff]
        %v937 = vld [vmem:[%s395 + $0x740] sm:$0xff]
        %v938 = vld [vmem:[%s395 + $0x748] sm:$0xff]
        %v939 = vld [vmem:[%s395 + $0x750] sm:$0xff]
        %v940 = vld [vmem:[%s395 + $0x758] sm:$0xff]
        %v941 = vld [vmem:[%s395 + $0x760] sm:$0xff]
        %v942 = vld [vmem:[%s395 + $0x768] sm:$0xff]
        %v943 = vld [vmem:[%s395 + $0x770] sm:$0xff]
        %v944 = vld [vmem:[%s395 + $0x778] sm:$0xff]
        %v945 = vld [vmem:[%s395 + $0x780] sm:$0xff]
        %v946 = vld [vmem:[%s395 + $0x788] sm:$0xff]
        %v947 = vld [vmem:[%s395 + $0x790] sm:$0xff]
        %v948 = vld [vmem:[%s395 + $0x798] sm:$0xff]
        %v949 = vld [vmem:[%s395 + $0x7a0] sm:$0xff]
        %v950 = vld [vmem:[%s395 + $0x7a8] sm:$0xff]
        %v951 = vld [vmem:[%s395 + $0x7b0] sm:$0xff]
        %v952 = vld [vmem:[%s395 + $0x7b8] sm:$0xff]
        %v953 = vld [vmem:[%s395 + $0x7c0] sm:$0xff]
        %v954 = vld [vmem:[%s395 + $0x7c8] sm:$0xff]
        %v955 = vld [vmem:[%s395 + $0x7d0] sm:$0xff]
        %v956 = vld [vmem:[%s395 + $0x7d8] sm:$0xff]
        %v957 = vld [vmem:[%s395 + $0x7e0] sm:$0xff]
        %v958 = vld [vmem:[%s395 + $0x7e8] sm:$0xff]
        %v959 = vld [vmem:[%s395 + $0x7f0] sm:$0xff]
        %v960 = vld [vmem:[%s395 + $0x7f8] sm:$0xff]
        %v961 = vld [vmem:[%s395 + $0x800] sm:$0xff]
        %v962 = vld [vmem:[%s395 + $0x808] sm:$0xff]
        %v963 = vld [vmem:[%s395 + $0x810] sm:$0xff]
        %v964 = vld [vmem:[%s395 + $0x818] sm:$0xff]
        %v965 = vld [vmem:[%s395 + $0x820] sm:$0xff]
        %v966 = vld [vmem:[%s395 + $0x828] sm:$0xff]
        %v967 = vld [vmem:[%s395 + $0x830] sm:$0xff]
        %v968 = vld [vmem:[%s395 + $0x838] sm:$0xff]
        %v969 = vld [vmem:[%s395 + $0x840] sm:$0xff]
        %v970 = vld [vmem:[%s395 + $0x848] sm:$0xff]
        %v971 = vld [vmem:[%s395 + $0x850] sm:$0xff]
        %v972 = vld [vmem:[%s395 + $0x858] sm:$0xff]
        %v973 = vld [vmem:[%s395 + $0x860] sm:$0xff]
        %v974 = vld [vmem:[%s395 + $0x868] sm:$0xff]
        %v975 = vld [vmem:[%s395 + $0x870] sm:$0xff]
        %v976 = vld [vmem:[%s395 + $0x878] sm:$0xff]
        %v977 = vld [vmem:[%s395 + $0x880] sm:$0xff]
        %v978 = vld [vmem:[%s395 + $0x888] sm:$0xff]
        %v979 = vld [vmem:[%s395 + $0x890] sm:$0xff]
        %v980 = vld [vmem:[%s395 + $0x898] sm:$0xff]
        %v981 = vld [vmem:[%s395 + $0x8a0] sm:$0xff]
        %v982 = vld [vmem:[%s395 + $0x8a8] sm:$0xff]
        %v983 = vld [vmem:[%s395 + $0x8b0] sm:$0xff]
        %v984 = vld [vmem:[%s395 + $0x8b8] sm:$0xff]
        %v985 = vld [vmem:[%s395 + $0x8c0] sm:$0xff]
        %v986 = vld [vmem:[%s395 + $0x8c8] sm:$0xff]
        %v987 = vld [vmem:[%s395 + $0x8d0] sm:$0xff]
        %v988 = vld [vmem:[%s395 + $0x8d8] sm:$0xff]
        %v989 = vld [vmem:[%s395 + $0x8e0] sm:$0xff]
        %v990 = vld [vmem:[%s395 + $0x8e8] sm:$0xff]
        %v991 = vld [vmem:[%s395 + $0x8f0] sm:$0xff]
        %v992 = vld [vmem:[%s395 + $0x8f8] sm:$0xff]
        %v995 = vcombine.high %v703, %v703
        %v997 = vunpack.c.l.s4 1966171168
        %v998 = vunpack.c.0.s8 %v997
        %v999 = vlaneseq
        %v1000 = vshrl.u32 %v999, 7
        %v1001 = vsub.s32 %v998, %v1000
        %v1002 = vrot.slane %v703, %v1001
        %v1004 = vunpack.c.l.s4 1966171168
        %v1005 = vunpack.c.0.s8 %v1004
        %v1006 = vlaneseq
        %v1007 = vshrl.u32 %v1006, 7
        %v1008 = vsub.s32 %v1005, %v1007
        %v1009 = vrot.slane %v995, %v1008
        %v1010 = vcombine.high %v1002, %v1002
        %v1011 = vcombine.high %v1009, %v1009
        %v1013 = vunpack.c.l.s4 1966171168
        %v1014 = vunpack.c.0.s8 %v1013
        %v1015 = vlaneseq
        %v1016 = vshrl.u32 %v1015, 7
        %v1017 = vsub.s32 %v1014, %v1016
        %v1018 = vrot.slane %v1002, %v1017
        %v1020 = vunpack.c.l.s4 1966171168
        %v1021 = vunpack.c.0.s8 %v1020
        %v1022 = vlaneseq
        %v1023 = vshrl.u32 %v1022, 7
        %v1024 = vsub.s32 %v1021, %v1023
        %v1025 = vrot.slane %v1009, %v1024
        %v1027 = vunpack.c.l.s4 1966171168
        %v1028 = vunpack.c.0.s8 %v1027
        %v1029 = vlaneseq
        %v1030 = vshrl.u32 %v1029, 7
        %v1031 = vsub.s32 %v1028, %v1030
        %v1032 = vrot.slane %v1010, %v1031
        %v1034 = vunpack.c.l.s4 1966171168
        %v1035 = vunpack.c.0.s8 %v1034
        %v1036 = vlaneseq
        %v1037 = vshrl.u32 %v1036, 7
        %v1038 = vsub.s32 %v1035, %v1037
        %v1039 = vrot.slane %v1011, %v1038
        %v1040 = vcombine.high %v1018, %v1018
        %v1041 = vcombine.high %v1025, %v1025
        %v1042 = vcombine.high %v1032, %v1032
        %v1043 = vcombine.high %v1039, %v1039
        %v1045 = vunpack.c.l.s4 1966171168
        %v1046 = vunpack.c.0.s8 %v1045
        %v1047 = vlaneseq
        %v1048 = vshrl.u32 %v1047, 7
        %v1049 = vsub.s32 %v1046, %v1048
        %v1050 = vrot.slane %v704, %v1049
        %v1052 = vunpack.c.l.s4 1966171168
        %v1053 = vunpack.c.0.s8 %v1052
        %v1054 = vlaneseq
        %v1055 = vshrl.u32 %v1054, 7
        %v1056 = vsub.s32 %v1053, %v1055
        %v1057 = vrot.slane %v1050, %v1056
        %v1355 = vunpack.c.l.b16 %v705
        %v1356 = vunpack.c.h.b16 %v705
        %v1357 = vunpack.c.l.b16 %v706
        %v1358 = vunpack.c.h.b16 %v706
        %v1359 = vunpack.c.l.b16 %v707
        %v1360 = vunpack.c.h.b16 %v707
        %v1361 = vunpack.c.l.b16 %v708
        %v1362 = vunpack.c.h.b16 %v708
        %v1363 = vunpack.c.l.b16 %v709
        %v1364 = vunpack.c.h.b16 %v709
        %v1365 = vunpack.c.l.b16 %v710
        %v1366 = vunpack.c.h.b16 %v710
        %v1367 = vunpack.c.l.b16 %v711
        %v1368 = vunpack.c.h.b16 %v711
        %v1369 = vunpack.c.l.b16 %v712
        %v1370 = vunpack.c.h.b16 %v712
        %v1371 = vunpack.c.l.b16 %v713
        %v1372 = vunpack.c.h.b16 %v713
        %v1373 = vunpack.c.l.b16 %v714
        %v1374 = vunpack.c.h.b16 %v714
        %v1375 = vunpack.c.l.b16 %v715
        %v1376 = vunpack.c.h.b16 %v715
        %v1377 = vunpack.c.l.b16 %v716
        %v1378 = vunpack.c.h.b16 %v716
        %v1379 = vunpack.c.l.b16 %v717
        %v1380 = vunpack.c.h.b16 %v717
        %v1381 = vunpack.c.l.b16 %v718
        %v1382 = vunpack.c.h.b16 %v718
        %v1383 = vunpack.c.l.b16 %v719
        %v1384 = vunpack.c.h.b16 %v719
        %v1385 = vunpack.c.l.b16 %v720
        %v1386 = vunpack.c.h.b16 %v720
        %v1387 = vunpack.c.l.b16 %v721
        %v1388 = vunpack.c.h.b16 %v721
        %v1389 = vunpack.c.l.b16 %v722
        %v1390 = vunpack.c.h.b16 %v722
        %v1391 = vunpack.c.l.b16 %v723
        %v1392 = vunpack.c.h.b16 %v723
        %v1393 = vunpack.c.l.b16 %v724
        %v1394 = vunpack.c.h.b16 %v724
        %v1395 = vunpack.c.l.b16 %v725
        %v1396 = vunpack.c.h.b16 %v725
        %v1397 = vunpack.c.l.b16 %v726
        %v1398 = vunpack.c.h.b16 %v726
        %v1399 = vunpack.c.l.b16 %v727
        %v1400 = vunpack.c.h.b16 %v727
        %v1401 = vunpack.c.l.b16 %v728
        %v1402 = vunpack.c.h.b16 %v728
        %v1403 = vunpack.c.l.b16 %v729
        %v1404 = vunpack.c.h.b16 %v729
        %v1405 = vunpack.c.l.b16 %v730
        %v1406 = vunpack.c.h.b16 %v730
        %v1407 = vunpack.c.l.b16 %v731
        %v1408 = vunpack.c.h.b16 %v731
        %v1409 = vunpack.c.l.b16 %v732
        %v1410 = vunpack.c.h.b16 %v732
        %v1411 = vunpack.c.l.b16 %v733
        %v1412 = vunpack.c.h.b16 %v733
        %v1413 = vunpack.c.l.b16 %v734
        %v1414 = vunpack.c.h.b16 %v734
        %v1415 = vunpack.c.l.b16 %v735
        %v1416 = vunpack.c.h.b16 %v735
        %v1417 = vunpack.c.l.b16 %v736
        %v1418 = vunpack.c.h.b16 %v736
        %v1419 = vunpack.c.l.b16 %v737
        %v1420 = vunpack.c.h.b16 %v737
        %v1421 = vunpack.c.l.b16 %v738
        %v1422 = vunpack.c.h.b16 %v738
        %v1423 = vunpack.c.l.b16 %v739
        %v1424 = vunpack.c.h.b16 %v739
        %v1425 = vunpack.c.l.b16 %v740
        %v1426 = vunpack.c.h.b16 %v740
        %v1427 = vunpack.c.l.b16 %v741
        %v1428 = vunpack.c.h.b16 %v741
        %v1429 = vunpack.c.l.b16 %v742
        %v1430 = vunpack.c.h.b16 %v742
        %v1431 = vunpack.c.l.b16 %v743
        %v1432 = vunpack.c.h.b16 %v743
        %v1433 = vunpack.c.l.b16 %v744
        %v1434 = vunpack.c.h.b16 %v744
        %v1435 = vunpack.c.l.b16 %v745
        %v1436 = vunpack.c.h.b16 %v745
        %v1437 = vunpack.c.l.b16 %v746
        %v1438 = vunpack.c.h.b16 %v746
        %v1439 = vunpack.c.l.b16 %v747
        %v1440 = vunpack.c.h.b16 %v747
        %v1441 = vunpack.c.l.b16 %v748
        %v1442 = vunpack.c.h.b16 %v748
        %v1443 = vunpack.c.l.b16 %v749
        %v1444 = vunpack.c.h.b16 %v749
        %v1445 = vunpack.c.l.b16 %v750
        %v1446 = vunpack.c.h.b16 %v750
        %v1447 = vunpack.c.l.b16 %v751
        %v1448 = vunpack.c.h.b16 %v751
        %v1449 = vunpack.c.l.b16 %v752
        %v1450 = vunpack.c.h.b16 %v752
        %v1451 = vunpack.c.l.b16 %v753
        %v1452 = vunpack.c.h.b16 %v753
        %v1453 = vunpack.c.l.b16 %v754
        %v1454 = vunpack.c.h.b16 %v754
        %v1455 = vunpack.c.l.b16 %v755
        %v1456 = vunpack.c.h.b16 %v755
        %v1457 = vunpack.c.l.b16 %v756
        %v1458 = vunpack.c.h.b16 %v756
        %v1459 = vunpack.c.l.b16 %v757
        %v1460 = vunpack.c.h.b16 %v757
        %v1461 = vunpack.c.l.b16 %v758
        %v1462 = vunpack.c.h.b16 %v758
        %v1463 = vunpack.c.l.b16 %v759
        %v1464 = vunpack.c.h.b16 %v759
        %v1465 = vunpack.c.l.b16 %v760
        %v1466 = vunpack.c.h.b16 %v760
        %v1467 = vunpack.c.l.b16 %v761
        %v1468 = vunpack.c.h.b16 %v761
        %v1469 = vunpack.c.l.b16 %v762
        %v1470 = vunpack.c.h.b16 %v762
        %v1471 = vunpack.c.l.b16 %v763
        %v1472 = vunpack.c.h.b16 %v763
        %v1473 = vunpack.c.l.b16 %v764
        %v1474 = vunpack.c.h.b16 %v764
        %v1475 = vunpack.c.l.b16 %v765
        %v1476 = vunpack.c.h.b16 %v765
        %v1477 = vunpack.c.l.b16 %v766
        %v1478 = vunpack.c.h.b16 %v766
        %v1479 = vunpack.c.l.b16 %v767
        %v1480 = vunpack.c.h.b16 %v767
        %v1481 = vunpack.c.l.b16 %v768
        %v1482 = vunpack.c.h.b16 %v768
        %v1483 = vunpack.c.l.b16 %v769
        %v1484 = vunpack.c.h.b16 %v769
        %v1485 = vunpack.c.l.b16 %v770
        %v1486 = vunpack.c.h.b16 %v770
        %v1487 = vunpack.c.l.b16 %v771
        %v1488 = vunpack.c.h.b16 %v771
        %v1489 = vunpack.c.l.b16 %v772
        %v1490 = vunpack.c.h.b16 %v772
        %v1491 = vunpack.c.l.b16 %v773
        %v1492 = vunpack.c.h.b16 %v773
        %v1493 = vunpack.c.l.b16 %v774
        %v1494 = vunpack.c.h.b16 %v774
        %v1495 = vunpack.c.l.b16 %v775
        %v1496 = vunpack.c.h.b16 %v775
        %v1497 = vunpack.c.l.b16 %v776
        %v1498 = vunpack.c.h.b16 %v776
        %v1499 = vunpack.c.l.b16 %v777
        %v1500 = vunpack.c.h.b16 %v777
        %v1501 = vunpack.c.l.b16 %v778
        %v1502 = vunpack.c.h.b16 %v778
        %v1503 = vunpack.c.l.b16 %v779
        %v1504 = vunpack.c.h.b16 %v779
        %v1505 = vunpack.c.l.b16 %v780
        %v1506 = vunpack.c.h.b16 %v780
        %v1507 = vunpack.c.l.b16 %v781
        %v1508 = vunpack.c.h.b16 %v781
        %v1509 = vunpack.c.l.b16 %v782
        %v1510 = vunpack.c.h.b16 %v782
        %v1511 = vunpack.c.l.b16 %v783
        %v1512 = vunpack.c.h.b16 %v783
        %v1513 = vunpack.c.l.b16 %v784
        %v1514 = vunpack.c.h.b16 %v784
        %v1515 = vunpack.c.l.b16 %v785
        %v1516 = vunpack.c.h.b16 %v785
        %v1517 = vunpack.c.l.b16 %v786
        %v1518 = vunpack.c.h.b16 %v786
        %v1519 = vunpack.c.l.b16 %v787
        %v1520 = vunpack.c.h.b16 %v787
        %v1521 = vunpack.c.l.b16 %v788
        %v1522 = vunpack.c.h.b16 %v788
        %v1523 = vunpack.c.l.b16 %v789
        %v1524 = vunpack.c.h.b16 %v789
        %v1525 = vunpack.c.l.b16 %v790
        %v1526 = vunpack.c.h.b16 %v790
        %v1527 = vunpack.c.l.b16 %v791
        %v1528 = vunpack.c.h.b16 %v791
        %v1529 = vunpack.c.l.b16 %v792
        %v1530 = vunpack.c.h.b16 %v792
        %v1531 = vunpack.c.l.b16 %v793
        %v1532 = vunpack.c.h.b16 %v793
        %v1533 = vunpack.c.l.b16 %v794
        %v1534 = vunpack.c.h.b16 %v794
        %v1535 = vunpack.c.l.b16 %v795
        %v1536 = vunpack.c.h.b16 %v795
        %v1537 = vunpack.c.l.b16 %v796
        %v1538 = vunpack.c.h.b16 %v796
        %v1539 = vunpack.c.l.b16 %v797
        %v1540 = vunpack.c.h.b16 %v797
        %v1541 = vunpack.c.l.b16 %v798
        %v1542 = vunpack.c.h.b16 %v798
        %v1543 = vunpack.c.l.b16 %v799
        %v1544 = vunpack.c.h.b16 %v799
        %v1545 = vunpack.c.l.b16 %v800
        %v1546 = vunpack.c.h.b16 %v800
        %v1547 = vunpack.c.l.b16 %v801
        %v1548 = vunpack.c.h.b16 %v801
        %v1549 = vunpack.c.l.b16 %v802
        %v1550 = vunpack.c.h.b16 %v802
        %v1551 = vunpack.c.l.b16 %v803
        %v1552 = vunpack.c.h.b16 %v803
        %v1553 = vunpack.c.l.b16 %v804
        %v1554 = vunpack.c.h.b16 %v804
        %v1555 = vunpack.c.l.b16 %v805
        %v1556 = vunpack.c.h.b16 %v805
        %v1557 = vunpack.c.l.b16 %v806
        %v1558 = vunpack.c.h.b16 %v806
        %v1559 = vunpack.c.l.b16 %v807
        %v1560 = vunpack.c.h.b16 %v807
        %v1561 = vunpack.c.l.b16 %v808
        %v1562 = vunpack.c.h.b16 %v808
        %v1563 = vunpack.c.l.b16 %v809
        %v1564 = vunpack.c.h.b16 %v809
        %v1565 = vunpack.c.l.b16 %v810
        %v1566 = vunpack.c.h.b16 %v810
        %v1567 = vunpack.c.l.b16 %v811
        %v1568 = vunpack.c.h.b16 %v811
        %v1569 = vunpack.c.l.b16 %v812
        %v1570 = vunpack.c.h.b16 %v812
        %v1571 = vunpack.c.l.b16 %v813
        %v1572 = vunpack.c.h.b16 %v813
        %v1573 = vunpack.c.l.b16 %v814
        %v1574 = vunpack.c.h.b16 %v814
        %v1575 = vunpack.c.l.b16 %v815
        %v1576 = vunpack.c.h.b16 %v815
        %v1577 = vunpack.c.l.b16 %v816
        %v1578 = vunpack.c.h.b16 %v816
        %v1579 = vunpack.c.l.b16 %v817
        %v1580 = vunpack.c.h.b16 %v817
        %v1581 = vunpack.c.l.b16 %v818
        %v1582 = vunpack.c.h.b16 %v818
        %v1583 = vunpack.c.l.b16 %v819
        %v1584 = vunpack.c.h.b16 %v819
        %v1585 = vunpack.c.l.b16 %v820
        %v1586 = vunpack.c.h.b16 %v820
        %v1587 = vunpack.c.l.b16 %v821
        %v1588 = vunpack.c.h.b16 %v821
        %v1589 = vunpack.c.l.b16 %v822
        %v1590 = vunpack.c.h.b16 %v822
        %v1591 = vunpack.c.l.b16 %v823
        %v1592 = vunpack.c.h.b16 %v823
        %v1593 = vunpack.c.l.b16 %v824
        %v1594 = vunpack.c.h.b16 %v824
        %v1595 = vunpack.c.l.b16 %v825
        %v1596 = vunpack.c.h.b16 %v825
        %v1597 = vunpack.c.l.b16 %v826
        %v1598 = vunpack.c.h.b16 %v826
        %v1599 = vunpack.c.l.b16 %v827
        %v1600 = vunpack.c.h.b16 %v827
        %v1601 = vunpack.c.l.b16 %v828
        %v1602 = vunpack.c.h.b16 %v828
        %v1603 = vunpack.c.l.b16 %v829
        %v1604 = vunpack.c.h.b16 %v829
        %v1605 = vunpack.c.l.b16 %v830
        %v1606 = vunpack.c.h.b16 %v830
        %v1607 = vunpack.c.l.b16 %v831
        %v1608 = vunpack.c.h.b16 %v831
        %v1609 = vunpack.c.l.b16 %v832
        %v1610 = vunpack.c.h.b16 %v832
        %v1611 = vunpack.c.l.b16 %v833
        %v1612 = vunpack.c.h.b16 %v833
        %v1613 = vunpack.c.l.b16 %v834
        %v1614 = vunpack.c.h.b16 %v834
        %v1615 = vunpack.c.l.b16 %v835
        %v1616 = vunpack.c.h.b16 %v835
        %v1617 = vunpack.c.l.b16 %v836
        %v1618 = vunpack.c.h.b16 %v836
        %v1619 = vunpack.c.l.b16 %v837
        %v1620 = vunpack.c.h.b16 %v837
        %v1621 = vunpack.c.l.b16 %v838
        %v1622 = vunpack.c.h.b16 %v838
        %v1623 = vunpack.c.l.b16 %v839
        %v1624 = vunpack.c.h.b16 %v839
        %v1625 = vunpack.c.l.b16 %v840
        %v1626 = vunpack.c.h.b16 %v840
        %v1627 = vunpack.c.l.b16 %v841
        %v1628 = vunpack.c.h.b16 %v841
        %v1629 = vunpack.c.l.b16 %v842
        %v1630 = vunpack.c.h.b16 %v842
        %v1631 = vunpack.c.l.b16 %v843
        %v1632 = vunpack.c.h.b16 %v843
        %v1633 = vunpack.c.l.b16 %v844
        %v1634 = vunpack.c.h.b16 %v844
        %v1635 = vunpack.c.l.b16 %v845
        %v1636 = vunpack.c.h.b16 %v845
        %v1637 = vunpack.c.l.b16 %v846
        %v1638 = vunpack.c.h.b16 %v846
        %v1639 = vunpack.c.l.b16 %v847
        %v1640 = vunpack.c.h.b16 %v847
        %v1641 = vunpack.c.l.b16 %v848
        %v1642 = vunpack.c.h.b16 %v848
        %v1643 = vunpack.c.l.b16 %v849
        %v1644 = vunpack.c.h.b16 %v849
        %v1645 = vunpack.c.l.b16 %v850
        %v1646 = vunpack.c.h.b16 %v850
        %v1647 = vunpack.c.l.b16 %v851
        %v1648 = vunpack.c.h.b16 %v851
        %v1649 = vunpack.c.l.b16 %v852
        %v1650 = vunpack.c.h.b16 %v852
        %v1651 = vunpack.c.l.b16 %v853
        %v1652 = vunpack.c.h.b16 %v853
        %v1653 = vunpack.c.l.b16 %v854
        %v1654 = vunpack.c.h.b16 %v854
        %v1655 = vunpack.c.l.b16 %v855
        %v1656 = vunpack.c.h.b16 %v855
        %v1657 = vunpack.c.l.b16 %v856
        %v1658 = vunpack.c.h.b16 %v856
        %v1659 = vunpack.c.l.b16 %v857
        %v1660 = vunpack.c.h.b16 %v857
        %v1661 = vunpack.c.l.b16 %v858
        %v1662 = vunpack.c.h.b16 %v858
        %v1663 = vunpack.c.l.b16 %v859
        %v1664 = vunpack.c.h.b16 %v859
        %v1665 = vunpack.c.l.b16 %v860
        %v1666 = vunpack.c.h.b16 %v860
        %v1667 = vunpack.c.l.b16 %v861
        %v1668 = vunpack.c.h.b16 %v861
        %v1669 = vunpack.c.l.b16 %v862
        %v1670 = vunpack.c.h.b16 %v862
        %v1671 = vunpack.c.l.b16 %v863
        %v1672 = vunpack.c.h.b16 %v863
        %v1673 = vunpack.c.l.b16 %v864
        %v1674 = vunpack.c.h.b16 %v864
        %v1675 = vunpack.c.l.b16 %v865
        %v1676 = vunpack.c.h.b16 %v865
        %v1677 = vunpack.c.l.b16 %v866
        %v1678 = vunpack.c.h.b16 %v866
        %v1679 = vunpack.c.l.b16 %v867
        %v1680 = vunpack.c.h.b16 %v867
        %v1681 = vunpack.c.l.b16 %v868
        %v1682 = vunpack.c.h.b16 %v868
        %v1683 = vunpack.c.l.b16 %v869
        %v1684 = vunpack.c.h.b16 %v869
        %v1685 = vunpack.c.l.b16 %v870
        %v1686 = vunpack.c.h.b16 %v870
        %v1687 = vunpack.c.l.b16 %v871
        %v1688 = vunpack.c.h.b16 %v871
        %v1689 = vunpack.c.l.b16 %v872
        %v1690 = vunpack.c.h.b16 %v872
        %v1691 = vunpack.c.l.b16 %v873
        %v1692 = vunpack.c.h.b16 %v873
        %v1693 = vunpack.c.l.b16 %v874
        %v1694 = vunpack.c.h.b16 %v874
        %v1695 = vunpack.c.l.b16 %v875
        %v1696 = vunpack.c.h.b16 %v875
        %v1697 = vunpack.c.l.b16 %v876
        %v1698 = vunpack.c.h.b16 %v876
        %v1699 = vunpack.c.l.b16 %v877
        %v1700 = vunpack.c.h.b16 %v877
        %v1701 = vunpack.c.l.b16 %v878
        %v1702 = vunpack.c.h.b16 %v878
        %v1703 = vunpack.c.l.b16 %v879
        %v1704 = vunpack.c.h.b16 %v879
        %v1705 = vunpack.c.l.b16 %v880
        %v1706 = vunpack.c.h.b16 %v880
        %v1707 = vunpack.c.l.b16 %v881
        %v1708 = vunpack.c.h.b16 %v881
        %v1709 = vunpack.c.l.b16 %v882
        %v1710 = vunpack.c.h.b16 %v882
        %v1711 = vunpack.c.l.b16 %v883
        %v1712 = vunpack.c.h.b16 %v883
        %v1713 = vunpack.c.l.b16 %v884
        %v1714 = vunpack.c.h.b16 %v884
        %v1715 = vunpack.c.l.b16 %v885
        %v1716 = vunpack.c.h.b16 %v885
        %v1717 = vunpack.c.l.b16 %v886
        %v1718 = vunpack.c.h.b16 %v886
        %v1719 = vunpack.c.l.b16 %v887
        %v1720 = vunpack.c.h.b16 %v887
        %v1721 = vunpack.c.l.b16 %v888
        %v1722 = vunpack.c.h.b16 %v888
        %v1723 = vunpack.c.l.b16 %v889
        %v1724 = vunpack.c.h.b16 %v889
        %v1725 = vunpack.c.l.b16 %v890
        %v1726 = vunpack.c.h.b16 %v890
        %v1727 = vunpack.c.l.b16 %v891
        %v1728 = vunpack.c.h.b16 %v891
        %v1729 = vunpack.c.l.b16 %v892
        %v1730 = vunpack.c.h.b16 %v892
        %v1731 = vunpack.c.l.b16 %v893
        %v1732 = vunpack.c.h.b16 %v893
        %v1733 = vunpack.c.l.b16 %v894
        %v1734 = vunpack.c.h.b16 %v894
        %v1735 = vunpack.c.l.b16 %v895
        %v1736 = vunpack.c.h.b16 %v895
        %v1737 = vunpack.c.l.b16 %v896
        %v1738 = vunpack.c.h.b16 %v896
        %v1739 = vunpack.c.l.b16 %v897
        %v1740 = vunpack.c.h.b16 %v897
        %v1741 = vunpack.c.l.b16 %v898
        %v1742 = vunpack.c.h.b16 %v898
        %v1743 = vunpack.c.l.b16 %v899
        %v1744 = vunpack.c.h.b16 %v899
        %v1745 = vunpack.c.l.b16 %v900
        %v1746 = vunpack.c.h.b16 %v900
        %v1747 = vunpack.c.l.b16 %v901
        %v1748 = vunpack.c.h.b16 %v901
        %v1749 = vunpack.c.l.b16 %v902
        %v1750 = vunpack.c.h.b16 %v902
        %v1751 = vunpack.c.l.b16 %v903
        %v1752 = vunpack.c.h.b16 %v903
        %v1753 = vunpack.c.l.b16 %v904
        %v1754 = vunpack.c.h.b16 %v904
        %v1755 = vunpack.c.l.b16 %v905
        %v1756 = vunpack.c.h.b16 %v905
        %v1757 = vunpack.c.l.b16 %v906
        %v1758 = vunpack.c.h.b16 %v906
        %v1759 = vunpack.c.l.b16 %v907
        %v1760 = vunpack.c.h.b16 %v907
        %v1761 = vunpack.c.l.b16 %v908
        %v1762 = vunpack.c.h.b16 %v908
        %v1763 = vunpack.c.l.b16 %v909
        %v1764 = vunpack.c.h.b16 %v909
        %v1765 = vunpack.c.l.b16 %v910
        %v1766 = vunpack.c.h.b16 %v910
        %v1767 = vunpack.c.l.b16 %v911
        %v1768 = vunpack.c.h.b16 %v911
        %v1769 = vunpack.c.l.b16 %v912
        %v1770 = vunpack.c.h.b16 %v912
        %v1771 = vunpack.c.l.b16 %v913
        %v1772 = vunpack.c.h.b16 %v913
        %v1773 = vunpack.c.l.b16 %v914
        %v1774 = vunpack.c.h.b16 %v914
        %v1775 = vunpack.c.l.b16 %v915
        %v1776 = vunpack.c.h.b16 %v915
        %v1777 = vunpack.c.l.b16 %v916
        %v1778 = vunpack.c.h.b16 %v916
        %v1779 = vunpack.c.l.b16 %v917
        %v1780 = vunpack.c.h.b16 %v917
        %v1781 = vunpack.c.l.b16 %v918
        %v1782 = vunpack.c.h.b16 %v918
        %v1783 = vunpack.c.l.b16 %v919
        %v1784 = vunpack.c.h.b16 %v919
        %v1785 = vunpack.c.l.b16 %v920
        %v1786 = vunpack.c.h.b16 %v920
        %v1787 = vunpack.c.l.b16 %v921
        %v1788 = vunpack.c.h.b16 %v921
        %v1789 = vunpack.c.l.b16 %v922
        %v1790 = vunpack.c.h.b16 %v922
        %v1791 = vunpack.c.l.b16 %v923
        %v1792 = vunpack.c.h.b16 %v923
        %v1793 = vunpack.c.l.b16 %v924
        %v1794 = vunpack.c.h.b16 %v924
        %v1795 = vunpack.c.l.b16 %v925
        %v1796 = vunpack.c.h.b16 %v925
        %v1797 = vunpack.c.l.b16 %v926
        %v1798 = vunpack.c.h.b16 %v926
        %v1799 = vunpack.c.l.b16 %v927
        %v1800 = vunpack.c.h.b16 %v927
        %v1801 = vunpack.c.l.b16 %v928
        %v1802 = vunpack.c.h.b16 %v928
        %v1803 = vunpack.c.l.b16 %v929
        %v1804 = vunpack.c.h.b16 %v929
        %v1805 = vunpack.c.l.b16 %v930
        %v1806 = vunpack.c.h.b16 %v930
        %v1807 = vunpack.c.l.b16 %v931
        %v1808 = vunpack.c.h.b16 %v931
        %v1809 = vunpack.c.l.b16 %v932
        %v1810 = vunpack.c.h.b16 %v932
        %v1811 = vunpack.c.l.b16 %v933
        %v1812 = vunpack.c.h.b16 %v933
        %v1813 = vunpack.c.l.b16 %v934
        %v1814 = vunpack.c.h.b16 %v934
        %v1815 = vunpack.c.l.b16 %v935
        %v1816 = vunpack.c.h.b16 %v935
        %v1817 = vunpack.c.l.b16 %v936
        %v1818 = vunpack.c.h.b16 %v936
        %v1819 = vunpack.c.l.b16 %v937
        %v1820 = vunpack.c.h.b16 %v937
        %v1821 = vunpack.c.l.b16 %v938
        %v1822 = vunpack.c.h.b16 %v938
        %v1823 = vunpack.c.l.b16 %v939
        %v1824 = vunpack.c.h.b16 %v939
        %v1825 = vunpack.c.l.b16 %v940
        %v1826 = vunpack.c.h.b16 %v940
        %v1827 = vunpack.c.l.b16 %v941
        %v1828 = vunpack.c.h.b16 %v941
        %v1829 = vunpack.c.l.b16 %v942
        %v1830 = vunpack.c.h.b16 %v942
        %v1831 = vunpack.c.l.b16 %v943
        %v1832 = vunpack.c.h.b16 %v943
        %v1833 = vunpack.c.l.b16 %v944
        %v1834 = vunpack.c.h.b16 %v944
        %v1835 = vunpack.c.l.b16 %v945
        %v1836 = vunpack.c.h.b16 %v945
        %v1837 = vunpack.c.l.b16 %v946
        %v1838 = vunpack.c.h.b16 %v946
        %v1839 = vunpack.c.l.b16 %v947
        %v1840 = vunpack.c.h.b16 %v947
        %v1841 = vunpack.c.l.b16 %v948
        %v1842 = vunpack.c.h.b16 %v948
        %v1843 = vunpack.c.l.b16 %v949
        %v1844 = vunpack.c.h.b16 %v949
        %v1845 = vunpack.c.l.b16 %v950
        %v1846 = vunpack.c.h.b16 %v950
        %v1847 = vunpack.c.l.b16 %v951
        %v1848 = vunpack.c.h.b16 %v951
        %v1849 = vunpack.c.l.b16 %v952
        %v1850 = vunpack.c.h.b16 %v952
        %v1851 = vunpack.c.l.b16 %v953
        %v1852 = vunpack.c.h.b16 %v953
        %v1853 = vunpack.c.l.b16 %v954
        %v1854 = vunpack.c.h.b16 %v954
        %v1855 = vunpack.c.l.b16 %v955
        %v1856 = vunpack.c.h.b16 %v955
        %v1857 = vunpack.c.l.b16 %v956
        %v1858 = vunpack.c.h.b16 %v956
        %v1859 = vunpack.c.l.b16 %v957
        %v1860 = vunpack.c.h.b16 %v957
        %v1861 = vunpack.c.l.b16 %v958
        %v1862 = vunpack.c.h.b16 %v958
        %v1863 = vunpack.c.l.b16 %v959
        %v1864 = vunpack.c.h.b16 %v959
        %v1865 = vunpack.c.l.b16 %v960
        %v1866 = vunpack.c.h.b16 %v960
        %v1867 = vunpack.c.l.b16 %v961
        %v1868 = vunpack.c.h.b16 %v961
        %v1869 = vunpack.c.l.b16 %v962
        %v1870 = vunpack.c.h.b16 %v962
        %v1871 = vunpack.c.l.b16 %v963
        %v1872 = vunpack.c.h.b16 %v963
        %v1873 = vunpack.c.l.b16 %v964
        %v1874 = vunpack.c.h.b16 %v964
        %v1875 = vunpack.c.l.b16 %v965
        %v1876 = vunpack.c.h.b16 %v965
        %v1877 = vunpack.c.l.b16 %v966
        %v1878 = vunpack.c.h.b16 %v966
        %v1879 = vunpack.c.l.b16 %v967
        %v1880 = vunpack.c.h.b16 %v967
        %v1881 = vunpack.c.l.b16 %v968
        %v1882 = vunpack.c.h.b16 %v968
        %v1883 = vunpack.c.l.b16 %v969
        %v1884 = vunpack.c.h.b16 %v969
        %v1885 = vunpack.c.l.b16 %v970
        %v1886 = vunpack.c.h.b16 %v970
        %v1887 = vunpack.c.l.b16 %v971
        %v1888 = vunpack.c.h.b16 %v971
        %v1889 = vunpack.c.l.b16 %v972
        %v1890 = vunpack.c.h.b16 %v972
        %v1891 = vunpack.c.l.b16 %v973
        %v1892 = vunpack.c.h.b16 %v973
        %v1893 = vunpack.c.l.b16 %v974
        %v1894 = vunpack.c.h.b16 %v974
        %v1895 = vunpack.c.l.b16 %v975
        %v1896 = vunpack.c.h.b16 %v975
        %v1897 = vunpack.c.l.b16 %v976
        %v1898 = vunpack.c.h.b16 %v976
        %v1899 = vunpack.c.l.b16 %v977
        %v1900 = vunpack.c.h.b16 %v977
        %v1901 = vunpack.c.l.b16 %v978
        %v1902 = vunpack.c.h.b16 %v978
        %v1903 = vunpack.c.l.b16 %v979
        %v1904 = vunpack.c.h.b16 %v979
        %v1905 = vunpack.c.l.b16 %v980
        %v1906 = vunpack.c.h.b16 %v980
        %v1907 = vunpack.c.l.b16 %v981
        %v1908 = vunpack.c.h.b16 %v981
        %v1909 = vunpack.c.l.b16 %v982
        %v1910 = vunpack.c.h.b16 %v982
        %v1911 = vunpack.c.l.b16 %v983
        %v1912 = vunpack.c.h.b16 %v983
        %v1913 = vunpack.c.l.b16 %v984
        %v1914 = vunpack.c.h.b16 %v984
        %v1915 = vunpack.c.l.b16 %v985
        %v1916 = vunpack.c.h.b16 %v985
        %v1917 = vunpack.c.l.b16 %v986
        %v1918 = vunpack.c.h.b16 %v986
        %v1919 = vunpack.c.l.b16 %v987
        %v1920 = vunpack.c.h.b16 %v987
        %v1921 = vunpack.c.l.b16 %v988
        %v1922 = vunpack.c.h.b16 %v988
        %v1923 = vunpack.c.l.b16 %v989
        %v1924 = vunpack.c.h.b16 %v989
        %v1925 = vunpack.c.l.b16 %v990
        %v1926 = vunpack.c.h.b16 %v990
        %v1927 = vunpack.c.l.b16 %v991
        %v1928 = vunpack.c.h.b16 %v991
        %v1929 = vunpack.c.l.b16 %v992
        %v1930 = vunpack.c.h.b16 %v992
        %v1931 = vpack.c.b16 %v1359, %v1355
        %v1932 = vpack.c.b16 %v1360, %v1356
        %v1933 = vpack.c.b16 %v1361, %v1357
        %v1934 = vpack.c.b16 %v1362, %v1358
        %v1935 = vpack.c.b16 %v1367, %v1363
        %v1936 = vpack.c.b16 %v1368, %v1364
        %v1937 = vpack.c.b16 %v1369, %v1365
        %v1938 = vpack.c.b16 %v1370, %v1366
        %v1939 = vpack.c.b16 %v1375, %v1371
        %v1940 = vpack.c.b16 %v1376, %v1372
        %v1941 = vpack.c.b16 %v1377, %v1373
        %v1942 = vpack.c.b16 %v1378, %v1374
        %v1943 = vpack.c.b16 %v1383, %v1379
        %v1944 = vpack.c.b16 %v1384, %v1380
        %v1945 = vpack.c.b16 %v1385, %v1381
        %v1946 = vpack.c.b16 %v1386, %v1382
        %v1947 = vpack.c.b16 %v1391, %v1387
        %v1948 = vpack.c.b16 %v1392, %v1388
        %v1949 = vpack.c.b16 %v1393, %v1389
        %v1950 = vpack.c.b16 %v1394, %v1390
        %v1951 = vpack.c.b16 %v1399, %v1395
        %v1952 = vpack.c.b16 %v1400, %v1396
        %v1953 = vpack.c.b16 %v1401, %v1397
        %v1954 = vpack.c.b16 %v1402, %v1398
        %v1955 = vpack.c.b16 %v1407, %v1403
        %v1956 = vpack.c.b16 %v1408, %v1404
        %v1957 = vpack.c.b16 %v1409, %v1405
        %v1958 = vpack.c.b16 %v1410, %v1406
        %v1959 = vpack.c.b16 %v1415, %v1411
        %v1960 = vpack.c.b16 %v1416, %v1412
        %v1961 = vpack.c.b16 %v1417, %v1413
        %v1962 = vpack.c.b16 %v1418, %v1414
        %v1963 = vpack.c.b16 %v1423, %v1419
        %v1964 = vpack.c.b16 %v1424, %v1420
        %v1965 = vpack.c.b16 %v1425, %v1421
        %v1966 = vpack.c.b16 %v1426, %v1422
        %v1967 = vpack.c.b16 %v1431, %v1427
        %v1968 = vpack.c.b16 %v1432, %v1428
        %v1969 = vpack.c.b16 %v1433, %v1429
        %v1970 = vpack.c.b16 %v1434, %v1430
        %v1971 = vpack.c.b16 %v1439, %v1435
        %v1972 = vpack.c.b16 %v1440, %v1436
        %v1973 = vpack.c.b16 %v1441, %v1437
        %v1974 = vpack.c.b16 %v1442, %v1438
        %v1975 = vpack.c.b16 %v1447, %v1443
        %v1976 = vpack.c.b16 %v1448, %v1444
        %v1977 = vpack.c.b16 %v1449, %v1445
        %v1978 = vpack.c.b16 %v1450, %v1446
        %v1979 = vpack.c.b16 %v1455, %v1451
        %v1980 = vpack.c.b16 %v1456, %v1452
        %v1981 = vpack.c.b16 %v1457, %v1453
        %v1982 = vpack.c.b16 %v1458, %v1454
        %v1983 = vpack.c.b16 %v1463, %v1459
        %v1984 = vpack.c.b16 %v1464, %v1460
        %v1985 = vpack.c.b16 %v1465, %v1461
        %v1986 = vpack.c.b16 %v1466, %v1462
        %v1987 = vpack.c.b16 %v1471, %v1467
        %v1988 = vpack.c.b16 %v1472, %v1468
        %v1989 = vpack.c.b16 %v1473, %v1469
        %v1990 = vpack.c.b16 %v1474, %v1470
        %v1991 = vpack.c.b16 %v1479, %v1475
        %v1992 = vpack.c.b16 %v1480, %v1476
        %v1993 = vpack.c.b16 %v1481, %v1477
        %v1994 = vpack.c.b16 %v1482, %v1478
        %v1995 = vpack.c.b16 %v1487, %v1483
        %v1996 = vpack.c.b16 %v1488, %v1484
        %v1997 = vpack.c.b16 %v1489, %v1485
        %v1998 = vpack.c.b16 %v1490, %v1486
        %v1999 = vpack.c.b16 %v1495, %v1491
        %v2000 = vpack.c.b16 %v1496, %v1492
        %v2001 = vpack.c.b16 %v1497, %v1493
        %v2002 = vpack.c.b16 %v1498, %v1494
        %v2003 = vpack.c.b16 %v1503, %v1499
        %v2004 = vpack.c.b16 %v1504, %v1500
        %v2005 = vpack.c.b16 %v1505, %v1501
        %v2006 = vpack.c.b16 %v1506, %v1502
        %v2007 = vpack.c.b16 %v1511, %v1507
        %v2008 = vpack.c.b16 %v1512, %v1508
        %v2009 = vpack.c.b16 %v1513, %v1509
        %v2010 = vpack.c.b16 %v1514, %v1510
        %v2011 = vpack.c.b16 %v1519, %v1515
        %v2012 = vpack.c.b16 %v1520, %v1516
        %v2013 = vpack.c.b16 %v1521, %v1517
        %v2014 = vpack.c.b16 %v1522, %v1518
        %v2015 = vpack.c.b16 %v1527, %v1523
        %v2016 = vpack.c.b16 %v1528, %v1524
        %v2017 = vpack.c.b16 %v1529, %v1525
        %v2018 = vpack.c.b16 %v1530, %v1526
        %v2019 = vpack.c.b16 %v1535, %v1531
        %v2020 = vpack.c.b16 %v1536, %v1532
        %v2021 = vpack.c.b16 %v1537, %v1533
        %v2022 = vpack.c.b16 %v1538, %v1534
        %v2023 = vpack.c.b16 %v1543, %v1539
        %v2024 = vpack.c.b16 %v1544, %v1540
        %v2025 = vpack.c.b16 %v1545, %v1541
        %v2026 = vpack.c.b16 %v1546, %v1542
        %v2027 = vpack.c.b16 %v1551, %v1547
        %v2028 = vpack.c.b16 %v1552, %v1548
        %v2029 = vpack.c.b16 %v1553, %v1549
        %v2030 = vpack.c.b16 %v1554, %v1550
        %v2031 = vpack.c.b16 %v1559, %v1555
        %v2032 = vpack.c.b16 %v1560, %v1556
        %v2033 = vpack.c.b16 %v1561, %v1557
        %v2034 = vpack.c.b16 %v1562, %v1558
        %v2035 = vpack.c.b16 %v1567, %v1563
        %v2036 = vpack.c.b16 %v1568, %v1564
        %v2037 = vpack.c.b16 %v1569, %v1565
        %v2038 = vpack.c.b16 %v1570, %v1566
        %v2039 = vpack.c.b16 %v1575, %v1571
        %v2040 = vpack.c.b16 %v1576, %v1572
        %v2041 = vpack.c.b16 %v1577, %v1573
        %v2042 = vpack.c.b16 %v1578, %v1574
        %v2043 = vpack.c.b16 %v1583, %v1579
        %v2044 = vpack.c.b16 %v1584, %v1580
        %v2045 = vpack.c.b16 %v1585, %v1581
        %v2046 = vpack.c.b16 %v1586, %v1582
        %v2047 = vpack.c.b16 %v1591, %v1587
        %v2048 = vpack.c.b16 %v1592, %v1588
        %v2049 = vpack.c.b16 %v1593, %v1589
        %v2050 = vpack.c.b16 %v1594, %v1590
        %v2051 = vpack.c.b16 %v1599, %v1595
        %v2052 = vpack.c.b16 %v1600, %v1596
        %v2053 = vpack.c.b16 %v1601, %v1597
        %v2054 = vpack.c.b16 %v1602, %v1598
        %v2055 = vpack.c.b16 %v1607, %v1603
        %v2056 = vpack.c.b16 %v1608, %v1604
        %v2057 = vpack.c.b16 %v1609, %v1605
        %v2058 = vpack.c.b16 %v1610, %v1606
        %v2059 = vpack.c.b16 %v1615, %v1611
        %v2060 = vpack.c.b16 %v1616, %v1612
        %v2061 = vpack.c.b16 %v1617, %v1613
        %v2062 = vpack.c.b16 %v1618, %v1614
        %v2063 = vpack.c.b16 %v1623, %v1619
        %v2064 = vpack.c.b16 %v1624, %v1620
        %v2065 = vpack.c.b16 %v1625, %v1621
        %v2066 = vpack.c.b16 %v1626, %v1622
        %v2067 = vpack.c.b16 %v1631, %v1627
        %v2068 = vpack.c.b16 %v1632, %v1628
        %v2069 = vpack.c.b16 %v1633, %v1629
        %v2070 = vpack.c.b16 %v1634, %v1630
        %v2071 = vpack.c.b16 %v1639, %v1635
        %v2072 = vpack.c.b16 %v1640, %v1636
        %v2073 = vpack.c.b16 %v1641, %v1637
        %v2074 = vpack.c.b16 %v1642, %v1638
        %v2075 = vpack.c.b16 %v1647, %v1643
        %v2076 = vpack.c.b16 %v1648, %v1644
        %v2077 = vpack.c.b16 %v1649, %v1645
        %v2078 = vpack.c.b16 %v1650, %v1646
        %v2079 = vpack.c.b16 %v1655, %v1651
        %v2080 = vpack.c.b16 %v1656, %v1652
        %v2081 = vpack.c.b16 %v1657, %v1653
        %v2082 = vpack.c.b16 %v1658, %v1654
        %v2083 = vpack.c.b16 %v1663, %v1659
        %v2084 = vpack.c.b16 %v1664, %v1660
        %v2085 = vpack.c.b16 %v1665, %v1661
        %v2086 = vpack.c.b16 %v1666, %v1662
        %v2087 = vpack.c.b16 %v1671, %v1667
        %v2088 = vpack.c.b16 %v1672, %v1668
        %v2089 = vpack.c.b16 %v1673, %v1669
        %v2090 = vpack.c.b16 %v1674, %v1670
        %v2091 = vpack.c.b16 %v1679, %v1675
        %v2092 = vpack.c.b16 %v1680, %v1676
        %v2093 = vpack.c.b16 %v1681, %v1677
        %v2094 = vpack.c.b16 %v1682, %v1678
        %v2095 = vpack.c.b16 %v1687, %v1683
        %v2096 = vpack.c.b16 %v1688, %v1684
        %v2097 = vpack.c.b16 %v1689, %v1685
        %v2098 = vpack.c.b16 %v1690, %v1686
        %v2099 = vpack.c.b16 %v1695, %v1691
        %v2100 = vpack.c.b16 %v1696, %v1692
        %v2101 = vpack.c.b16 %v1697, %v1693
        %v2102 = vpack.c.b16 %v1698, %v1694
        %v2103 = vpack.c.b16 %v1703, %v1699
        %v2104 = vpack.c.b16 %v1704, %v1700
        %v2105 = vpack.c.b16 %v1705, %v1701
        %v2106 = vpack.c.b16 %v1706, %v1702
        %v2107 = vpack.c.b16 %v1711, %v1707
        %v2108 = vpack.c.b16 %v1712, %v1708
        %v2109 = vpack.c.b16 %v1713, %v1709
        %v2110 = vpack.c.b16 %v1714, %v1710
        %v2111 = vpack.c.b16 %v1719, %v1715
        %v2112 = vpack.c.b16 %v1720, %v1716
        %v2113 = vpack.c.b16 %v1721, %v1717
        %v2114 = vpack.c.b16 %v1722, %v1718
        %v2115 = vpack.c.b16 %v1727, %v1723
        %v2116 = vpack.c.b16 %v1728, %v1724
        %v2117 = vpack.c.b16 %v1729, %v1725
        %v2118 = vpack.c.b16 %v1730, %v1726
        %v2119 = vpack.c.b16 %v1735, %v1731
        %v2120 = vpack.c.b16 %v1736, %v1732
        %v2121 = vpack.c.b16 %v1737, %v1733
        %v2122 = vpack.c.b16 %v1738, %v1734
        %v2123 = vpack.c.b16 %v1743, %v1739
        %v2124 = vpack.c.b16 %v1744, %v1740
        %v2125 = vpack.c.b16 %v1745, %v1741
        %v2126 = vpack.c.b16 %v1746, %v1742
        %v2127 = vpack.c.b16 %v1751, %v1747
        %v2128 = vpack.c.b16 %v1752, %v1748
        %v2129 = vpack.c.b16 %v1753, %v1749
        %v2130 = vpack.c.b16 %v1754, %v1750
        %v2131 = vpack.c.b16 %v1759, %v1755
        %v2132 = vpack.c.b16 %v1760, %v1756
        %v2133 = vpack.c.b16 %v1761, %v1757
        %v2134 = vpack.c.b16 %v1762, %v1758
        %v2135 = vpack.c.b16 %v1767, %v1763
        %v2136 = vpack.c.b16 %v1768, %v1764
        %v2137 = vpack.c.b16 %v1769, %v1765
        %v2138 = vpack.c.b16 %v1770, %v1766
        %v2139 = vpack.c.b16 %v1775, %v1771
        %v2140 = vpack.c.b16 %v1776, %v1772
        %v2141 = vpack.c.b16 %v1777, %v1773
        %v2142 = vpack.c.b16 %v1778, %v1774
        %v2143 = vpack.c.b16 %v1783, %v1779
        %v2144 = vpack.c.b16 %v1784, %v1780
        %v2145 = vpack.c.b16 %v1785, %v1781
        %v2146 = vpack.c.b16 %v1786, %v1782
        %v2147 = vpack.c.b16 %v1791, %v1787
        %v2148 = vpack.c.b16 %v1792, %v1788
        %v2149 = vpack.c.b16 %v1793, %v1789
        %v2150 = vpack.c.b16 %v1794, %v1790
        %v2151 = vpack.c.b16 %v1799, %v1795
        %v2152 = vpack.c.b16 %v1800, %v1796
        %v2153 = vpack.c.b16 %v1801, %v1797
        %v2154 = vpack.c.b16 %v1802, %v1798
        %v2155 = vpack.c.b16 %v1807, %v1803
        %v2156 = vpack.c.b16 %v1808, %v1804
        %v2157 = vpack.c.b16 %v1809, %v1805
        %v2158 = vpack.c.b16 %v1810, %v1806
        %v2159 = vpack.c.b16 %v1815, %v1811
        %v2160 = vpack.c.b16 %v1816, %v1812
        %v2161 = vpack.c.b16 %v1817, %v1813
        %v2162 = vpack.c.b16 %v1818, %v1814
        %v2163 = vpack.c.b16 %v1823, %v1819
        %v2164 = vpack.c.b16 %v1824, %v1820
        %v2165 = vpack.c.b16 %v1825, %v1821
        %v2166 = vpack.c.b16 %v1826, %v1822
        %v2167 = vpack.c.b16 %v1831, %v1827
        %v2168 = vpack.c.b16 %v1832, %v1828
        %v2169 = vpack.c.b16 %v1833, %v1829
        %v2170 = vpack.c.b16 %v1834, %v1830
        %v2171 = vpack.c.b16 %v1839, %v1835
        %v2172 = vpack.c.b16 %v1840, %v1836
        %v2173 = vpack.c.b16 %v1841, %v1837
        %v2174 = vpack.c.b16 %v1842, %v1838
        %v2175 = vpack.c.b16 %v1847, %v1843
        %v2176 = vpack.c.b16 %v1848, %v1844
        %v2177 = vpack.c.b16 %v1849, %v1845
        %v2178 = vpack.c.b16 %v1850, %v1846
        %v2179 = vpack.c.b16 %v1855, %v1851
        %v2180 = vpack.c.b16 %v1856, %v1852
        %v2181 = vpack.c.b16 %v1857, %v1853
        %v2182 = vpack.c.b16 %v1858, %v1854
        %v2183 = vpack.c.b16 %v1863, %v1859
        %v2184 = vpack.c.b16 %v1864, %v1860
        %v2185 = vpack.c.b16 %v1865, %v1861
        %v2186 = vpack.c.b16 %v1866, %v1862
        %v2187 = vpack.c.b16 %v1871, %v1867
        %v2188 = vpack.c.b16 %v1872, %v1868
        %v2189 = vpack.c.b16 %v1873, %v1869
        %v2190 = vpack.c.b16 %v1874, %v1870
        %v2191 = vpack.c.b16 %v1879, %v1875
        %v2192 = vpack.c.b16 %v1880, %v1876
        %v2193 = vpack.c.b16 %v1881, %v1877
        %v2194 = vpack.c.b16 %v1882, %v1878
        %v2195 = vpack.c.b16 %v1887, %v1883
        %v2196 = vpack.c.b16 %v1888, %v1884
        %v2197 = vpack.c.b16 %v1889, %v1885
        %v2198 = vpack.c.b16 %v1890, %v1886
        %v2199 = vpack.c.b16 %v1895, %v1891
        %v2200 = vpack.c.b16 %v1896, %v1892
        %v2201 = vpack.c.b16 %v1897, %v1893
        %v2202 = vpack.c.b16 %v1898, %v1894
        %v2203 = vpack.c.b16 %v1903, %v1899
        %v2204 = vpack.c.b16 %v1904, %v1900
        %v2205 = vpack.c.b16 %v1905, %v1901
        %v2206 = vpack.c.b16 %v1906, %v1902
        %v2207 = vpack.c.b16 %v1911, %v1907
        %v2208 = vpack.c.b16 %v1912, %v1908
        %v2209 = vpack.c.b16 %v1913, %v1909
        %v2210 = vpack.c.b16 %v1914, %v1910
        %v2211 = vpack.c.b16 %v1919, %v1915
        %v2212 = vpack.c.b16 %v1920, %v1916
        %v2213 = vpack.c.b16 %v1921, %v1917
        %v2214 = vpack.c.b16 %v1922, %v1918
        %v2215 = vpack.c.b16 %v1927, %v1923
        %v2216 = vpack.c.b16 %v1928, %v1924
        %v2217 = vpack.c.b16 %v1929, %v1925
        %v2218 = vpack.c.b16 %v1930, %v1926
        %2507 = vmatprep.subr.bf16.mxu0 %v1960
        %2508 = vmatpush1.bf16.msra.mxu0 %v1959
        %2509 = vmatprep.subr.bf16.mxu0 %v1956
        %2510 = vmatpush1.bf16.msra.mxu0 %v1955
        %2511 = vmatprep.subr.bf16.mxu0 %v1952
        %2512 = vmatpush1.bf16.msra.mxu0 %v1951
        %2513 = vmatprep.subr.bf16.mxu0 %v1948
        %2514 = vmatpush1.bf16.msra.mxu0 %v1947
        %2515 = vmatprep.subr.bf16.mxu0 %v1944
        %2516 = vmatpush1.bf16.msra.mxu0 %v1943
        %2517 = vmatprep.subr.bf16.mxu0 %v1940
        %2518 = vmatpush1.bf16.msra.mxu0 %v1939
        %2519 = vmatprep.subr.bf16.mxu0 %v1936
        %2520 = vmatpush1.bf16.msra.mxu0 %v1935
        %2521 = vmatprep.subr.bf16.mxu0 %v1932
        %2522 = vmatpush1.bf16.msra.mxu0 %v1931
        %2523 = vmatprep.subr.bf16.mxu0 %v1992
        %2524 = vmatpush2.bf16.msra.mxu0 %v1991
        %2525 = vmatprep.subr.bf16.mxu0 %v1988
        %2526 = vmatpush2.bf16.msra.mxu0 %v1987
        %2527 = vmatprep.subr.bf16.mxu0 %v1984
        %2528 = vmatpush2.bf16.msra.mxu0 %v1983
        %2529 = vmatprep.subr.bf16.mxu0 %v1980
        %2530 = vmatpush2.bf16.msra.mxu0 %v1979
        %2531 = vmatprep.subr.bf16.mxu0 %v1976
        %2532 = vmatpush2.bf16.msra.mxu0 %v1975
        %2533 = vmatprep.subr.bf16.mxu0 %v1972
        %2534 = vmatpush2.bf16.msra.mxu0 %v1971
        %2535 = vmatprep.subr.bf16.mxu0 %v1968
        %2536 = vmatpush2.bf16.msra.mxu0 %v1967
        %2537 = vmatprep.subr.bf16.mxu0 %v1964
        %2538 = vmatpush2.bf16.msra.mxu0 %v1963
        %2539 = vmatprep.mubr.bf16.mxu0 %v1032
        %2540 = vmatmul.mubr.bf16.gmra.mxu0 %v1018
        %v2541 = vpop.f32.mrf.mxu0
        %v2542 = vadd.f32 0.0, %v2541
        %v2543 = vpop.f32.mrf.mxu0
        %v2544 = vadd.f32 0.0, %v2543
        %v2545 = vpop.f32.mrf.mxu0
        %v2546 = vpop.f32.mrf.mxu0
        %2547 = vdwg.mxu0
        %2548 = vmatprep.subr.bf16.mxu0 %v2024
        %2549 = vmatpush1.bf16.msra.mxu0 %v2023
        %2550 = vmatprep.subr.bf16.mxu0 %v2020
        %2551 = vmatpush1.bf16.msra.mxu0 %v2019
        %2552 = vmatprep.subr.bf16.mxu0 %v2016
        %2553 = vmatpush1.bf16.msra.mxu0 %v2015
        %2554 = vmatprep.subr.bf16.mxu0 %v2012
        %2555 = vmatpush1.bf16.msra.mxu0 %v2011
        %2556 = vmatprep.subr.bf16.mxu0 %v2008
        %2557 = vmatpush1.bf16.msra.mxu0 %v2007
        %2558 = vmatprep.subr.bf16.mxu0 %v2004
        %2559 = vmatpush1.bf16.msra.mxu0 %v2003
        %2560 = vmatprep.subr.bf16.mxu0 %v2000
        %2561 = vmatpush1.bf16.msra.mxu0 %v1999
        %2562 = vmatprep.subr.bf16.mxu0 %v1996
        %2563 = vmatpush1.bf16.msra.mxu0 %v1995
        %2564 = vmatprep.subr.bf16.mxu0 %v2056
        %2565 = vmatpush2.bf16.msra.mxu0 %v2055
        %2566 = vmatprep.subr.bf16.mxu0 %v2052
        %2567 = vmatpush2.bf16.msra.mxu0 %v2051
        %2568 = vmatprep.subr.bf16.mxu0 %v2048
        %2569 = vmatpush2.bf16.msra.mxu0 %v2047
        %2570 = vmatprep.subr.bf16.mxu0 %v2044
        %2571 = vmatpush2.bf16.msra.mxu0 %v2043
        %2572 = vmatprep.subr.bf16.mxu0 %v2040
        %2573 = vmatpush2.bf16.msra.mxu0 %v2039
        %2574 = vmatprep.subr.bf16.mxu0 %v2036
        %2575 = vmatpush2.bf16.msra.mxu0 %v2035
        %2576 = vmatprep.subr.bf16.mxu0 %v2032
        %2577 = vmatpush2.bf16.msra.mxu0 %v2031
        %2578 = vmatprep.subr.bf16.mxu0 %v2028
        %2579 = vmatpush2.bf16.msra.mxu0 %v2027
        %2580 = vmatprep.mubr.bf16.mxu0 %v1042
        %2581 = vmatmul.mubr.bf16.gmra.mxu0 %v1040
        %v2582 = vpop.f32.mrf.mxu0
        %v2583 = vadd.f32 %v2542, %v2582
        %v2584 = vpop.f32.mrf.mxu0
        %v2585 = vadd.f32 %v2544, %v2584
        %v2586 = vpop.f32.mrf.mxu0
        %v2587 = vpop.f32.mrf.mxu0
        %2588 = vdwg.mxu0
        %2589 = vmatprep.subr.bf16.mxu0 %v2088
        %2590 = vmatpush1.bf16.msra.mxu0 %v2087
        %2591 = vmatprep.subr.bf16.mxu0 %v2084
        %2592 = vmatpush1.bf16.msra.mxu0 %v2083
        %2593 = vmatprep.subr.bf16.mxu0 %v2080
        %2594 = vmatpush1.bf16.msra.mxu0 %v2079
        %2595 = vmatprep.subr.bf16.mxu0 %v2076
        %2596 = vmatpush1.bf16.msra.mxu0 %v2075
        %2597 = vmatprep.subr.bf16.mxu0 %v2072
        %2598 = vmatpush1.bf16.msra.mxu0 %v2071
        %2599 = vmatprep.subr.bf16.mxu0 %v2068
        %2600 = vmatpush1.bf16.msra.mxu0 %v2067
        %2601 = vmatprep.subr.bf16.mxu0 %v2064
        %2602 = vmatpush1.bf16.msra.mxu0 %v2063
        %2603 = vmatprep.subr.bf16.mxu0 %v2060
        %2604 = vmatpush1.bf16.msra.mxu0 %v2059
        %2605 = vmatprep.subr.bf16.mxu0 %v2120
        %2606 = vmatpush2.bf16.msra.mxu0 %v2119
        %2607 = vmatprep.subr.bf16.mxu0 %v2116
        %2608 = vmatpush2.bf16.msra.mxu0 %v2115
        %2609 = vmatprep.subr.bf16.mxu0 %v2112
        %2610 = vmatpush2.bf16.msra.mxu0 %v2111
        %2611 = vmatprep.subr.bf16.mxu0 %v2108
        %2612 = vmatpush2.bf16.msra.mxu0 %v2107
        %2613 = vmatprep.subr.bf16.mxu0 %v2104
        %2614 = vmatpush2.bf16.msra.mxu0 %v2103
        %2615 = vmatprep.subr.bf16.mxu0 %v2100
        %2616 = vmatpush2.bf16.msra.mxu0 %v2099
        %2617 = vmatprep.subr.bf16.mxu0 %v2096
        %2618 = vmatpush2.bf16.msra.mxu0 %v2095
        %2619 = vmatprep.subr.bf16.mxu0 %v2092
        %2620 = vmatpush2.bf16.msra.mxu0 %v2091
        %2621 = vmatprep.mubr.bf16.mxu0 %v1039
        %2622 = vmatmul.mubr.bf16.gmra.mxu0 %v1025
        %v2623 = vpop.f32.mrf.mxu0
        %v2624 = vadd.f32 %v2583, %v2623
        %v2625 = vpop.f32.mrf.mxu0
        %v2626 = vadd.f32 %v2585, %v2625
        %v2627 = vpop.f32.mrf.mxu0
        %v2628 = vpop.f32.mrf.mxu0
        %2629 = vdwg.mxu0
        %2630 = vmatprep.subr.bf16.mxu0 %v2152
        %2631 = vmatpush1.bf16.msra.mxu0 %v2151
        %2632 = vmatprep.subr.bf16.mxu0 %v2148
        %2633 = vmatpush1.bf16.msra.mxu0 %v2147
        %2634 = vmatprep.subr.bf16.mxu0 %v2144
        %2635 = vmatpush1.bf16.msra.mxu0 %v2143
        %2636 = vmatprep.subr.bf16.mxu0 %v2140
        %2637 = vmatpush1.bf16.msra.mxu0 %v2139
        %2638 = vmatprep.subr.bf16.mxu0 %v2136
        %2639 = vmatpush1.bf16.msra.mxu0 %v2135
        %2640 = vmatprep.subr.bf16.mxu0 %v2132
        %2641 = vmatpush1.bf16.msra.mxu0 %v2131
        %2642 = vmatprep.subr.bf16.mxu0 %v2128
        %2643 = vmatpush1.bf16.msra.mxu0 %v2127
        %2644 = vmatprep.subr.bf16.mxu0 %v2124
        %2645 = vmatpush1.bf16.msra.mxu0 %v2123
        %2646 = vmatprep.subr.bf16.mxu0 %v2184
        %2647 = vmatpush2.bf16.msra.mxu0 %v2183
        %2648 = vmatprep.subr.bf16.mxu0 %v2180
        %2649 = vmatpush2.bf16.msra.mxu0 %v2179
        %2650 = vmatprep.subr.bf16.mxu0 %v2176
        %2651 = vmatpush2.bf16.msra.mxu0 %v2175
        %2652 = vmatprep.subr.bf16.mxu0 %v2172
        %2653 = vmatpush2.bf16.msra.mxu0 %v2171
        %2654 = vmatprep.subr.bf16.mxu0 %v2168
        %2655 = vmatpush2.bf16.msra.mxu0 %v2167
        %2656 = vmatprep.subr.bf16.mxu0 %v2164
        %2657 = vmatpush2.bf16.msra.mxu0 %v2163
        %2658 = vmatprep.subr.bf16.mxu0 %v2160
        %2659 = vmatpush2.bf16.msra.mxu0 %v2159
        %2660 = vmatprep.subr.bf16.mxu0 %v2156
        %2661 = vmatpush2.bf16.msra.mxu0 %v2155
        %2662 = vmatprep.mubr.bf16.mxu0 %v1043
        %2663 = vmatmul.mubr.bf16.gmra.mxu0 %v1041
        %v2664 = vpop.f32.mrf.mxu0
        %v2665 = vadd.f32 %v2624, %v2664
        %v2666 = vpop.f32.mrf.mxu0
        %v2667 = vadd.f32 %v2626, %v2666
        %v2668 = vpop.f32.mrf.mxu0
        %v2669 = vpop.f32.mrf.mxu0
        %2670 = vdwg.mxu0
        %2671 = vmatprep.subr.bf16.mxu0 %v2216
        %2672 = vmatpush1.bf16.msra.mxu0 %v2215
        %2673 = vmatprep.subr.bf16.mxu0 %v2212
        %2674 = vmatpush1.bf16.msra.mxu0 %v2211
        %2675 = vmatprep.subr.bf16.mxu0 %v2208
        %2676 = vmatpush1.bf16.msra.mxu0 %v2207
        %2677 = vmatprep.subr.bf16.mxu0 %v2204
        %2678 = vmatpush1.bf16.msra.mxu0 %v2203
        %2679 = vmatprep.subr.bf16.mxu0 %v2200
        %2680 = vmatpush1.bf16.msra.mxu0 %v2199
        %2681 = vmatprep.subr.bf16.mxu0 %v2196
        %2682 = vmatpush1.bf16.msra.mxu0 %v2195
        %2683 = vmatprep.subr.bf16.mxu0 %v2192
        %2684 = vmatpush1.bf16.msra.mxu0 %v2191
        %2685 = vmatprep.subr.bf16.mxu0 %v2188
        %2686 = vmatpush1.bf16.msra.mxu0 %v2187
        %2687 = vmatprep.subr.bf16.mxu0 0
        %2688 = vmatpush2.bf16.msra.mxu0 0
        %2689 = vmatprep.subr.bf16.mxu0 0
        %2690 = vmatpush2.bf16.msra.mxu0 0
        %2691 = vmatprep.subr.bf16.mxu0 0
        %2692 = vmatpush2.bf16.msra.mxu0 0
        %2693 = vmatprep.subr.bf16.mxu0 0
        %2694 = vmatpush2.bf16.msra.mxu0 0
        %2695 = vmatprep.subr.bf16.mxu0 0
        %2696 = vmatpush2.bf16.msra.mxu0 0
        %2697 = vmatprep.subr.bf16.mxu0 0
        %2698 = vmatpush2.bf16.msra.mxu0 0
        %2699 = vmatprep.subr.bf16.mxu0 0
        %2700 = vmatpush2.bf16.msra.mxu0 0
        %2701 = vmatprep.subr.bf16.mxu0 0
        %2702 = vmatpush2.bf16.msra.mxu0 0
        %2703 = vmatprep.mubr.bf16.mxu0 0
        %2704 = vmatmul.mubr.bf16.gmra.mxu0 %v1057
        %v2705 = vpop.f32.mrf.mxu0
        %v2706 = vadd.f32 %v2665, %v2705
        %v2707 = vpop.f32.mrf.mxu0
        %v2708 = vadd.f32 %v2667, %v2707
        %v2709 = vpop.f32.mrf.mxu0
        %v2710 = vpop.f32.mrf.mxu0
        %2711 = vdwg.mxu0
        %2712 = vmatprep.subr.bf16.mxu0 %v1962
        %2713 = vmatpush1.bf16.msra.mxu0 %v1961
        %2714 = vmatprep.subr.bf16.mxu0 %v1958
        %2715 = vmatpush1.bf16.msra.mxu0 %v1957
        %2716 = vmatprep.subr.bf16.mxu0 %v1954
        %2717 = vmatpush1.bf16.msra.mxu0 %v1953
        %2718 = vmatprep.subr.bf16.mxu0 %v1950
        %2719 = vmatpush1.bf16.msra.mxu0 %v1949
        %2720 = vmatprep.subr.bf16.mxu0 %v1946
        %2721 = vmatpush1.bf16.msra.mxu0 %v1945
        %2722 = vmatprep.subr.bf16.mxu0 %v1942
        %2723 = vmatpush1.bf16.msra.mxu0 %v1941
        %2724 = vmatprep.subr.bf16.mxu0 %v1938
        %2725 = vmatpush1.bf16.msra.mxu0 %v1937
        %2726 = vmatprep.subr.bf16.mxu0 %v1934
        %2727 = vmatpush1.bf16.msra.mxu0 %v1933
        %2728 = vmatprep.subr.bf16.mxu0 %v1994
        %2729 = vmatpush2.bf16.msra.mxu0 %v1993
        %2730 = vmatprep.subr.bf16.mxu0 %v1990
        %2731 = vmatpush2.bf16.msra.mxu0 %v1989
        %2732 = vmatprep.subr.bf16.mxu0 %v1986
        %2733 = vmatpush2.bf16.msra.mxu0 %v1985
        %2734 = vmatprep.subr.bf16.mxu0 %v1982
        %2735 = vmatpush2.bf16.msra.mxu0 %v1981
        %2736 = vmatprep.subr.bf16.mxu0 %v1978
        %2737 = vmatpush2.bf16.msra.mxu0 %v1977
        %2738 = vmatprep.subr.bf16.mxu0 %v1974
        %2739 = vmatpush2.bf16.msra.mxu0 %v1973
        %2740 = vmatprep.subr.bf16.mxu0 %v1970
        %2741 = vmatpush2.bf16.msra.mxu0 %v1969
        %2742 = vmatprep.subr.bf16.mxu0 %v1966
        %2743 = vmatpush2.bf16.msra.mxu0 %v1965
        %2744 = vmatprep.mubr.bf16.mxu0 %v1032
        %2745 = vmatmul.mubr.bf16.gmra.mxu0 %v1018
        %v2746 = vpop.f32.mrf.mxu0
        %v2747 = vadd.f32 0.0, %v2746
        %v2748 = vpop.f32.mrf.mxu0
        %v2749 = vadd.f32 0.0, %v2748
        %v2750 = vpop.f32.mrf.mxu0
        %v2751 = vpop.f32.mrf.mxu0
        %2752 = vdwg.mxu0
        %2753 = vmatprep.subr.bf16.mxu0 %v2026
        %2754 = vmatpush1.bf16.msra.mxu0 %v2025
        %2755 = vmatprep.subr.bf16.mxu0 %v2022
        %2756 = vmatpush1.bf16.msra.mxu0 %v2021
        %2757 = vmatprep.subr.bf16.mxu0 %v2018
        %2758 = vmatpush1.bf16.msra.mxu0 %v2017
        %2759 = vmatprep.subr.bf16.mxu0 %v2014
        %2760 = vmatpush1.bf16.msra.mxu0 %v2013
        %2761 = vmatprep.subr.bf16.mxu0 %v2010
        %2762 = vmatpush1.bf16.msra.mxu0 %v2009
        %2763 = vmatprep.subr.bf16.mxu0 %v2006
        %2764 = vmatpush1.bf16.msra.mxu0 %v2005
        %2765 = vmatprep.subr.bf16.mxu0 %v2002
        %2766 = vmatpush1.bf16.msra.mxu0 %v2001
        %2767 = vmatprep.subr.bf16.mxu0 %v1998
        %2768 = vmatpush1.bf16.msra.mxu0 %v1997
        %2769 = vmatprep.subr.bf16.mxu0 %v2058
        %2770 = vmatpush2.bf16.msra.mxu0 %v2057
        %2771 = vmatprep.subr.bf16.mxu0 %v2054
        %2772 = vmatpush2.bf16.msra.mxu0 %v2053
        %2773 = vmatprep.subr.bf16.mxu0 %v2050
        %2774 = vmatpush2.bf16.msra.mxu0 %v2049
        %2775 = vmatprep.subr.bf16.mxu0 %v2046
        %2776 = vmatpush2.bf16.msra.mxu0 %v2045
        %2777 = vmatprep.subr.bf16.mxu0 %v2042
        %2778 = vmatpush2.bf16.msra.mxu0 %v2041
        %2779 = vmatprep.subr.bf16.mxu0 %v2038
        %2780 = vmatpush2.bf16.msra.mxu0 %v2037
        %2781 = vmatprep.subr.bf16.mxu0 %v2034
        %2782 = vmatpush2.bf16.msra.mxu0 %v2033
        %2783 = vmatprep.subr.bf16.mxu0 %v2030
        %2784 = vmatpush2.bf16.msra.mxu0 %v2029
        %2785 = vmatprep.mubr.bf16.mxu0 %v1042
        %2786 = vmatmul.mubr.bf16.gmra.mxu0 %v1040
        %v2787 = vpop.f32.mrf.mxu0
        %v2788 = vadd.f32 %v2747, %v2787
        %v2789 = vpop.f32.mrf.mxu0
        %v2790 = vadd.f32 %v2749, %v2789
        %v2791 = vpop.f32.mrf.mxu0
        %v2792 = vpop.f32.mrf.mxu0
        %2793 = vdwg.mxu0
        %2794 = vmatprep.subr.bf16.mxu0 %v2090
        %2795 = vmatpush1.bf16.msra.mxu0 %v2089
        %2796 = vmatprep.subr.bf16.mxu0 %v2086
        %2797 = vmatpush1.bf16.msra.mxu0 %v2085
        %2798 = vmatprep.subr.bf16.mxu0 %v2082
        %2799 = vmatpush1.bf16.msra.mxu0 %v2081
        %2800 = vmatprep.subr.bf16.mxu0 %v2078
        %2801 = vmatpush1.bf16.msra.mxu0 %v2077
        %2802 = vmatprep.subr.bf16.mxu0 %v2074
        %2803 = vmatpush1.bf16.msra.mxu0 %v2073
        %2804 = vmatprep.subr.bf16.mxu0 %v2070
        %2805 = vmatpush1.bf16.msra.mxu0 %v2069
        %2806 = vmatprep.subr.bf16.mxu0 %v2066
        %2807 = vmatpush1.bf16.msra.mxu0 %v2065
        %2808 = vmatprep.subr.bf16.mxu0 %v2062
        %2809 = vmatpush1.bf16.msra.mxu0 %v2061
        %2810 = vmatprep.subr.bf16.mxu0 %v2122
        %2811 = vmatpush2.bf16.msra.mxu0 %v2121
        %2812 = vmatprep.subr.bf16.mxu0 %v2118
        %2813 = vmatpush2.bf16.msra.mxu0 %v2117
        %2814 = vmatprep.subr.bf16.mxu0 %v2114
        %2815 = vmatpush2.bf16.msra.mxu0 %v2113
        %2816 = vmatprep.subr.bf16.mxu0 %v2110
        %2817 = vmatpush2.bf16.msra.mxu0 %v2109
        %2818 = vmatprep.subr.bf16.mxu0 %v2106
        %2819 = vmatpush2.bf16.msra.mxu0 %v2105
        %2820 = vmatprep.subr.bf16.mxu0 %v2102
        %2821 = vmatpush2.bf16.msra.mxu0 %v2101
        %2822 = vmatprep.subr.bf16.mxu0 %v2098
        %2823 = vmatpush2.bf16.msra.mxu0 %v2097
        %2824 = vmatprep.subr.bf16.mxu0 %v2094
        %2825 = vmatpush2.bf16.msra.mxu0 %v2093
        %2826 = vmatprep.mubr.bf16.mxu0 %v1039
        %2827 = vmatmul.mubr.bf16.gmra.mxu0 %v1025
        %v2828 = vpop.f32.mrf.mxu0
        %v2829 = vadd.f32 %v2788, %v2828
        %v2830 = vpop.f32.mrf.mxu0
        %v2831 = vadd.f32 %v2790, %v2830
        %v2832 = vpop.f32.mrf.mxu0
        %v2833 = vpop.f32.mrf.mxu0
        %2834 = vdwg.mxu0
        %2835 = vmatprep.subr.bf16.mxu0 %v2154
        %2836 = vmatpush1.bf16.msra.mxu0 %v2153
        %2837 = vmatprep.subr.bf16.mxu0 %v2150
        %2838 = vmatpush1.bf16.msra.mxu0 %v2149
        %2839 = vmatprep.subr.bf16.mxu0 %v2146
        %2840 = vmatpush1.bf16.msra.mxu0 %v2145
        %2841 = vmatprep.subr.bf16.mxu0 %v2142
        %2842 = vmatpush1.bf16.msra.mxu0 %v2141
        %2843 = vmatprep.subr.bf16.mxu0 %v2138
        %2844 = vmatpush1.bf16.msra.mxu0 %v2137
        %2845 = vmatprep.subr.bf16.mxu0 %v2134
        %2846 = vmatpush1.bf16.msra.mxu0 %v2133
        %2847 = vmatprep.subr.bf16.mxu0 %v2130
        %2848 = vmatpush1.bf16.msra.mxu0 %v2129
        %2849 = vmatprep.subr.bf16.mxu0 %v2126
        %2850 = vmatpush1.bf16.msra.mxu0 %v2125
        %2851 = vmatprep.subr.bf16.mxu0 %v2186
        %2852 = vmatpush2.bf16.msra.mxu0 %v2185
        %2853 = vmatprep.subr.bf16.mxu0 %v2182
        %2854 = vmatpush2.bf16.msra.mxu0 %v2181
        %2855 = vmatprep.subr.bf16.mxu0 %v2178
        %2856 = vmatpush2.bf16.msra.mxu0 %v2177
        %2857 = vmatprep.subr.bf16.mxu0 %v2174
        %2858 = vmatpush2.bf16.msra.mxu0 %v2173
        %2859 = vmatprep.subr.bf16.mxu0 %v2170
        %2860 = vmatpush2.bf16.msra.mxu0 %v2169
        %2861 = vmatprep.subr.bf16.mxu0 %v2166
        %2862 = vmatpush2.bf16.msra.mxu0 %v2165
        %2863 = vmatprep.subr.bf16.mxu0 %v2162
        %2864 = vmatpush2.bf16.msra.mxu0 %v2161
        %2865 = vmatprep.subr.bf16.mxu0 %v2158
        %2866 = vmatpush2.bf16.msra.mxu0 %v2157
        %2867 = vmatprep.mubr.bf16.mxu0 %v1043
        %2868 = vmatmul.mubr.bf16.gmra.mxu0 %v1041
        %v2869 = vpop.f32.mrf.mxu0
        %v2870 = vadd.f32 %v2829, %v2869
        %v2871 = vpop.f32.mrf.mxu0
        %v2872 = vadd.f32 %v2831, %v2871
        %v2873 = vpop.f32.mrf.mxu0
        %v2874 = vpop.f32.mrf.mxu0
        %2875 = vdwg.mxu0
        %2876 = vmatprep.subr.bf16.mxu0 %v2218
        %2877 = vmatpush1.bf16.msra.mxu0 %v2217
        %2878 = vmatprep.subr.bf16.mxu0 %v2214
        %2879 = vmatpush1.bf16.msra.mxu0 %v2213
        %2880 = vmatprep.subr.bf16.mxu0 %v2210
        %2881 = vmatpush1.bf16.msra.mxu0 %v2209
        %2882 = vmatprep.subr.bf16.mxu0 %v2206
        %2883 = vmatpush1.bf16.msra.mxu0 %v2205
        %2884 = vmatprep.subr.bf16.mxu0 %v2202
        %2885 = vmatpush1.bf16.msra.mxu0 %v2201
        %2886 = vmatprep.subr.bf16.mxu0 %v2198
        %2887 = vmatpush1.bf16.msra.mxu0 %v2197
        %2888 = vmatprep.subr.bf16.mxu0 %v2194
        %2889 = vmatpush1.bf16.msra.mxu0 %v2193
        %2890 = vmatprep.subr.bf16.mxu0 %v2190
        %2891 = vmatpush1.bf16.msra.mxu0 %v2189
        %2892 = vmatprep.subr.bf16.mxu0 0
        %2893 = vmatpush2.bf16.msra.mxu0 0
        %2894 = vmatprep.subr.bf16.mxu0 0
        %2895 = vmatpush2.bf16.msra.mxu0 0
        %2896 = vmatprep.subr.bf16.mxu0 0
        %2897 = vmatpush2.bf16.msra.mxu0 0
        %2898 = vmatprep.subr.bf16.mxu0 0
        %2899 = vmatpush2.bf16.msra.mxu0 0
        %2900 = vmatprep.subr.bf16.mxu0 0
        %2901 = vmatpush2.bf16.msra.mxu0 0
        %2902 = vmatprep.subr.bf16.mxu0 0
        %2903 = vmatpush2.bf16.msra.mxu0 0
        %2904 = vmatprep.subr.bf16.mxu0 0
        %2905 = vmatpush2.bf16.msra.mxu0 0
        %2906 = vmatprep.subr.bf16.mxu0 0
        %2907 = vmatpush2.bf16.msra.mxu0 0
        %2908 = vmatprep.mubr.bf16.mxu0 0
        %2909 = vmatmul.mubr.bf16.gmra.mxu0 %v1057
        %v2910 = vpop.f32.mrf.mxu0
        %v2911 = vadd.f32 %v2870, %v2910
        %v2912 = vpop.f32.mrf.mxu0
        %v2913 = vadd.f32 %v2872, %v2912
        %v2914 = vpop.f32.mrf.mxu0
        %v2915 = vpop.f32.mrf.mxu0
        %2916 = vdwg.mxu0
        %v2921 = vcombine.low %v2706, %v2708
        %v2922 = vcombine.low %v2911, %v2913
        %v2924 = vunpack.c.l.s4 1983009808
        %v2925 = vunpack.c.0.s8 %v2924
        %v2926 = vlaneseq
        %v2927 = vshrl.u32 %v2926, 7
        %v2928 = vsub.s32 %v2925, %v2927
        %v2929 = vrot.slane %v2921, %v2928
        %v2931 = vunpack.c.l.s4 1983009808
        %v2932 = vunpack.c.0.s8 %v2931
        %v2933 = vlaneseq
        %v2934 = vshrl.u32 %v2933, 7
        %v2935 = vsub.s32 %v2932, %v2934
        %v2936 = vrot.slane %v2922, %v2935
        %v2937 = vcombine.low %v2929, %v2936
        %v2939 = vadd.f32 %v702, %v2937
        %2940 = vst [vmem:[#allocation2] sm:$0xff] %v2939
        %p2941 = scmp.eq.s32.totalorder %s23, 3
        // Predicated region
        $region69: #{dueling_qnet_forward_pallas.7} parent=63 // pred_check
          %p2942 = pneg %p2941
        $region70: #{dueling_qnet_forward_pallas.7} parent=63 // pred_check_branch
          %2944 = sbr.rel (%p2942) target = $region72
        $region71: #{dueling_qnet_forward_pallas.7} parent=63 // pred_region
          %v2945 = vld [vmem:[#allocation2] sm:$0xff]
          %v2946 = vmax.f32 %v2945, 0.0
          %v2947 = vld [vmem:[%s9] sm:$0xff]
          %v2948 = vld [vmem:[%s9 + $0x8] sm:$0xff]
          %v2949 = vld [vmem:[%s9 + $0x10] sm:$0xff]
          %v2950 = vld [vmem:[%s9 + $0x18] sm:$0xff]
          %v2951 = vld [vmem:[%s9 + $0x20] sm:$0xff]
          %v2952 = vld [vmem:[%s9 + $0x28] sm:$0xff]
          %v2953 = vld [vmem:[%s9 + $0x30] sm:$0xff]
          %v2954 = vld [vmem:[%s9 + $0x38] sm:$0xff]
          %v2955 = vld [vmem:[%s9 + $0x40] sm:$0xff]
          %v2956 = vld [vmem:[%s9 + $0x48] sm:$0xff]
          %v2957 = vld [vmem:[%s9 + $0x50] sm:$0xff]
          %v2958 = vld [vmem:[%s9 + $0x58] sm:$0xff]
          %v2959 = vld [vmem:[%s9 + $0x60] sm:$0xff]
          %v2960 = vld [vmem:[%s9 + $0x68] sm:$0xff]
          %v2961 = vld [vmem:[%s9 + $0x70] sm:$0xff]
          %v2962 = vld [vmem:[%s9 + $0x78] sm:$0xff]
          %v2963 = vld [vmem:[%s9 + $0x80] sm:$0xff]
          %v2964 = vld [vmem:[%s9 + $0x88] sm:$0xff]
          %v2965 = vld [vmem:[%s9 + $0x90] sm:$0xff]
          %v2966 = vld [vmem:[%s9 + $0x98] sm:$0xff]
          %v2967 = vld [vmem:[%s9 + $0xa0] sm:$0xff]
          %v2968 = vld [vmem:[%s9 + $0xa8] sm:$0xff]
          %v2969 = vld [vmem:[%s9 + $0xb0] sm:$0xff]
          %v2970 = vld [vmem:[%s9 + $0xb8] sm:$0xff]
          %v2971 = vld [vmem:[%s9 + $0xc0] sm:$0xff]
          %v2972 = vld [vmem:[%s9 + $0xc8] sm:$0xff]
          %v2973 = vld [vmem:[%s9 + $0xd0] sm:$0xff]
          %v2974 = vld [vmem:[%s9 + $0xd8] sm:$0xff]
          %v2975 = vld [vmem:[%s9 + $0xe0] sm:$0xff]
          %v2976 = vld [vmem:[%s9 + $0xe8] sm:$0xff]
          %v2977 = vld [vmem:[%s9 + $0xf0] sm:$0xff]
          %v2978 = vld [vmem:[%s9 + $0xf8] sm:$0xff]
          %v2979 = vld [vmem:[%s9 + $0x100] sm:$0xff]
          %v2980 = vld [vmem:[%s9 + $0x108] sm:$0xff]
          %v2981 = vld [vmem:[%s9 + $0x110] sm:$0xff]
          %v2982 = vld [vmem:[%s9 + $0x118] sm:$0xff]
          %v2983 = vld [vmem:[%s9 + $0x120] sm:$0xff]
          %v2984 = vld [vmem:[%s9 + $0x128] sm:$0xff]
          %v2985 = vld [vmem:[%s9 + $0x130] sm:$0xff]
          %v2986 = vld [vmem:[%s9 + $0x138] sm:$0xff]
          %v2987 = vld [vmem:[%s9 + $0x140] sm:$0xff]
          %v2988 = vld [vmem:[%s9 + $0x148] sm:$0xff]
          %v2989 = vld [vmem:[%s9 + $0x150] sm:$0xff]
          %v2990 = vld [vmem:[%s9 + $0x158] sm:$0xff]
          %v2991 = vld [vmem:[%s9 + $0x160] sm:$0xff]
          %v2992 = vld [vmem:[%s9 + $0x168] sm:$0xff]
          %v2993 = vld [vmem:[%s9 + $0x170] sm:$0xff]
          %v2994 = vld [vmem:[%s9 + $0x178] sm:$0xff]
          %v2995 = vld [vmem:[%s9 + $0x180] sm:$0xff]
          %v2996 = vld [vmem:[%s9 + $0x188] sm:$0xff]
          %v2997 = vld [vmem:[%s9 + $0x190] sm:$0xff]
          %v2998 = vld [vmem:[%s9 + $0x198] sm:$0xff]
          %v2999 = vld [vmem:[%s9 + $0x1a0] sm:$0xff]
          %v3000 = vld [vmem:[%s9 + $0x1a8] sm:$0xff]
          %v3001 = vld [vmem:[%s9 + $0x1b0] sm:$0xff]
          %v3002 = vld [vmem:[%s9 + $0x1b8] sm:$0xff]
          %v3003 = vld [vmem:[%s9 + $0x1c0] sm:$0xff]
          %v3004 = vld [vmem:[%s9 + $0x1c8] sm:$0xff]
          %v3005 = vld [vmem:[%s9 + $0x1d0] sm:$0xff]
          %v3006 = vld [vmem:[%s9 + $0x1d8] sm:$0xff]
          %v3007 = vld [vmem:[%s9 + $0x1e0] sm:$0xff]
          %v3008 = vld [vmem:[%s9 + $0x1e8] sm:$0xff]
          %v3009 = vld [vmem:[%s9 + $0x1f0] sm:$0xff]
          %v3010 = vld [vmem:[%s9 + $0x1f8] sm:$0xff]
          %v3011 = vld [vmem:[%s10] sm:$0x1]
          %v3013 = vlaneseq
          %v3014 = vshrl.u32 %v3013, 7
          %v3015 = vsub.s32 0, %v3014
          %v3016 = vrot.slane %v3011, %v3015
          %v3019 = vcombine.high %v2946, %v2946
          %v3021 = vunpack.c.l.s4 1983009808
          %v3022 = vunpack.c.0.s8 %v3021
          %v3023 = vlaneseq
          %v3024 = vshrl.u32 %v3023, 7
          %v3025 = vsub.s32 %v3022, %v3024
          %v3026 = vrot.slane %v2946, %v3025
          %v3028 = vunpack.c.l.s4 1983009808
          %v3029 = vunpack.c.0.s8 %v3028
          %v3030 = vlaneseq
          %v3031 = vshrl.u32 %v3030, 7
          %v3032 = vsub.s32 %v3029, %v3031
          %v3033 = vrot.slane %v3019, %v3032
          %v3034 = vcombine.high %v3026, %v3026
          %v3035 = vcombine.high %v3033, %v3033
          %3040 = vmatprep.subr.mxu0 0.0
          %3041 = vmatpush1.msra.mxu0 %v2962
          %3042 = vmatprep.subr.mxu0 0.0
          %3043 = vmatpush1.msra.mxu0 %v2961
          %3044 = vmatprep.subr.mxu0 0.0
          %3045 = vmatpush1.msra.mxu0 %v2960
          %3046 = vmatprep.subr.mxu0 0.0
          %3047 = vmatpush1.msra.mxu0 %v2959
          %3048 = vmatprep.subr.mxu0 0.0
          %3049 = vmatpush1.msra.mxu0 %v2958
          %3050 = vmatprep.subr.mxu0 0.0
          %3051 = vmatpush1.msra.mxu0 %v2957
          %3052 = vmatprep.subr.mxu0 0.0
          %3053 = vmatpush1.msra.mxu0 %v2956
          %3054 = vmatprep.subr.mxu0 0.0
          %3055 = vmatpush1.msra.mxu0 %v2955
          %3056 = vmatprep.subr.mxu0 0.0
          %3057 = vmatpush1.msra.mxu0 %v2954
          %3058 = vmatprep.subr.mxu0 0.0
          %3059 = vmatpush1.msra.mxu0 %v2953
          %3060 = vmatprep.subr.mxu0 0.0
          %3061 = vmatpush1.msra.mxu0 %v2952
          %3062 = vmatprep.subr.mxu0 0.0
          %3063 = vmatpush1.msra.mxu0 %v2951
          %3064 = vmatprep.subr.mxu0 0.0
          %3065 = vmatpush1.msra.mxu0 %v2950
          %3066 = vmatprep.subr.mxu0 0.0
          %3067 = vmatpush1.msra.mxu0 %v2949
          %3068 = vmatprep.subr.mxu0 0.0
          %3069 = vmatpush1.msra.mxu0 %v2948
          %3070 = vmatprep.subr.mxu0 0.0
          %3071 = vmatpush1.msra.mxu0 %v2947
          %3072 = vmatprep.subr.mxu0 0.0
          %3073 = vmatpush2.msra.mxu0 %v2978
          %3074 = vmatprep.subr.mxu0 0.0
          %3075 = vmatpush2.msra.mxu0 %v2977
          %3076 = vmatprep.subr.mxu0 0.0
          %3077 = vmatpush2.msra.mxu0 %v2976
          %3078 = vmatprep.subr.mxu0 0.0
          %3079 = vmatpush2.msra.mxu0 %v2975
          %3080 = vmatprep.subr.mxu0 0.0
          %3081 = vmatpush2.msra.mxu0 %v2974
          %3082 = vmatprep.subr.mxu0 0.0
          %3083 = vmatpush2.msra.mxu0 %v2973
          %3084 = vmatprep.subr.mxu0 0.0
          %3085 = vmatpush2.msra.mxu0 %v2972
          %3086 = vmatprep.subr.mxu0 0.0
          %3087 = vmatpush2.msra.mxu0 %v2971
          %3088 = vmatprep.subr.mxu0 0.0
          %3089 = vmatpush2.msra.mxu0 %v2970
          %3090 = vmatprep.subr.mxu0 0.0
          %3091 = vmatpush2.msra.mxu0 %v2969
          %3092 = vmatprep.subr.mxu0 0.0
          %3093 = vmatpush2.msra.mxu0 %v2968
          %3094 = vmatprep.subr.mxu0 0.0
          %3095 = vmatpush2.msra.mxu0 %v2967
          %3096 = vmatprep.subr.mxu0 0.0
          %3097 = vmatpush2.msra.mxu0 %v2966
          %3098 = vmatprep.subr.mxu0 0.0
          %3099 = vmatpush2.msra.mxu0 %v2965
          %3100 = vmatprep.subr.mxu0 0.0
          %3101 = vmatpush2.msra.mxu0 %v2964
          %3102 = vmatprep.subr.mxu0 0.0
          %3103 = vmatpush2.msra.mxu0 %v2963
          %3104 = vmatprep.mubr.f32.mxu0 %v3034
          %3105 = vmatmul.mubr.f32.gmra.mxu0 %v3026
          %v3106 = vpop.f32.mrf.mxu0
          %v3107 = vadd.f32 %v3016, %v3106
          %v3108 = vpop.f32.mrf.mxu0
          %3109 = vdwg.mxu0
          %3110 = vmatprep.subr.mxu0 0.0
          %3111 = vmatpush1.msra.mxu0 %v2994
          %3112 = vmatprep.subr.mxu0 0.0
          %3113 = vmatpush1.msra.mxu0 %v2993
          %3114 = vmatprep.subr.mxu0 0.0
          %3115 = vmatpush1.msra.mxu0 %v2992
          %3116 = vmatprep.subr.mxu0 0.0
          %3117 = vmatpush1.msra.mxu0 %v2991
          %3118 = vmatprep.subr.mxu0 0.0
          %3119 = vmatpush1.msra.mxu0 %v2990
          %3120 = vmatprep.subr.mxu0 0.0
          %3121 = vmatpush1.msra.mxu0 %v2989
          %3122 = vmatprep.subr.mxu0 0.0
          %3123 = vmatpush1.msra.mxu0 %v2988
          %3124 = vmatprep.subr.mxu0 0.0
          %3125 = vmatpush1.msra.mxu0 %v2987
          %3126 = vmatprep.subr.mxu0 0.0
          %3127 = vmatpush1.msra.mxu0 %v2986
          %3128 = vmatprep.subr.mxu0 0.0
          %3129 = vmatpush1.msra.mxu0 %v2985
          %3130 = vmatprep.subr.mxu0 0.0
          %3131 = vmatpush1.msra.mxu0 %v2984
          %3132 = vmatprep.subr.mxu0 0.0
          %3133 = vmatpush1.msra.mxu0 %v2983
          %3134 = vmatprep.subr.mxu0 0.0
          %3135 = vmatpush1.msra.mxu0 %v2982
          %3136 = vmatprep.subr.mxu0 0.0
          %3137 = vmatpush1.msra.mxu0 %v2981
          %3138 = vmatprep.subr.mxu0 0.0
          %3139 = vmatpush1.msra.mxu0 %v2980
          %3140 = vmatprep.subr.mxu0 0.0
          %3141 = vmatpush1.msra.mxu0 %v2979
          %3142 = vmatprep.subr.mxu0 0.0
          %3143 = vmatpush2.msra.mxu0 %v3010
          %3144 = vmatprep.subr.mxu0 0.0
          %3145 = vmatpush2.msra.mxu0 %v3009
          %3146 = vmatprep.subr.mxu0 0.0
          %3147 = vmatpush2.msra.mxu0 %v3008
          %3148 = vmatprep.subr.mxu0 0.0
          %3149 = vmatpush2.msra.mxu0 %v3007
          %3150 = vmatprep.subr.mxu0 0.0
          %3151 = vmatpush2.msra.mxu0 %v3006
          %3152 = vmatprep.subr.mxu0 0.0
          %3153 = vmatpush2.msra.mxu0 %v3005
          %3154 = vmatprep.subr.mxu0 0.0
          %3155 = vmatpush2.msra.mxu0 %v3004
          %3156 = vmatprep.subr.mxu0 0.0
          %3157 = vmatpush2.msra.mxu0 %v3003
          %3158 = vmatprep.subr.mxu0 0.0
          %3159 = vmatpush2.msra.mxu0 %v3002
          %3160 = vmatprep.subr.mxu0 0.0
          %3161 = vmatpush2.msra.mxu0 %v3001
          %3162 = vmatprep.subr.mxu0 0.0
          %3163 = vmatpush2.msra.mxu0 %v3000
          %3164 = vmatprep.subr.mxu0 0.0
          %3165 = vmatpush2.msra.mxu0 %v2999
          %3166 = vmatprep.subr.mxu0 0.0
          %3167 = vmatpush2.msra.mxu0 %v2998
          %3168 = vmatprep.subr.mxu0 0.0
          %3169 = vmatpush2.msra.mxu0 %v2997
          %3170 = vmatprep.subr.mxu0 0.0
          %3171 = vmatpush2.msra.mxu0 %v2996
          %3172 = vmatprep.subr.mxu0 0.0
          %3173 = vmatpush2.msra.mxu0 %v2995
          %3174 = vmatprep.mubr.f32.mxu0 %v3035
          %3175 = vmatmul.mubr.f32.gmra.mxu0 %v3033
          %v3176 = vpop.f32.mrf.mxu0
          %v3177 = vadd.f32 %v3107, %v3176
          %v3178 = vpop.f32.mrf.mxu0
          %3179 = vdwg.mxu0
          %3181 = vset.pattern.permute.xlu0 0
          %3182 = vperm.xlu0 %3181, %v3177
          %v3183 = vpop.permute.xlu0 %3182
          %v3185 = vadd.f32 %v3183, %v3177
          %3186 = vrot.lane.b32.xlu0 %v3177, 127
          %v3187 = vpop.permute.xlu0 %3186
          %vm3189 = vcmask 17408
          %v3190 = vsel %vm3189, %v3187, 0.0
          %3191 = vadd.xlane.f32.xlu0 %v3190
          %v3192 = vpop.xlane.xlu0 %3191
          %v3193 = vrcp.pop 3.0
          %v3194 = vmul.f32 %v3192, %v3193
          %v3195 = vsub.f32 %v3185, %v3194
          %3197 = vrot.lane.b32.xlu0 %v3195, 127
          %v3198 = vpop.permute.xlu0 %3197
          %3200 = vst.msk [vmem:[#allocation3] sm:$0x3] %vm3189, %v3198
        $region72: #{dueling_qnet_forward_pallas.7} parent=63 // pred_fallthru
          _
        // Predicated region
        $region73: #{dueling_qnet_forward_pallas.7} parent=63 // pred_check
          %p3201 = pneg %p277
        $region74: #{dueling_qnet_forward_pallas.7} parent=63 // pred_check_branch
          %3203 = sbr.rel (%p3201) target = $region76
        $region75: #{dueling_qnet_forward_pallas.7} parent=63 // pred_region
          %s3205 = ssub.s32 32, 32
          %3206 = vsyncadd [#allocation4], %s3205
          %s3208 = sshll.u32 [#allocation3], 4
          %s3209 = int_to_ptr.vmem [resolvable:$true] %s3208
          %3211 = dma.vmem_to_hbm [thread:$0]  %s3209, 32, %s11, [#allocation4]
        $region76: #{dueling_qnet_forward_pallas.7} parent=63 // pred_fallthru
          _
        // Predicated region
        $region77: #{dueling_qnet_forward_pallas.7} parent=63 // pred_check
          %p3212 = pneg %p277
        $region78: #{dueling_qnet_forward_pallas.7} parent=63 // pred_check_branch
          %3214 = sbr.rel (%p3212) target = $region80
        $region79: #{dueling_qnet_forward_pallas.7} parent=63 // pred_region
          %3215 = dma.done [#allocation4], 32
        $region80: #{dueling_qnet_forward_pallas.7} parent=63 // pred_fallthru
          _
      $region64: #{dueling_qnet_forward_pallas.7} parent=5 // pred_fallthru
        _
      %p3216 = scmp.le.s32.totalorder 2, %s18
      // Predicated region
      $region81: #{dueling_qnet_forward_pallas.7} parent=5 // pred_check
        %p3217 = pneg %p3216
      $region82: #{dueling_qnet_forward_pallas.7} parent=5 // pred_check_branch
        %3219 = sbr.rel (%p3217) target = $region84
      $region83: #{dueling_qnet_forward_pallas.7} parent=5 // pred_region
        %s3220 = ssub.s32 %s18, 2
      $region84: #{dueling_qnet_forward_pallas.7} parent=5 // pred_fallthru
        _
    $region6: #{dueling_qnet_forward_pallas.7} parent=1 // loop_footer
      %s22 = sadd.s32 1, %s18
    $region7: #{dueling_qnet_forward_pallas.7} parent=1 // loop_footer_branch
      %17 = sbr.rel target = $region3
    $region8: #{dueling_qnet_forward_pallas.7} parent=1 // loop_exit
      _
    %3221 = vsyncpa [#allocation4], 1
    %s3222 = scalar_lea.sflag [#allocation4], 1
    %3223 = vsyncpa %s3222, 1

</llo_original>
